<compile_context>
chip_gen: v6e
topology: v6e:2x2x1
jax: 0.10.0
libtpu: 0.0.40
codegen_flags: <defaults>
</compile_context>

<pallas_src>
import functools
import math

import jax
import jax.numpy as jnp
from jax import lax
from jax.experimental import pallas as pl
from jax.experimental.pallas import tpu as pltpu


# --------------------------------------------------------------------------
# Kernel A: fused per-image feature chain + label attention.
# --------------------------------------------------------------------------
def _feature_attn_kernel(x_ref, lab_emb_ref,
                         bb_w, bb_b, c_w1, c_b1, c_w2, c_b2, sp_w, sp_b,
                         aspp_w, aspp_b, neck_w, neck_b, lab_w, lab_b,
                         out_ref, coef_ref):
    f32 = jnp.float32
    x = x_ref[0]                                                # (P, Cin)

    # ---- backbone (1x1 conv + ReLU)
    f = jnp.maximum(jnp.dot(x, bb_w[...], preferred_element_type=f32) + bb_b[...], 0.0)

    # ---- CBAM channel attention: shared MLP on avg / max pooled channels
    avg = jnp.mean(f, axis=0, keepdims=True)                    # (1, C)
    mx = jnp.max(f, axis=0, keepdims=True)                      # (1, C)

    def mlp(v):
        h = jnp.maximum(jnp.dot(v, c_w1[...], preferred_element_type=f32) + c_b1[...], 0.0)
        return jnp.dot(h, c_w2[...], preferred_element_type=f32) + c_b2[...]

    f = f * jax.nn.sigmoid(mlp(avg) + mlp(mx))                  # channel gate

    # ---- CBAM spatial attention (VPU FMAs over [mean, max] channel stats)
    # TODO(synk): reference CBAM spatial attention uses a 7x7 conv; simplified to 1x1.
    m_c = jnp.mean(f, axis=-1, keepdims=True)                   # (P, 1)
    x_c = jnp.max(f, axis=-1, keepdims=True)                    # (P, 1)
    sp_logit = m_c * sp_w[:, 0:1] + x_c * sp_w[:, 1:2] + sp_b[:, 0:1]
    f = f * jax.nn.sigmoid(sp_logit)                            # spatial gate

    # ---- classifier (ASPP, simplified to a single 1x1 branch + ReLU)
    # TODO(synk): reference ASPP has multiple dilated 3x3 branches.
    f = jnp.maximum(jnp.dot(f, aspp_w[...], preferred_element_type=f32) + aspp_b[...], 0.0)

    # ---- neck (1x1 conv + ReLU)
    f = jnp.maximum(jnp.dot(f, neck_w[...], preferred_element_type=f32) + neck_b[...], 0.0)

    # ---- label-embedding attention over spatial positions
    lab = jnp.dot(lab_emb_ref[...], lab_w[...], preferred_element_type=f32) + lab_b[...]
    d = f.shape[-1]
    s = lax.dot_general(lab, f, (((1,), (1,)), ((), ())),
                        preferred_element_type=f32) * (1.0 / math.sqrt(d))    # (Ccls, P)
    s = s - jnp.max(s, axis=-1, keepdims=True)
    e = jnp.exp(s)
    coef = e / jnp.sum(e, axis=-1, keepdims=True)               # (Ccls, P)
    out = jnp.dot(coef, f, preferred_element_type=f32)          # (Ccls, D)

    out_ref[0] = out.astype(out_ref.dtype)
    coef_ref[0] = coef.astype(coef_ref.dtype)


def fused_feature_attention(x_bpc, label_embedding, params):
    B, P, Cin = x_bpc.shape
    Ccls = label_embedding.shape[0]
    D = params["neck_w"].shape[1]

    weight_names = ["bb_w", "bb_b", "cbam_w1", "cbam_b1", "cbam_w2", "cbam_b2",
                    "cbam_sp_w", "cbam_sp_b", "aspp_w", "aspp_b",
                    "neck_w", "neck_b", "lab_w", "lab_b"]
    weights = [params[n] for n in weight_names]

    def fixed(arr):
        return pl.BlockSpec(arr.shape, lambda b, _n=arr.ndim: (0,) * _n)

    return pl.pallas_call(
        _feature_attn_kernel,
        out_shape=(jax.ShapeDtypeStruct((B, Ccls, D), jnp.float32),
                   jax.ShapeDtypeStruct((B, Ccls, P), jnp.float32)),
        grid=(B,),
        in_specs=[pl.BlockSpec((1, P, Cin), lambda b: (b, 0, 0)),
                  fixed(label_embedding)] + [fixed(w) for w in weights],
        out_specs=(pl.BlockSpec((1, Ccls, D), lambda b: (b, 0, 0)),
                   pl.BlockSpec((1, Ccls, P), lambda b: (b, 0, 0))),
        compiler_params=pltpu.CompilerParams(dimension_semantics=("parallel",)),
    )(x_bpc, label_embedding, *weights)


# --------------------------------------------------------------------------
# Kernel B: fused dense multi-head GAT (node linear + edge linear + all heads).
# Dense mask / edge scores / per-edge attention built from adj via one-hots.
# --------------------------------------------------------------------------
def _gnn_kernel(nodes_ref, adj_ref, eattr_ref, wn, bn, asrc, adst, we, be,
                out_ref, alpha_ref, *, heads, dg):
    f32 = jnp.float32
    nodes = nodes_ref[...]                                      # (N, D)
    N = nodes.shape[0]
    E = adj_ref.shape[0]

    h = jnp.dot(nodes, wn[...], preferred_element_type=f32) + bn[...]          # (N, heads*dg)
    e_sc = jnp.dot(eattr_ref[...], we[...], preferred_element_type=f32) + be[...]  # (E, heads)

    adj = adj_ref[...]                                          # (E, 2) int32 = [src, dst]
    col = lax.broadcasted_iota(jnp.int32, (E, N), 1)
    src_oh = (col == adj[:, 0:1]).astype(f32)                   # (E, N)
    dst_oh = (col == adj[:, 1:2]).astype(f32)                   # (E, N)
    dst_oh_t = jnp.transpose(dst_oh)                            # (N, E)
    cnt = jnp.dot(dst_oh_t, src_oh, preferred_element_type=f32)  # (N, N) edge multiplicity
    mask = jnp.where(cnt > 0, 1.0, 0.0)

    alpha_sum = jnp.zeros((E, 1), f32)
    for hd in range(heads):
        hh = h[:, hd * dg:(hd + 1) * dg]                        # (N, dg)
        s_src = jnp.sum(hh * asrc[hd:hd + 1, :], axis=-1, keepdims=True)   # (N, 1)
        s_dst = jnp.sum(hh * adst[hd:hd + 1, :], axis=-1, keepdims=True)   # (N, 1)
        # scatter-add of edge scores into the dense (dst, src) matrix
        esc = jnp.dot(dst_oh_t, src_oh * e_sc[:, hd:hd + 1],
                      preferred_element_type=f32)               # (N, N)
        s = s_dst + jnp.transpose(s_src) + esc                  # rows = dst, cols = src
        s = jnp.where(s > 0, s, 0.2 * s)                        # LeakyReLU(0.2)
        s = jnp.where(mask > 0, s, -1e30)
        s = s - jnp.max(s, axis=-1, keepdims=True)
        e = jnp.exp(s) * mask
        denom = jnp.sum(e, axis=-1, keepdims=True)
        alpha = e / jnp.maximum(denom, 1e-30)                   # guards isolated nodes
        o = jnp.dot(alpha, hh, preferred_element_type=f32)      # (N, dg)
        out_ref[:, hd * dg:(hd + 1) * dg] = o.astype(out_ref.dtype)
        # per-edge attention alpha[dst[e], src[e]] recovered without gather
        per_edge = jnp.sum(jnp.dot(dst_oh, alpha, preferred_element_type=f32) * src_oh,
                           axis=-1, keepdims=True)              # (E, 1)
        alpha_sum = alpha_sum + per_edge

    alpha_ref[...] = (alpha_sum / heads).astype(alpha_ref.dtype)


def gnn_dense_gat(nodes, adj_t, edge_attr, params):
    N, _ = nodes.shape
    E = adj_t.shape[0]
    heads, dg = params["gnn_heads"], params["gnn_dg"]
    weights = [params[n] for n in ["gnn_w", "gnn_b", "gnn_asrc", "gnn_adst",
                                   "gnn_edge_w", "gnn_edge_b"]]

    def fixed(arr):
        return pl.BlockSpec(arr.shape, lambda i, _n=arr.ndim: (0,) * _n)

    kernel = functools.partial(_gnn_kernel, heads=heads, dg=dg)
    return pl.pallas_call(
        kernel,
        out_shape=(jax.ShapeDtypeStruct((N, heads * dg), jnp.float32),
                   jax.ShapeDtypeStruct((E, 1), jnp.float32)),
        grid=(1,),
        in_specs=[fixed(nodes), fixed(adj_t), fixed(edge_attr)] + [fixed(w) for w in weights],
        out_specs=(pl.BlockSpec((N, heads * dg), lambda i: (0, 0)),
                   pl.BlockSpec((E, 1), lambda i: (0, 0))),
        compiler_params=pltpu.CompilerParams(dimension_semantics=("arbitrary",)),
    )(nodes, adj_t, edge_attr, *weights)


# --------------------------------------------------------------------------
# Kernel C: fused classifier heads (common head -> action / reason logits).
# --------------------------------------------------------------------------
def _heads_kernel(x_ref, hw, hb, aw, ab, rw, rb, y1_ref, y2_ref):
    f32 = jnp.float32
    h = jnp.maximum(jnp.dot(x_ref[...], hw[...], preferred_element_type=f32) + hb[...], 0.0)
    y1_ref[...] = (jnp.dot(h, aw[...], preferred_element_type=f32) + ab[...]).astype(y1_ref.dtype)
    y2_ref[...] = (jnp.dot(h, rw[...], preferred_element_type=f32) + rb[...]).astype(y2_ref.dtype)


def classifier_heads(x, params):
    B, _ = x.shape
    n_act = params["act_b"].shape[-1]
    n_rea = params["rea_b"].shape[-1]
    weights = [params[n] for n in ["head_w", "head_b", "act_w", "act_b", "rea_w", "rea_b"]]

    def fixed(arr):
        return pl.BlockSpec(arr.shape, lambda i, _n=arr.ndim: (0,) * _n)

    return pl.pallas_call(
        _heads_kernel,
        out_shape=(jax.ShapeDtypeStruct((B, n_act), jnp.float32),
                   jax.ShapeDtypeStruct((B, n_rea), jnp.float32)),
        grid=(1,),
        in_specs=[fixed(x)] + [fixed(w) for w in weights],
        out_specs=(pl.BlockSpec((B, n_act), lambda i: (0, 0)),
                   pl.BlockSpec((B, n_rea), lambda i: (0, 0))),
        compiler_params=pltpu.CompilerParams(dimension_semantics=("arbitrary",)),
    )(x, *weights)


# --------------------------------------------------------------------------
# FinalModel forward
# --------------------------------------------------------------------------
def final_model_forward(params, x_nchw, label_embedding, adj_COO, edge_attr):
    B, Cin, H, W = x_nchw.shape
    P = H * W
    x = jnp.transpose(x_nchw, (0, 2, 3, 1)).reshape(B, P, Cin)   # NCHW -> (B, P, C)

    # backbone -> CBAM -> ASPP -> neck -> label attention (one fused kernel)
    cls_feat, coefficient = fused_feature_attention(x, label_embedding, params)
    Ccls = cls_feat.shape[1]

    # GNN over class nodes (one fused kernel; mask built in-kernel from adj)
    nodes = cls_feat.reshape(B * Ccls, -1)
    adj_t = jnp.transpose(adj_COO).astype(jnp.int32)             # (E, 2) = [src, dst]
    node_out, alpha_col = gnn_dense_gat(nodes, adj_t, edge_attr, params)
    alpha = alpha_col.reshape(-1)                                # mean over heads, (E,)

    # classifier heads (one fused kernel)
    flat = node_out.reshape(B, -1)                               # flatten(start_dim=1)
    y1, y2 = classifier_heads(flat, params)
    return [y1, y2, alpha, coefficient]


# --------------------------------------------------------------------------
# Deterministic parameter construction + example run
# --------------------------------------------------------------------------
def make_params(key):
    ks = iter(jax.random.split(key, 32))

    def p(shape, scale=0.1):
        return (scale * jax.random.normal(next(ks), shape)).astype(jnp.float32)

    C_in, C_bb, C_red, C_aspp, D_neck = 4, 32, 8, 32, 32
    emb_dim, heads, Dg = 16, 2, 16
    num_classes, d_edge, hidden, n_act, n_rea = 4, 4, 64, 4, 8
    return dict(
        bb_w=p((C_in, C_bb)), bb_b=p((1, C_bb)),
        cbam_w1=p((C_bb, C_red)), cbam_b1=p((1, C_red)),
        cbam_w2=p((C_red, C_bb)), cbam_b2=p((1, C_bb)),
        cbam_sp_w=p((1, 2)), cbam_sp_b=p((1, 1)),
        aspp_w=p((C_bb, C_aspp)), aspp_b=p((1, C_aspp)),
        neck_w=p((C_aspp, D_neck)), neck_b=p((1, D_neck)),
        lab_w=p((emb_dim, D_neck)), lab_b=p((1, D_neck)),
        gnn_w=p((D_neck, heads * Dg)), gnn_b=p((1, heads * Dg)),
        gnn_asrc=p((heads, Dg)), gnn_adst=p((heads, Dg)),
        gnn_edge_w=p((d_edge, heads)), gnn_edge_b=p((1, heads)),
        head_w=p((num_classes * heads * Dg, hidden)), head_b=p((1, hidden)),
        act_w=p((hidden, n_act)), act_b=p((1, n_act)),
        rea_w=p((hidden, n_rea)), rea_b=p((1, n_rea)),
        gnn_heads=heads, gnn_dg=Dg,
    )


if __name__ == "__main__":
    B, C_in, H, W = 2, 4, 16, 16
    num_classes, emb_dim, d_edge = 4, 16, 4

    key = jax.random.PRNGKey(0)
    k_x, k_emb, k_edge = jax.random.split(key, 3)
    x = jax.random.normal(k_x, (B, C_in, H, W), dtype=jnp.float32)
    label_embedding = jax.random.normal(k_emb, (num_classes, emb_dim), dtype=jnp.float32)

    # fully-connected (with self loops) graph within each image's class nodes
    src_list, dst_list = [], []
    for b in range(B):
        for i in range(num_classes):
            for j in range(num_classes):
                dst_list.append(b * num_classes + i)
                src_list.append(b * num_classes + j)
    adj_COO = jnp.array([src_list, dst_list], dtype=jnp.int32)        # (2, E)
    E = adj_COO.shape[1]
    edge_attr = jax.random.normal(k_edge, (E, d_edge), dtype=jnp.float32)

    params = make_params(jax.random.PRNGKey(42))

    @jax.jit
    def fwd(xx, emb, adj, eattr):
        return final_model_forward(params, xx, emb, adj, eattr)

    out = jax.block_until_ready(fwd(x, label_embedding, adj_COO, edge_attr))
    y1, y2, alpha, coefficient = out
    assert y1.shape == (B, 4)
    assert y2.shape == (B, 8)
    assert alpha.shape == (E,)
    assert coefficient.shape == (B, num_classes, H * W)
    assert all(bool(jnp.all(jnp.isfinite(t))) for t in (y1, y2, alpha, coefficient))
    print("KERNEL_OK")
</pallas_src>

<mosaic_0001>
module attributes {stable_mosaic.version = 11 : i64} {
  func.func @_feature_attn_kernel(%arg0: i32, %arg1: memref<1x256x4xf32, #tpu.memory_space<vmem>>, %arg2: memref<4x16xf32, #tpu.memory_space<vmem>>, %arg3: memref<4x32xf32, #tpu.memory_space<vmem>>, %arg4: memref<1x32xf32, #tpu.memory_space<vmem>>, %arg5: memref<32x8xf32, #tpu.memory_space<vmem>>, %arg6: memref<1x8xf32, #tpu.memory_space<vmem>>, %arg7: memref<8x32xf32, #tpu.memory_space<vmem>>, %arg8: memref<1x32xf32, #tpu.memory_space<vmem>>, %arg9: memref<1x2xf32, #tpu.memory_space<vmem>>, %arg10: memref<1x1xf32, #tpu.memory_space<vmem>>, %arg11: memref<32x32xf32, #tpu.memory_space<vmem>>, %arg12: memref<1x32xf32, #tpu.memory_space<vmem>>, %arg13: memref<32x32xf32, #tpu.memory_space<vmem>>, %arg14: memref<1x32xf32, #tpu.memory_space<vmem>>, %arg15: memref<16x32xf32, #tpu.memory_space<vmem>>, %arg16: memref<1x32xf32, #tpu.memory_space<vmem>>, %arg17: memref<1x4x32xf32, #tpu.memory_space<vmem>>, %arg18: memref<1x4x256xf32, #tpu.memory_space<vmem>>) attributes {dimension_semantics = [#tpu.dimension_semantics<parallel>], iteration_bounds = array<i64: 2>, scalar_prefetch = 0 : i64, scratch_operands = 0 : i64, tpu.core_type = #tpu.core_type<tc>, window_params = [{transform_indices = @transform_0, window_bounds = array<i64: 1, 256, 4>}, {pipeline_mode = #tpu.pipeline_mode<synchronous>, transform_indices = @transform_1, window_bounds = array<i64: 4, 16>}, {pipeline_mode = #tpu.pipeline_mode<synchronous>, transform_indices = @transform_2, window_bounds = array<i64: 4, 32>}, {pipeline_mode = #tpu.pipeline_mode<synchronous>, transform_indices = @transform_3, window_bounds = array<i64: 1, 32>}, {pipeline_mode = #tpu.pipeline_mode<synchronous>, transform_indices = @transform_4, window_bounds = array<i64: 32, 8>}, {pipeline_mode = #tpu.pipeline_mode<synchronous>, transform_indices = @transform_5, window_bounds = array<i64: 1, 8>}, {pipeline_mode = #tpu.pipeline_mode<synchronous>, transform_indices = @transform_6, window_bounds = array<i64: 8, 32>}, {pipeline_mode = #tpu.pipeline_mode<synchronous>, transform_indices = @transform_7, window_bounds = array<i64: 1, 32>}, {pipeline_mode = #tpu.pipeline_mode<synchronous>, transform_indices = @transform_8, window_bounds = array<i64: 1, 2>}, {pipeline_mode = #tpu.pipeline_mode<synchronous>, transform_indices = @transform_9, window_bounds = array<i64: 1, 1>}, {pipeline_mode = #tpu.pipeline_mode<synchronous>, transform_indices = @transform_10, window_bounds = array<i64: 32, 32>}, {pipeline_mode = #tpu.pipeline_mode<synchronous>, transform_indices = @transform_11, window_bounds = array<i64: 1, 32>}, {pipeline_mode = #tpu.pipeline_mode<synchronous>, transform_indices = @transform_12, window_bounds = array<i64: 32, 32>}, {pipeline_mode = #tpu.pipeline_mode<synchronous>, transform_indices = @transform_13, window_bounds = array<i64: 1, 32>}, {pipeline_mode = #tpu.pipeline_mode<synchronous>, transform_indices = @transform_14, window_bounds = array<i64: 16, 32>}, {pipeline_mode = #tpu.pipeline_mode<synchronous>, transform_indices = @transform_15, window_bounds = array<i64: 1, 32>}, {transform_indices = @transform_16, window_bounds = array<i64: 1, 4, 32>}, {transform_indices = @transform_17, window_bounds = array<i64: 1, 4, 256>}]} {
    %c0 = arith.constant 0 : index
    %c0_0 = arith.constant 0 : index
    %c0_1 = arith.constant 0 : index
    %0 = vector.load %arg1[%c0, %c0_0, %c0_1] : memref<1x256x4xf32, #tpu.memory_space<vmem>>, vector<1x256x4xf32>
    %1 = vector.shape_cast %0 : vector<1x256x4xf32> to vector<256x4xf32>
    %c0_2 = arith.constant 0 : index
    %c0_3 = arith.constant 0 : index
    %2 = vector.load %arg3[%c0_2, %c0_3] : memref<4x32xf32, #tpu.memory_space<vmem>>, vector<4x32xf32>
    %cst = arith.constant dense<0.000000e+00> : vector<256x32xf32>
    %3 = tpu.matmul %1, %2, %cst {dimension_numbers = #tpu.dot_dimension_numbers<[1], [0], [0], [1], [0, 0, 1, 1], [], []>} : vector<256x4xf32>, vector<4x32xf32>, vector<256x32xf32> -> vector<256x32xf32>
    %c0_4 = arith.constant 0 : index
    %c0_5 = arith.constant 0 : index
    %4 = vector.load %arg4[%c0_4, %c0_5] : memref<1x32xf32, #tpu.memory_space<vmem>>, vector<1x32xf32>
    %5 = vector.broadcast %4 : vector<1x32xf32> to vector<256x32xf32>
    %6 = arith.addf %3, %5 : vector<256x32xf32>
    %cst_6 = arith.constant 0.000000e+00 : f32
    %7 = vector.broadcast %cst_6 : f32 to vector<256x32xf32>
    %8 = arith.maximumf %6, %7 : vector<256x32xf32>
    %cst_7 = arith.constant dense<0.000000e+00> : vector<32xf32>
    %9 = vector.multi_reduction <add>, %8, %cst_7 [0] : vector<256x32xf32> to vector<32xf32>
    %10 = vector.shape_cast %9 : vector<32xf32> to vector<1x32xf32>
    %cst_8 = arith.constant 2.560000e+02 : f32
    %11 = vector.broadcast %cst_8 : f32 to vector<1x32xf32>
    %12 = arith.divf %10, %11 : vector<1x32xf32>
    %cst_9 = arith.constant dense<0xFF800000> : vector<32xf32>
    %13 = vector.multi_reduction <maximumf>, %8, %cst_9 [0] : vector<256x32xf32> to vector<32xf32>
    %14 = vector.shape_cast %13 : vector<32xf32> to vector<1x32xf32>
    %c0_10 = arith.constant 0 : index
    %c0_11 = arith.constant 0 : index
    %15 = vector.load %arg5[%c0_10, %c0_11] : memref<32x8xf32, #tpu.memory_space<vmem>>, vector<32x8xf32>
    %cst_12 = arith.constant dense<0.000000e+00> : vector<1x8xf32>
    %16 = tpu.matmul %12, %15, %cst_12 {dimension_numbers = #tpu.dot_dimension_numbers<[1], [0], [0], [1], [0, 0, 1, 1], [], []>} : vector<1x32xf32>, vector<32x8xf32>, vector<1x8xf32> -> vector<1x8xf32>
    %c0_13 = arith.constant 0 : index
    %c0_14 = arith.constant 0 : index
    %17 = vector.load %arg6[%c0_13, %c0_14] : memref<1x8xf32, #tpu.memory_space<vmem>>, vector<1x8xf32>
    %18 = arith.addf %16, %17 : vector<1x8xf32>
    %cst_15 = arith.constant 0.000000e+00 : f32
    %19 = vector.broadcast %cst_15 : f32 to vector<1x8xf32>
    %20 = arith.maximumf %18, %19 : vector<1x8xf32>
    %c0_16 = arith.constant 0 : index
    %c0_17 = arith.constant 0 : index
    %21 = vector.load %arg7[%c0_16, %c0_17] : memref<8x32xf32, #tpu.memory_space<vmem>>, vector<8x32xf32>
    %cst_18 = arith.constant dense<0.000000e+00> : vector<1x32xf32>
    %22 = tpu.matmul %20, %21, %cst_18 {dimension_numbers = #tpu.dot_dimension_numbers<[1], [0], [0], [1], [0, 0, 1, 1], [], []>} : vector<1x8xf32>, vector<8x32xf32>, vector<1x32xf32> -> vector<1x32xf32>
    %c0_19 = arith.constant 0 : index
    %c0_20 = arith.constant 0 : index
    %23 = vector.load %arg8[%c0_19, %c0_20] : memref<1x32xf32, #tpu.memory_space<vmem>>, vector<1x32xf32>
    %24 = arith.addf %22, %23 : vector<1x32xf32>
    %c0_21 = arith.constant 0 : index
    %c0_22 = arith.constant 0 : index
    %25 = vector.load %arg5[%c0_21, %c0_22] : memref<32x8xf32, #tpu.memory_space<vmem>>, vector<32x8xf32>
    %cst_23 = arith.constant dense<0.000000e+00> : vector<1x8xf32>
    %26 = tpu.matmul %14, %25, %cst_23 {dimension_numbers = #tpu.dot_dimension_numbers<[1], [0], [0], [1], [0, 0, 1, 1], [], []>} : vector<1x32xf32>, vector<32x8xf32>, vector<1x8xf32> -> vector<1x8xf32>
    %c0_24 = arith.constant 0 : index
    %c0_25 = arith.constant 0 : index
    %27 = vector.load %arg6[%c0_24, %c0_25] : memref<1x8xf32, #tpu.memory_space<vmem>>, vector<1x8xf32>
    %28 = arith.addf %26, %27 : vector<1x8xf32>
    %cst_26 = arith.constant 0.000000e+00 : f32
    %29 = vector.broadcast %cst_26 : f32 to vector<1x8xf32>
    %30 = arith.maximumf %28, %29 : vector<1x8xf32>
    %c0_27 = arith.constant 0 : index
    %c0_28 = arith.constant 0 : index
    %31 = vector.load %arg7[%c0_27, %c0_28] : memref<8x32xf32, #tpu.memory_space<vmem>>, vector<8x32xf32>
    %cst_29 = arith.constant dense<0.000000e+00> : vector<1x32xf32>
    %32 = tpu.matmul %30, %31, %cst_29 {dimension_numbers = #tpu.dot_dimension_numbers<[1], [0], [0], [1], [0, 0, 1, 1], [], []>} : vector<1x8xf32>, vector<8x32xf32>, vector<1x32xf32> -> vector<1x32xf32>
    %c0_30 = arith.constant 0 : index
    %c0_31 = arith.constant 0 : index
    %33 = vector.load %arg8[%c0_30, %c0_31] : memref<1x32xf32, #tpu.memory_space<vmem>>, vector<1x32xf32>
    %34 = arith.addf %32, %33 : vector<1x32xf32>
    %35 = arith.addf %24, %34 : vector<1x32xf32>
    %36 = arith.negf %35 : vector<1x32xf32>
    %37 = math.exp %36 : vector<1x32xf32>
    %cst_32 = arith.constant 1.000000e+00 : f32
    %38 = vector.broadcast %cst_32 : f32 to vector<1x32xf32>
    %39 = arith.addf %38, %37 : vector<1x32xf32>
    %40 = arith.divf %38, %39 : vector<1x32xf32>
    %41 = vector.broadcast %40 : vector<1x32xf32> to vector<256x32xf32>
    %42 = arith.mulf %8, %41 : vector<256x32xf32>
    %cst_33 = arith.constant dense<0.000000e+00> : vector<256xf32>
    %43 = vector.multi_reduction <add>, %42, %cst_33 [1] : vector<256x32xf32> to vector<256xf32>
    %44 = vector.shape_cast %43 : vector<256xf32> to vector<256x1xf32>
    %cst_34 = arith.constant 3.200000e+01 : f32
    %45 = vector.broadcast %cst_34 : f32 to vector<256x1xf32>
    %46 = arith.divf %44, %45 : vector<256x1xf32>
    %cst_35 = arith.constant dense<0xFF800000> : vector<256xf32>
    %47 = vector.multi_reduction <maximumf>, %42, %cst_35 [1] : vector<256x32xf32> to vector<256xf32>
    %48 = vector.shape_cast %47 : vector<256xf32> to vector<256x1xf32>
    %c0_36 = arith.constant 0 : index
    %c0_37 = arith.constant 0 : index
    %49 = vector.load %arg9[%c0_36, %c0_37] : memref<1x2xf32, #tpu.memory_space<vmem>>, vector<1x1xf32>
    %50 = vector.broadcast %49 : vector<1x1xf32> to vector<256x1xf32>
    %51 = arith.mulf %46, %50 : vector<256x1xf32>
    %c0_38 = arith.constant 0 : index
    %c1 = arith.constant 1 : index
    %52 = vector.load %arg9[%c0_38, %c1] : memref<1x2xf32, #tpu.memory_space<vmem>>, vector<1x1xf32>
    %53 = vector.broadcast %52 : vector<1x1xf32> to vector<256x1xf32>
    %54 = arith.mulf %48, %53 : vector<256x1xf32>
    %55 = arith.addf %51, %54 : vector<256x1xf32>
    %c0_39 = arith.constant 0 : index
    %c0_40 = arith.constant 0 : index
    %56 = vector.load %arg10[%c0_39, %c0_40] : memref<1x1xf32, #tpu.memory_space<vmem>>, vector<1x1xf32>
    %57 = vector.broadcast %56 : vector<1x1xf32> to vector<256x1xf32>
    %58 = arith.addf %55, %57 : vector<256x1xf32>
    %59 = arith.negf %58 : vector<256x1xf32>
    %60 = math.exp %59 : vector<256x1xf32>
    %cst_41 = arith.constant 1.000000e+00 : f32
    %61 = vector.broadcast %cst_41 : f32 to vector<256x1xf32>
    %62 = arith.addf %61, %60 : vector<256x1xf32>
    %63 = arith.divf %61, %62 : vector<256x1xf32>
    %64 = vector.broadcast %63 : vector<256x1xf32> to vector<256x32xf32>
    %65 = arith.mulf %42, %64 : vector<256x32xf32>
    %c0_42 = arith.constant 0 : index
    %c0_43 = arith.constant 0 : index
    %66 = vector.load %arg11[%c0_42, %c0_43] : memref<32x32xf32, #tpu.memory_space<vmem>>, vector<32x32xf32>
    %cst_44 = arith.constant dense<0.000000e+00> : vector<256x32xf32>
    %67 = tpu.matmul %65, %66, %cst_44 {dimension_numbers = #tpu.dot_dimension_numbers<[1], [0], [0], [1], [0, 0, 1, 1], [], []>} : vector<256x32xf32>, vector<32x32xf32>, vector<256x32xf32> -> vector<256x32xf32>
    %c0_45 = arith.constant 0 : index
    %c0_46 = arith.constant 0 : index
    %68 = vector.load %arg12[%c0_45, %c0_46] : memref<1x32xf32, #tpu.memory_space<vmem>>, vector<1x32xf32>
    %69 = vector.broadcast %68 : vector<1x32xf32> to vector<256x32xf32>
    %70 = arith.addf %67, %69 : vector<256x32xf32>
    %cst_47 = arith.constant 0.000000e+00 : f32
    %71 = vector.broadcast %cst_47 : f32 to vector<256x32xf32>
    %72 = arith.maximumf %70, %71 : vector<256x32xf32>
    %c0_48 = arith.constant 0 : index
    %c0_49 = arith.constant 0 : index
    %73 = vector.load %arg13[%c0_48, %c0_49] : memref<32x32xf32, #tpu.memory_space<vmem>>, vector<32x32xf32>
    %cst_50 = arith.constant dense<0.000000e+00> : vector<256x32xf32>
    %74 = tpu.matmul %72, %73, %cst_50 {dimension_numbers = #tpu.dot_dimension_numbers<[1], [0], [0], [1], [0, 0, 1, 1], [], []>} : vector<256x32xf32>, vector<32x32xf32>, vector<256x32xf32> -> vector<256x32xf32>
    %c0_51 = arith.constant 0 : index
    %c0_52 = arith.constant 0 : index
    %75 = vector.load %arg14[%c0_51, %c0_52] : memref<1x32xf32, #tpu.memory_space<vmem>>, vector<1x32xf32>
    %76 = vector.broadcast %75 : vector<1x32xf32> to vector<256x32xf32>
    %77 = arith.addf %74, %76 : vector<256x32xf32>
    %cst_53 = arith.constant 0.000000e+00 : f32
    %78 = vector.broadcast %cst_53 : f32 to vector<256x32xf32>
    %79 = arith.maximumf %77, %78 : vector<256x32xf32>
    %c0_54 = arith.constant 0 : index
    %c0_55 = arith.constant 0 : index
    %80 = vector.load %arg2[%c0_54, %c0_55] : memref<4x16xf32, #tpu.memory_space<vmem>>, vector<4x16xf32>
    %c0_56 = arith.constant 0 : index
    %c0_57 = arith.constant 0 : index
    %81 = vector.load %arg15[%c0_56, %c0_57] : memref<16x32xf32, #tpu.memory_space<vmem>>, vector<16x32xf32>
    %cst_58 = arith.constant dense<0.000000e+00> : vector<4x32xf32>
    %82 = tpu.matmul %80, %81, %cst_58 {dimension_numbers = #tpu.dot_dimension_numbers<[1], [0], [0], [1], [0, 0, 1, 1], [], []>} : vector<4x16xf32>, vector<16x32xf32>, vector<4x32xf32> -> vector<4x32xf32>
    %c0_59 = arith.constant 0 : index
    %c0_60 = arith.constant 0 : index
    %83 = vector.load %arg16[%c0_59, %c0_60] : memref<1x32xf32, #tpu.memory_space<vmem>>, vector<1x32xf32>
    %84 = vector.broadcast %83 : vector<1x32xf32> to vector<4x32xf32>
    %85 = arith.addf %82, %84 : vector<4x32xf32>
    %cst_61 = arith.constant dense<0.000000e+00> : vector<4x256xf32>
    %86 = tpu.matmul %85, %79, %cst_61 {dimension_numbers = #tpu.dot_dimension_numbers<[1], [1], [0], [0], [0, 0, 1, 0], [], []>} : vector<4x32xf32>, vector<256x32xf32>, vector<4x256xf32> -> vector<4x256xf32>
    %cst_62 = arith.constant 0.176776692 : f32
    %87 = vector.broadcast %cst_62 : f32 to vector<4x256xf32>
    %88 = arith.mulf %86, %87 : vector<4x256xf32>
    %cst_63 = arith.constant dense<0xFF800000> : vector<4xf32>
    %89 = vector.multi_reduction <maximumf>, %88, %cst_63 [1] : vector<4x256xf32> to vector<4xf32>
    %90 = vector.shape_cast %89 : vector<4xf32> to vector<4x1xf32>
    %91 = vector.broadcast %90 : vector<4x1xf32> to vector<4x256xf32>
    %92 = arith.subf %88, %91 : vector<4x256xf32>
    %93 = math.exp %92 : vector<4x256xf32>
    %cst_64 = arith.constant dense<0.000000e+00> : vector<4xf32>
    %94 = vector.multi_reduction <add>, %93, %cst_64 [1] : vector<4x256xf32> to vector<4xf32>
    %95 = vector.shape_cast %94 : vector<4xf32> to vector<4x1xf32>
    %96 = vector.broadcast %95 : vector<4x1xf32> to vector<4x256xf32>
    %97 = arith.divf %93, %96 : vector<4x256xf32>
    %cst_65 = arith.constant dense<0.000000e+00> : vector<4x32xf32>
    %98 = tpu.matmul %97, %79, %cst_65 {dimension_numbers = #tpu.dot_dimension_numbers<[1], [0], [0], [1], [0, 0, 1, 1], [], []>} : vector<4x256xf32>, vector<256x32xf32>, vector<4x32xf32> -> vector<4x32xf32>
    %c0_66 = arith.constant 0 : index
    %c0_67 = arith.constant 0 : index
    %c0_68 = arith.constant 0 : index
    %99 = vector.load %arg17[%c0_66, %c0_67, %c0_68] : memref<1x4x32xf32, #tpu.memory_space<vmem>>, vector<1x4x32xf32>
    %100 = vector.shape_cast %99 : vector<1x4x32xf32> to vector<4x32xf32>
    %101 = vector.shape_cast %98 : vector<4x32xf32> to vector<1x4x32xf32>
    tpu.vector_store %arg17[%c0_66, %c0_67, %c0_68], %101 {strides = array<i32>} : memref<1x4x32xf32, #tpu.memory_space<vmem>>, vector<1x4x32xf32>,
    %c0_69 = arith.constant 0 : index
    %c0_70 = arith.constant 0 : index
    %c0_71 = arith.constant 0 : index
    %102 = vector.load %arg18[%c0_69, %c0_70, %c0_71] : memref<1x4x256xf32, #tpu.memory_space<vmem>>, vector<1x4x256xf32>
    %103 = vector.shape_cast %102 : vector<1x4x256xf32> to vector<4x256xf32>
    %104 = vector.shape_cast %97 : vector<4x256xf32> to vector<1x4x256xf32>
    tpu.vector_store %arg18[%c0_69, %c0_70, %c0_71], %104 {strides = array<i32>} : memref<1x4x256xf32, #tpu.memory_space<vmem>>, vector<1x4x256xf32>,
    return
  }
  func.func @transform_0(%arg0: i32) -> (i32, i32, i32) {
    %c0_i32 = arith.constant 0 : i32
    %c0_i32_0 = arith.constant 0 : i32
    %c0_i32_1 = arith.constant 0 : i32
    return %arg0, %c0_i32, %c0_i32_0 : i32, i32, i32
  }
  func.func @transform_1(%arg0: i32) -> (i32, i32) {
    %c0_i32 = arith.constant 0 : i32
    %c0_i32_0 = arith.constant 0 : i32
    %c0_i32_1 = arith.constant 0 : i32
    return %c0_i32, %c0_i32_0 : i32, i32
  }
  func.func @transform_2(%arg0: i32) -> (i32, i32) {
    %c0_i32 = arith.constant 0 : i32
    %c0_i32_0 = arith.constant 0 : i32
    %c0_i32_1 = arith.constant 0 : i32
    return %c0_i32, %c0_i32_0 : i32, i32
  }
  func.func @transform_3(%arg0: i32) -> (i32, i32) {
    %c0_i32 = arith.constant 0 : i32
    %c0_i32_0 = arith.constant 0 : i32
    %c0_i32_1 = arith.constant 0 : i32
    return %c0_i32, %c0_i32_0 : i32, i32
  }
  func.func @transform_4(%arg0: i32) -> (i32, i32) {
    %c0_i32 = arith.constant 0 : i32
    %c0_i32_0 = arith.constant 0 : i32
    %c0_i32_1 = arith.constant 0 : i32
    return %c0_i32, %c0_i32_0 : i32, i32
  }
  func.func @transform_5(%arg0: i32) -> (i32, i32) {
    %c0_i32 = arith.constant 0 : i32
    %c0_i32_0 = arith.constant 0 : i32
    %c0_i32_1 = arith.constant 0 : i32
    return %c0_i32, %c0_i32_0 : i32, i32
  }
  func.func @transform_6(%arg0: i32) -> (i32, i32) {
    %c0_i32 = arith.constant 0 : i32
    %c0_i32_0 = arith.constant 0 : i32
    %c0_i32_1 = arith.constant 0 : i32
    return %c0_i32, %c0_i32_0 : i32, i32
  }
  func.func @transform_7(%arg0: i32) -> (i32, i32) {
    %c0_i32 = arith.constant 0 : i32
    %c0_i32_0 = arith.constant 0 : i32
    %c0_i32_1 = arith.constant 0 : i32
    return %c0_i32, %c0_i32_0 : i32, i32
  }
  func.func @transform_8(%arg0: i32) -> (i32, i32) {
    %c0_i32 = arith.constant 0 : i32
    %c0_i32_0 = arith.constant 0 : i32
    %c0_i32_1 = arith.constant 0 : i32
    return %c0_i32, %c0_i32_0 : i32, i32
  }
  func.func @transform_9(%arg0: i32) -> (i32, i32) {
    %c0_i32 = arith.constant 0 : i32
    %c0_i32_0 = arith.constant 0 : i32
    %c0_i32_1 = arith.constant 0 : i32
    return %c0_i32, %c0_i32_0 : i32, i32
  }
  func.func @transform_10(%arg0: i32) -> (i32, i32) {
    %c0_i32 = arith.constant 0 : i32
    %c0_i32_0 = arith.constant 0 : i32
    %c0_i32_1 = arith.constant 0 : i32
    return %c0_i32, %c0_i32_0 : i32, i32
  }
  func.func @transform_11(%arg0: i32) -> (i32, i32) {
    %c0_i32 = arith.constant 0 : i32
    %c0_i32_0 = arith.constant 0 : i32
    %c0_i32_1 = arith.constant 0 : i32
    return %c0_i32, %c0_i32_0 : i32, i32
  }
  func.func @transform_12(%arg0: i32) -> (i32, i32) {
    %c0_i32 = arith.constant 0 : i32
    %c0_i32_0 = arith.constant 0 : i32
    %c0_i32_1 = arith.constant 0 : i32
    return %c0_i32, %c0_i32_0 : i32, i32
  }
  func.func @transform_13(%arg0: i32) -> (i32, i32) {
    %c0_i32 = arith.constant 0 : i32
    %c0_i32_0 = arith.constant 0 : i32
    %c0_i32_1 = arith.constant 0 : i32
    return %c0_i32, %c0_i32_0 : i32, i32
  }
  func.func @transform_14(%arg0: i32) -> (i32, i32) {
    %c0_i32 = arith.constant 0 : i32
    %c0_i32_0 = arith.constant 0 : i32
    %c0_i32_1 = arith.constant 0 : i32
    return %c0_i32, %c0_i32_0 : i32, i32
  }
  func.func @transform_15(%arg0: i32) -> (i32, i32) {
    %c0_i32 = arith.constant 0 : i32
    %c0_i32_0 = arith.constant 0 : i32
    %c0_i32_1 = arith.constant 0 : i32
    return %c0_i32, %c0_i32_0 : i32, i32
  }
  func.func @transform_16(%arg0: i32) -> (i32, i32, i32) {
    %c0_i32 = arith.constant 0 : i32
    %c0_i32_0 = arith.constant 0 : i32
    %c0_i32_1 = arith.constant 0 : i32
    return %arg0, %c0_i32, %c0_i32_0 : i32, i32, i32
  }
  func.func @transform_17(%arg0: i32) -> (i32, i32, i32) {
    %c0_i32 = arith.constant 0 : i32
    %c0_i32_0 = arith.constant 0 : i32
    %c0_i32_1 = arith.constant 0 : i32
    return %arg0, %c0_i32, %c0_i32_0 : i32, i32, i32
  }
}

module attributes {stable_mosaic.version = 11 : i64} {
  func.func @_gnn_kernel(%arg0: i32, %arg1: memref<8x32xf32, #tpu.memory_space<vmem>>, %arg2: memref<32x2xi32, #tpu.memory_space<vmem>>, %arg3: memref<32x4xf32, #tpu.memory_space<vmem>>, %arg4: memref<32x32xf32, #tpu.memory_space<vmem>>, %arg5: memref<1x32xf32, #tpu.memory_space<vmem>>, %arg6: memref<2x16xf32, #tpu.memory_space<vmem>>, %arg7: memref<2x16xf32, #tpu.memory_space<vmem>>, %arg8: memref<4x2xf32, #tpu.memory_space<vmem>>, %arg9: memref<1x2xf32, #tpu.memory_space<vmem>>, %arg10: memref<8x32xf32, #tpu.memory_space<vmem>>, %arg11: memref<32x1xf32, #tpu.memory_space<vmem>>) attributes {dimension_semantics = [#tpu.dimension_semantics<arbitrary>], iteration_bounds = array<i64: 1>, scalar_prefetch = 0 : i64, scratch_operands = 0 : i64, tpu.core_type = #tpu.core_type<tc>, window_params = [{pipeline_mode = #tpu.pipeline_mode<synchronous>, transform_indices = @transform_0, window_bounds = array<i64: 8, 32>}, {pipeline_mode = #tpu.pipeline_mode<synchronous>, transform_indices = @transform_1, window_bounds = array<i64: 32, 2>}, {pipeline_mode = #tpu.pipeline_mode<synchronous>, transform_indices = @transform_2, window_bounds = array<i64: 32, 4>}, {pipeline_mode = #tpu.pipeline_mode<synchronous>, transform_indices = @transform_3, window_bounds = array<i64: 32, 32>}, {pipeline_mode = #tpu.pipeline_mode<synchronous>, transform_indices = @transform_4, window_bounds = array<i64: 1, 32>}, {pipeline_mode = #tpu.pipeline_mode<synchronous>, transform_indices = @transform_5, window_bounds = array<i64: 2, 16>}, {pipeline_mode = #tpu.pipeline_mode<synchronous>, transform_indices = @transform_6, window_bounds = array<i64: 2, 16>}, {pipeline_mode = #tpu.pipeline_mode<synchronous>, transform_indices = @transform_7, window_bounds = array<i64: 4, 2>}, {pipeline_mode = #tpu.pipeline_mode<synchronous>, transform_indices = @transform_8, window_bounds = array<i64: 1, 2>}, {pipeline_mode = #tpu.pipeline_mode<synchronous>, transform_indices = @transform_9, window_bounds = array<i64: 8, 32>}, {pipeline_mode = #tpu.pipeline_mode<synchronous>, transform_indices = @transform_10, window_bounds = array<i64: 32, 1>}]} {
    %c0 = arith.constant 0 : index
    %c0_0 = arith.constant 0 : index
    %0 = vector.load %arg1[%c0, %c0_0] : memref<8x32xf32, #tpu.memory_space<vmem>>, vector<8x32xf32>
    %c0_1 = arith.constant 0 : index
    %c0_2 = arith.constant 0 : index
    %1 = vector.load %arg4[%c0_1, %c0_2] : memref<32x32xf32, #tpu.memory_space<vmem>>, vector<32x32xf32>
    %cst = arith.constant dense<0.000000e+00> : vector<8x32xf32>
    %2 = tpu.matmul %0, %1, %cst {dimension_numbers = #tpu.dot_dimension_numbers<[1], [0], [0], [1], [0, 0, 1, 1], [], []>} : vector<8x32xf32>, vector<32x32xf32>, vector<8x32xf32> -> vector<8x32xf32>
    %c0_3 = arith.constant 0 : index
    %c0_4 = arith.constant 0 : index
    %3 = vector.load %arg5[%c0_3, %c0_4] : memref<1x32xf32, #tpu.memory_space<vmem>>, vector<1x32xf32>
    %4 = vector.broadcast %3 : vector<1x32xf32> to vector<8x32xf32>
    %5 = arith.addf %2, %4 : vector<8x32xf32>
    %c0_5 = arith.constant 0 : index
    %c0_6 = arith.constant 0 : index
    %6 = vector.load %arg3[%c0_5, %c0_6] : memref<32x4xf32, #tpu.memory_space<vmem>>, vector<32x4xf32>
    %c0_7 = arith.constant 0 : index
    %c0_8 = arith.constant 0 : index
    %7 = vector.load %arg8[%c0_7, %c0_8] : memref<4x2xf32, #tpu.memory_space<vmem>>, vector<4x2xf32>
    %cst_9 = arith.constant dense<0.000000e+00> : vector<32x2xf32>
    %8 = tpu.matmul %6, %7, %cst_9 {dimension_numbers = #tpu.dot_dimension_numbers<[1], [0], [0], [1], [0, 0, 1, 1], [], []>} : vector<32x4xf32>, vector<4x2xf32>, vector<32x2xf32> -> vector<32x2xf32>
    %c0_10 = arith.constant 0 : index
    %c0_11 = arith.constant 0 : index
    %9 = vector.load %arg9[%c0_10, %c0_11] : memref<1x2xf32, #tpu.memory_space<vmem>>, vector<1x2xf32>
    %10 = vector.broadcast %9 : vector<1x2xf32> to vector<32x2xf32>
    %11 = arith.addf %8, %10 : vector<32x2xf32>
    %c0_12 = arith.constant 0 : index
    %c0_13 = arith.constant 0 : index
    %12 = vector.load %arg2[%c0_12, %c0_13] : memref<32x2xi32, #tpu.memory_space<vmem>>, vector<32x2xi32>
    %13 = tpu.iota {dimensions = array<i32: 1>} : vector<32x8xi32>
    %14 = vector.extract_strided_slice %12 {offsets = [0, 0], sizes = [32, 1], strides = [1, 1]} : vector<32x2xi32> to vector<32x1xi32>
    %15 = vector.broadcast %14 : vector<32x1xi32> to vector<32x8xi32>
    %16 = arith.cmpi eq, %13, %15 : vector<32x8xi32>
    %17 = arith.extui %16 : vector<32x8xi1> to vector<32x8xi32>
    %18 = arith.sitofp %17 : vector<32x8xi32> to vector<32x8xf32>
    %19 = vector.extract_strided_slice %12 {offsets = [0, 1], sizes = [32, 1], strides = [1, 1]} : vector<32x2xi32> to vector<32x1xi32>
    %20 = vector.broadcast %19 : vector<32x1xi32> to vector<32x8xi32>
    %21 = arith.cmpi eq, %13, %20 : vector<32x8xi32>
    %22 = arith.extui %21 : vector<32x8xi1> to vector<32x8xi32>
    %23 = arith.sitofp %22 : vector<32x8xi32> to vector<32x8xf32>
    %24 = tpu.transpose %23, [1, 0] : vector<32x8xf32> -> vector<8x32xf32>
    %cst_14 = arith.constant dense<0.000000e+00> : vector<8x8xf32>
    %25 = tpu.matmul %24, %18, %cst_14 {dimension_numbers = #tpu.dot_dimension_numbers<[1], [0], [0], [1], [0, 0, 1, 1], [], []>} : vector<8x32xf32>, vector<32x8xf32>, vector<8x8xf32> -> vector<8x8xf32>
    %cst_15 = arith.constant 0.000000e+00 : f32
    %26 = vector.broadcast %cst_15 : f32 to vector<8x8xf32>
    %27 = arith.cmpf ogt, %25, %26 : vector<8x8xf32>
    %cst_16 = arith.constant 1.000000e+00 : f32
    %cst_17 = arith.constant 0.000000e+00 : f32
    %28 = vector.broadcast %cst_16 : f32 to vector<8x8xf32>
    %29 = vector.broadcast %cst_17 : f32 to vector<8x8xf32>
    %30 = arith.select %27, %28, %29 : vector<8x8xi1>, vector<8x8xf32>
    %cst_18 = arith.constant 0.000000e+00 : f32
    %31 = vector.broadcast %cst_18 : f32 to vector<32x1xf32>
    %32 = vector.extract_strided_slice %5 {offsets = [0, 0], sizes = [8, 16], strides = [1, 1]} : vector<8x32xf32> to vector<8x16xf32>
    %c0_19 = arith.constant 0 : index
    %c0_20 = arith.constant 0 : index
    %33 = vector.load %arg6[%c0_19, %c0_20] : memref<2x16xf32, #tpu.memory_space<vmem>>, vector<1x16xf32>
    %34 = vector.broadcast %33 : vector<1x16xf32> to vector<8x16xf32>
    %35 = arith.mulf %32, %34 : vector<8x16xf32>
    %cst_21 = arith.constant dense<0.000000e+00> : vector<8xf32>
    %36 = vector.multi_reduction <add>, %35, %cst_21 [1] : vector<8x16xf32> to vector<8xf32>
    %37 = vector.shape_cast %36 : vector<8xf32> to vector<8x1xf32>
    %c0_22 = arith.constant 0 : index
    %c0_23 = arith.constant 0 : index
    %38 = vector.load %arg7[%c0_22, %c0_23] : memref<2x16xf32, #tpu.memory_space<vmem>>, vector<1x16xf32>
    %39 = vector.broadcast %38 : vector<1x16xf32> to vector<8x16xf32>
    %40 = arith.mulf %32, %39 : vector<8x16xf32>
    %cst_24 = arith.constant dense<0.000000e+00> : vector<8xf32>
    %41 = vector.multi_reduction <add>, %40, %cst_24 [1] : vector<8x16xf32> to vector<8xf32>
    %42 = vector.shape_cast %41 : vector<8xf32> to vector<8x1xf32>
    %43 = vector.extract_strided_slice %11 {offsets = [0, 0], sizes = [32, 1], strides = [1, 1]} : vector<32x2xf32> to vector<32x1xf32>
    %44 = vector.broadcast %43 : vector<32x1xf32> to vector<32x8xf32>
    %45 = arith.mulf %18, %44 : vector<32x8xf32>
    %cst_25 = arith.constant dense<0.000000e+00> : vector<8x8xf32>
    %46 = tpu.matmul %24, %45, %cst_25 {dimension_numbers = #tpu.dot_dimension_numbers<[1], [0], [0], [1], [0, 0, 1, 1], [], []>} : vector<8x32xf32>, vector<32x8xf32>, vector<8x8xf32> -> vector<8x8xf32>
    %47 = tpu.transpose %37, [1, 0] : vector<8x1xf32> -> vector<1x8xf32>
    %48 = vector.broadcast %42 : vector<8x1xf32> to vector<8x8xf32>
    %49 = vector.broadcast %47 : vector<1x8xf32> to vector<8x8xf32>
    %50 = arith.addf %48, %49 : vector<8x8xf32>
    %51 = arith.addf %50, %46 : vector<8x8xf32>
    %cst_26 = arith.constant 0.000000e+00 : f32
    %52 = vector.broadcast %cst_26 : f32 to vector<8x8xf32>
    %53 = arith.cmpf ogt, %51, %52 : vector<8x8xf32>
    %cst_27 = arith.constant 2.000000e-01 : f32
    %54 = vector.broadcast %cst_27 : f32 to vector<8x8xf32>
    %55 = arith.mulf %54, %51 : vector<8x8xf32>
    %56 = arith.select %53, %51, %55 : vector<8x8xi1>, vector<8x8xf32>
    %cst_28 = arith.constant 0.000000e+00 : f32
    %57 = vector.broadcast %cst_28 : f32 to vector<8x8xf32>
    %58 = arith.cmpf ogt, %30, %57 : vector<8x8xf32>
    %cst_29 = arith.constant -1.000000e+30 : f32
    %59 = vector.broadcast %cst_29 : f32 to vector<8x8xf32>
    %60 = arith.select %58, %56, %59 : vector<8x8xi1>, vector<8x8xf32>
    %cst_30 = arith.constant dense<0xFF800000> : vector<8xf32>
    %61 = vector.multi_reduction <maximumf>, %60, %cst_30 [1] : vector<8x8xf32> to vector<8xf32>
    %62 = vector.shape_cast %61 : vector<8xf32> to vector<8x1xf32>
    %63 = vector.broadcast %62 : vector<8x1xf32> to vector<8x8xf32>
    %64 = arith.subf %60, %63 : vector<8x8xf32>
    %65 = math.exp %64 : vector<8x8xf32>
    %66 = arith.mulf %65, %30 : vector<8x8xf32>
    %cst_31 = arith.constant dense<0.000000e+00> : vector<8xf32>
    %67 = vector.multi_reduction <add>, %66, %cst_31 [1] : vector<8x8xf32> to vector<8xf32>
    %68 = vector.shape_cast %67 : vector<8xf32> to vector<8x1xf32>
    %cst_32 = arith.constant 1.000000e-30 : f32
    %69 = vector.broadcast %cst_32 : f32 to vector<8x1xf32>
    %70 = arith.maximumf %68, %69 : vector<8x1xf32>
    %71 = vector.broadcast %70 : vector<8x1xf32> to vector<8x8xf32>
    %72 = arith.divf %66, %71 : vector<8x8xf32>
    %cst_33 = arith.constant dense<0.000000e+00> : vector<8x16xf32>
    %73 = tpu.matmul %72, %32, %cst_33 {dimension_numbers = #tpu.dot_dimension_numbers<[1], [0], [0], [1], [0, 0, 1, 1], [], []>} : vector<8x8xf32>, vector<8x16xf32>, vector<8x16xf32> -> vector<8x16xf32>
    %c0_34 = arith.constant 0 : index
    %c0_35 = arith.constant 0 : index
    %74 = vector.load %arg10[%c0_34, %c0_35] : memref<8x32xf32, #tpu.memory_space<vmem>>, vector<8x16xf32>
    tpu.vector_store %arg10[%c0_34, %c0_35], %73 {strides = array<i32>} : memref<8x32xf32, #tpu.memory_space<vmem>>, vector<8x16xf32>,
    %cst_36 = arith.constant dense<0.000000e+00> : vector<32x8xf32>
    %75 = tpu.matmul %23, %72, %cst_36 {dimension_numbers = #tpu.dot_dimension_numbers<[1], [0], [0], [1], [0, 0, 1, 1], [], []>} : vector<32x8xf32>, vector<8x8xf32>, vector<32x8xf32> -> vector<32x8xf32>
    %76 = arith.mulf %75, %18 : vector<32x8xf32>
    %cst_37 = arith.constant dense<0.000000e+00> : vector<32xf32>
    %77 = vector.multi_reduction <add>, %76, %cst_37 [1] : vector<32x8xf32> to vector<32xf32>
    %78 = vector.shape_cast %77 : vector<32xf32> to vector<32x1xf32>
    %79 = arith.addf %31, %78 : vector<32x1xf32>
    %80 = vector.extract_strided_slice %5 {offsets = [0, 16], sizes = [8, 16], strides = [1, 1]} : vector<8x32xf32> to vector<8x16xf32>
    %c1 = arith.constant 1 : index
    %c0_38 = arith.constant 0 : index
    %81 = vector.load %arg6[%c1, %c0_38] : memref<2x16xf32, #tpu.memory_space<vmem>>, vector<1x16xf32>
    %82 = vector.broadcast %81 : vector<1x16xf32> to vector<8x16xf32>
    %83 = arith.mulf %80, %82 : vector<8x16xf32>
    %cst_39 = arith.constant dense<0.000000e+00> : vector<8xf32>
    %84 = vector.multi_reduction <add>, %83, %cst_39 [1] : vector<8x16xf32> to vector<8xf32>
    %85 = vector.shape_cast %84 : vector<8xf32> to vector<8x1xf32>
    %c1_40 = arith.constant 1 : index
    %c0_41 = arith.constant 0 : index
    %86 = vector.load %arg7[%c1_40, %c0_41] : memref<2x16xf32, #tpu.memory_space<vmem>>, vector<1x16xf32>
    %87 = vector.broadcast %86 : vector<1x16xf32> to vector<8x16xf32>
    %88 = arith.mulf %80, %87 : vector<8x16xf32>
    %cst_42 = arith.constant dense<0.000000e+00> : vector<8xf32>
    %89 = vector.multi_reduction <add>, %88, %cst_42 [1] : vector<8x16xf32> to vector<8xf32>
    %90 = vector.shape_cast %89 : vector<8xf32> to vector<8x1xf32>
    %91 = vector.extract_strided_slice %11 {offsets = [0, 1], sizes = [32, 1], strides = [1, 1]} : vector<32x2xf32> to vector<32x1xf32>
    %92 = vector.broadcast %91 : vector<32x1xf32> to vector<32x8xf32>
    %93 = arith.mulf %18, %92 : vector<32x8xf32>
    %cst_43 = arith.constant dense<0.000000e+00> : vector<8x8xf32>
    %94 = tpu.matmul %24, %93, %cst_43 {dimension_numbers = #tpu.dot_dimension_numbers<[1], [0], [0], [1], [0, 0, 1, 1], [], []>} : vector<8x32xf32>, vector<32x8xf32>, vector<8x8xf32> -> vector<8x8xf32>
    %95 = tpu.transpose %85, [1, 0] : vector<8x1xf32> -> vector<1x8xf32>
    %96 = vector.broadcast %90 : vector<8x1xf32> to vector<8x8xf32>
    %97 = vector.broadcast %95 : vector<1x8xf32> to vector<8x8xf32>
    %98 = arith.addf %96, %97 : vector<8x8xf32>
    %99 = arith.addf %98, %94 : vector<8x8xf32>
    %cst_44 = arith.constant 0.000000e+00 : f32
    %100 = vector.broadcast %cst_44 : f32 to vector<8x8xf32>
    %101 = arith.cmpf ogt, %99, %100 : vector<8x8xf32>
    %cst_45 = arith.constant 2.000000e-01 : f32
    %102 = vector.broadcast %cst_45 : f32 to vector<8x8xf32>
    %103 = arith.mulf %102, %99 : vector<8x8xf32>
    %104 = arith.select %101, %99, %103 : vector<8x8xi1>, vector<8x8xf32>
    %cst_46 = arith.constant 0.000000e+00 : f32
    %105 = vector.broadcast %cst_46 : f32 to vector<8x8xf32>
    %106 = arith.cmpf ogt, %30, %105 : vector<8x8xf32>
    %cst_47 = arith.constant -1.000000e+30 : f32
    %107 = vector.broadcast %cst_47 : f32 to vector<8x8xf32>
    %108 = arith.select %106, %104, %107 : vector<8x8xi1>, vector<8x8xf32>
    %cst_48 = arith.constant dense<0xFF800000> : vector<8xf32>
    %109 = vector.multi_reduction <maximumf>, %108, %cst_48 [1] : vector<8x8xf32> to vector<8xf32>
    %110 = vector.shape_cast %109 : vector<8xf32> to vector<8x1xf32>
    %111 = vector.broadcast %110 : vector<8x1xf32> to vector<8x8xf32>
    %112 = arith.subf %108, %111 : vector<8x8xf32>
    %113 = math.exp %112 : vector<8x8xf32>
    %114 = arith.mulf %113, %30 : vector<8x8xf32>
    %cst_49 = arith.constant dense<0.000000e+00> : vector<8xf32>
    %115 = vector.multi_reduction <add>, %114, %cst_49 [1] : vector<8x8xf32> to vector<8xf32>
    %116 = vector.shape_cast %115 : vector<8xf32> to vector<8x1xf32>
    %cst_50 = arith.constant 1.000000e-30 : f32
    %117 = vector.broadcast %cst_50 : f32 to vector<8x1xf32>
    %118 = arith.maximumf %116, %117 : vector<8x1xf32>
    %119 = vector.broadcast %118 : vector<8x1xf32> to vector<8x8xf32>
    %120 = arith.divf %114, %119 : vector<8x8xf32>
    %cst_51 = arith.constant dense<0.000000e+00> : vector<8x16xf32>
    %121 = tpu.matmul %120, %80, %cst_51 {dimension_numbers = #tpu.dot_dimension_numbers<[1], [0], [0], [1], [0, 0, 1, 1], [], []>} : vector<8x8xf32>, vector<8x16xf32>, vector<8x16xf32> -> vector<8x16xf32>
    %c0_52 = arith.constant 0 : index
    %c16 = arith.constant 16 : index
    %122 = vector.load %arg10[%c0_52, %c16] : memref<8x32xf32, #tpu.memory_space<vmem>>, vector<8x16xf32>
    tpu.vector_store %arg10[%c0_52, %c16], %121 {strides = array<i32>} : memref<8x32xf32, #tpu.memory_space<vmem>>, vector<8x16xf32>,
    %cst_53 = arith.constant dense<0.000000e+00> : vector<32x8xf32>
    %123 = tpu.matmul %23, %120, %cst_53 {dimension_numbers = #tpu.dot_dimension_numbers<[1], [0], [0], [1], [0, 0, 1, 1], [], []>} : vector<32x8xf32>, vector<8x8xf32>, vector<32x8xf32> -> vector<32x8xf32>
    %124 = arith.mulf %123, %18 : vector<32x8xf32>
    %cst_54 = arith.constant dense<0.000000e+00> : vector<32xf32>
    %125 = vector.multi_reduction <add>, %124, %cst_54 [1] : vector<32x8xf32> to vector<32xf32>
    %126 = vector.shape_cast %125 : vector<32xf32> to vector<32x1xf32>
    %127 = arith.addf %79, %126 : vector<32x1xf32>
    %cst_55 = arith.constant 2.000000e+00 : f32
    %128 = vector.broadcast %cst_55 : f32 to vector<32x1xf32>
    %129 = arith.divf %127, %128 : vector<32x1xf32>
    %c0_56 = arith.constant 0 : index
    %c0_57 = arith.constant 0 : index
    %130 = vector.load %arg11[%c0_56, %c0_57] : memref<32x1xf32, #tpu.memory_space<vmem>>, vector<32x1xf32>
    tpu.vector_store %arg11[%c0_56, %c0_57], %129 {strides = array<i32>} : memref<32x1xf32, #tpu.memory_space<vmem>>, vector<32x1xf32>,
    return
  }
  func.func @transform_0(%arg0: i32) -> (i32, i32) {
    %c0_i32 = arith.constant 0 : i32
    %c0_i32_0 = arith.constant 0 : i32
    %c0_i32_1 = arith.constant 0 : i32
    return %c0_i32, %c0_i32_0 : i32, i32
  }
  func.func @transform_1(%arg0: i32) -> (i32, i32) {
    %c0_i32 = arith.constant 0 : i32
    %c0_i32_0 = arith.constant 0 : i32
    %c0_i32_1 = arith.constant 0 : i32
    return %c0_i32, %c0_i32_0 : i32, i32
  }
  func.func @transform_2(%arg0: i32) -> (i32, i32) {
    %c0_i32 = arith.constant 0 : i32
    %c0_i32_0 = arith.constant 0 : i32
    %c0_i32_1 = arith.constant 0 : i32
    return %c0_i32, %c0_i32_0 : i32, i32
  }
  func.func @transform_3(%arg0: i32) -> (i32, i32) {
    %c0_i32 = arith.constant 0 : i32
    %c0_i32_0 = arith.constant 0 : i32
    %c0_i32_1 = arith.constant 0 : i32
    return %c0_i32, %c0_i32_0 : i32, i32
  }
  func.func @transform_4(%arg0: i32) -> (i32, i32) {
    %c0_i32 = arith.constant 0 : i32
    %c0_i32_0 = arith.constant 0 : i32
    %c0_i32_1 = arith.constant 0 : i32
    return %c0_i32, %c0_i32_0 : i32, i32
  }
  func.func @transform_5(%arg0: i32) -> (i32, i32) {
    %c0_i32 = arith.constant 0 : i32
    %c0_i32_0 = arith.constant 0 : i32
    %c0_i32_1 = arith.constant 0 : i32
    return %c0_i32, %c0_i32_0 : i32, i32
  }
  func.func @transform_6(%arg0: i32) -> (i32, i32) {
    %c0_i32 = arith.constant 0 : i32
    %c0_i32_0 = arith.constant 0 : i32
    %c0_i32_1 = arith.constant 0 : i32
    return %c0_i32, %c0_i32_0 : i32, i32
  }
  func.func @transform_7(%arg0: i32) -> (i32, i32) {
    %c0_i32 = arith.constant 0 : i32
    %c0_i32_0 = arith.constant 0 : i32
    %c0_i32_1 = arith.constant 0 : i32
    return %c0_i32, %c0_i32_0 : i32, i32
  }
  func.func @transform_8(%arg0: i32) -> (i32, i32) {
    %c0_i32 = arith.constant 0 : i32
    %c0_i32_0 = arith.constant 0 : i32
    %c0_i32_1 = arith.constant 0 : i32
    return %c0_i32, %c0_i32_0 : i32, i32
  }
  func.func @transform_9(%arg0: i32) -> (i32, i32) {
    %c0_i32 = arith.constant 0 : i32
    %c0_i32_0 = arith.constant 0 : i32
    %c0_i32_1 = arith.constant 0 : i32
    return %c0_i32, %c0_i32_0 : i32, i32
  }
  func.func @transform_10(%arg0: i32) -> (i32, i32) {
    %c0_i32 = arith.constant 0 : i32
    %c0_i32_0 = arith.constant 0 : i32
    %c0_i32_1 = arith.constant 0 : i32
    return %c0_i32, %c0_i32_0 : i32, i32
  }
}

module attributes {stable_mosaic.version = 11 : i64} {
  func.func @_heads_kernel(%arg0: i32, %arg1: memref<2x128xf32, #tpu.memory_space<vmem>>, %arg2: memref<128x64xf32, #tpu.memory_space<vmem>>, %arg3: memref<1x64xf32, #tpu.memory_space<vmem>>, %arg4: memref<64x4xf32, #tpu.memory_space<vmem>>, %arg5: memref<1x4xf32, #tpu.memory_space<vmem>>, %arg6: memref<64x8xf32, #tpu.memory_space<vmem>>, %arg7: memref<1x8xf32, #tpu.memory_space<vmem>>, %arg8: memref<2x4xf32, #tpu.memory_space<vmem>>, %arg9: memref<2x8xf32, #tpu.memory_space<vmem>>) attributes {dimension_semantics = [#tpu.dimension_semantics<arbitrary>], iteration_bounds = array<i64: 1>, scalar_prefetch = 0 : i64, scratch_operands = 0 : i64, tpu.core_type = #tpu.core_type<tc>, window_params = [{pipeline_mode = #tpu.pipeline_mode<synchronous>, transform_indices = @transform_0, window_bounds = array<i64: 2, 128>}, {pipeline_mode = #tpu.pipeline_mode<synchronous>, transform_indices = @transform_1, window_bounds = array<i64: 128, 64>}, {pipeline_mode = #tpu.pipeline_mode<synchronous>, transform_indices = @transform_2, window_bounds = array<i64: 1, 64>}, {pipeline_mode = #tpu.pipeline_mode<synchronous>, transform_indices = @transform_3, window_bounds = array<i64: 64, 4>}, {pipeline_mode = #tpu.pipeline_mode<synchronous>, transform_indices = @transform_4, window_bounds = array<i64: 1, 4>}, {pipeline_mode = #tpu.pipeline_mode<synchronous>, transform_indices = @transform_5, window_bounds = array<i64: 64, 8>}, {pipeline_mode = #tpu.pipeline_mode<synchronous>, transform_indices = @transform_6, window_bounds = array<i64: 1, 8>}, {pipeline_mode = #tpu.pipeline_mode<synchronous>, transform_indices = @transform_7, window_bounds = array<i64: 2, 4>}, {pipeline_mode = #tpu.pipeline_mode<synchronous>, transform_indices = @transform_8, window_bounds = array<i64: 2, 8>}]} {
    %c0 = arith.constant 0 : index
    %c0_0 = arith.constant 0 : index
    %0 = vector.load %arg1[%c0, %c0_0] : memref<2x128xf32, #tpu.memory_space<vmem>>, vector<2x128xf32>
    %c0_1 = arith.constant 0 : index
    %c0_2 = arith.constant 0 : index
    %1 = vector.load %arg2[%c0_1, %c0_2] : memref<128x64xf32, #tpu.memory_space<vmem>>, vector<128x64xf32>
    %cst = arith.constant dense<0.000000e+00> : vector<2x64xf32>
    %2 = tpu.matmul %0, %1, %cst {dimension_numbers = #tpu.dot_dimension_numbers<[1], [0], [0], [1], [0, 0, 1, 1], [], []>} : vector<2x128xf32>, vector<128x64xf32>, vector<2x64xf32> -> vector<2x64xf32>
    %c0_3 = arith.constant 0 : index
    %c0_4 = arith.constant 0 : index
    %3 = vector.load %arg3[%c0_3, %c0_4] : memref<1x64xf32, #tpu.memory_space<vmem>>, vector<1x64xf32>
    %4 = vector.broadcast %3 : vector<1x64xf32> to vector<2x64xf32>
    %5 = arith.addf %2, %4 : vector<2x64xf32>
    %cst_5 = arith.constant 0.000000e+00 : f32
    %6 = vector.broadcast %cst_5 : f32 to vector<2x64xf32>
    %7 = arith.maximumf %5, %6 : vector<2x64xf32>
    %c0_6 = arith.constant 0 : index
    %c0_7 = arith.constant 0 : index
    %8 = vector.load %arg4[%c0_6, %c0_7] : memref<64x4xf32, #tpu.memory_space<vmem>>, vector<64x4xf32>
    %cst_8 = arith.constant dense<0.000000e+00> : vector<2x4xf32>
    %9 = tpu.matmul %7, %8, %cst_8 {dimension_numbers = #tpu.dot_dimension_numbers<[1], [0], [0], [1], [0, 0, 1, 1], [], []>} : vector<2x64xf32>, vector<64x4xf32>, vector<2x4xf32> -> vector<2x4xf32>
    %c0_9 = arith.constant 0 : index
    %c0_10 = arith.constant 0 : index
    %10 = vector.load %arg5[%c0_9, %c0_10] : memref<1x4xf32, #tpu.memory_space<vmem>>, vector<1x4xf32>
    %11 = vector.broadcast %10 : vector<1x4xf32> to vector<2x4xf32>
    %12 = arith.addf %9, %11 : vector<2x4xf32>
    %c0_11 = arith.constant 0 : index
    %c0_12 = arith.constant 0 : index
    %13 = vector.load %arg8[%c0_11, %c0_12] : memref<2x4xf32, #tpu.memory_space<vmem>>, vector<2x4xf32>
    tpu.vector_store %arg8[%c0_11, %c0_12], %12 {strides = array<i32>} : memref<2x4xf32, #tpu.memory_space<vmem>>, vector<2x4xf32>,
    %c0_13 = arith.constant 0 : index
    %c0_14 = arith.constant 0 : index
    %14 = vector.load %arg6[%c0_13, %c0_14] : memref<64x8xf32, #tpu.memory_space<vmem>>, vector<64x8xf32>
    %cst_15 = arith.constant dense<0.000000e+00> : vector<2x8xf32>
    %15 = tpu.matmul %7, %14, %cst_15 {dimension_numbers = #tpu.dot_dimension_numbers<[1], [0], [0], [1], [0, 0, 1, 1], [], []>} : vector<2x64xf32>, vector<64x8xf32>, vector<2x8xf32> -> vector<2x8xf32>
    %c0_16 = arith.constant 0 : index
    %c0_17 = arith.constant 0 : index
    %16 = vector.load %arg7[%c0_16, %c0_17] : memref<1x8xf32, #tpu.memory_space<vmem>>, vector<1x8xf32>
    %17 = vector.broadcast %16 : vector<1x8xf32> to vector<2x8xf32>
    %18 = arith.addf %15, %17 : vector<2x8xf32>
    %c0_18 = arith.constant 0 : index
    %c0_19 = arith.constant 0 : index
    %19 = vector.load %arg9[%c0_18, %c0_19] : memref<2x8xf32, #tpu.memory_space<vmem>>, vector<2x8xf32>
    tpu.vector_store %arg9[%c0_18, %c0_19], %18 {strides = array<i32>} : memref<2x8xf32, #tpu.memory_space<vmem>>, vector<2x8xf32>,
    return
  }
  func.func @transform_0(%arg0: i32) -> (i32, i32) {
    %c0_i32 = arith.constant 0 : i32
    %c0_i32_0 = arith.constant 0 : i32
    %c0_i32_1 = arith.constant 0 : i32
    return %c0_i32, %c0_i32_0 : i32, i32
  }
  func.func @transform_1(%arg0: i32) -> (i32, i32) {
    %c0_i32 = arith.constant 0 : i32
    %c0_i32_0 = arith.constant 0 : i32
    %c0_i32_1 = arith.constant 0 : i32
    return %c0_i32, %c0_i32_0 : i32, i32
  }
  func.func @transform_2(%arg0: i32) -> (i32, i32) {
    %c0_i32 = arith.constant 0 : i32
    %c0_i32_0 = arith.constant 0 : i32
    %c0_i32_1 = arith.constant 0 : i32
    return %c0_i32, %c0_i32_0 : i32, i32
  }
  func.func @transform_3(%arg0: i32) -> (i32, i32) {
    %c0_i32 = arith.constant 0 : i32
    %c0_i32_0 = arith.constant 0 : i32
    %c0_i32_1 = arith.constant 0 : i32
    return %c0_i32, %c0_i32_0 : i32, i32
  }
  func.func @transform_4(%arg0: i32) -> (i32, i32) {
    %c0_i32 = arith.constant 0 : i32
    %c0_i32_0 = arith.constant 0 : i32
    %c0_i32_1 = arith.constant 0 : i32
    return %c0_i32, %c0_i32_0 : i32, i32
  }
  func.func @transform_5(%arg0: i32) -> (i32, i32) {
    %c0_i32 = arith.constant 0 : i32
    %c0_i32_0 = arith.constant 0 : i32
    %c0_i32_1 = arith.constant 0 : i32
    return %c0_i32, %c0_i32_0 : i32, i32
  }
  func.func @transform_6(%arg0: i32) -> (i32, i32) {
    %c0_i32 = arith.constant 0 : i32
    %c0_i32_0 = arith.constant 0 : i32
    %c0_i32_1 = arith.constant 0 : i32
    return %c0_i32, %c0_i32_0 : i32, i32
  }
  func.func @transform_7(%arg0: i32) -> (i32, i32) {
    %c0_i32 = arith.constant 0 : i32
    %c0_i32_0 = arith.constant 0 : i32
    %c0_i32_1 = arith.constant 0 : i32
    return %c0_i32, %c0_i32_0 : i32, i32
  }
  func.func @transform_8(%arg0: i32) -> (i32, i32) {
    %c0_i32 = arith.constant 0 : i32
    %c0_i32_0 = arith.constant 0 : i32
    %c0_i32_1 = arith.constant 0 : i32
    return %c0_i32, %c0_i32_0 : i32, i32
  }
}

</mosaic_0001>

<llo_original>
// kernel: fwd.5
$region0: #{fwd.5}
  #allocation0 [shape = 'u32[]', space=smem, size = 0x4, offset = 0x4, fixed_abs, tag = 'smem constant byte address 0x4 - core index']
  #allocation1 [shape = 'u32[144,128]{1,0:T(1,128)}', space=vmem, size = 0x12000, scoped, tag = 'internal scratch']
  %s0 = inlined_call_operand.vmem [shape: f32[2,128], index: 0, kind: input, shape index: {}]
  %s1 = inlined_call_operand.vmem [shape: f32[128,64], index: 1, kind: input, shape index: {}]
  %s2 = inlined_call_operand.vmem [shape: f32[1,64], index: 2, kind: input, shape index: {}]
  %s3 = inlined_call_operand.vmem [shape: f32[64,4], index: 3, kind: input, shape index: {}]
  %s4 = inlined_call_operand.vmem [shape: f32[1,4], index: 4, kind: input, shape index: {}]
  %s5 = inlined_call_operand.vmem [shape: f32[64,8], index: 5, kind: input, shape index: {}]
  %s6 = inlined_call_operand.vmem [shape: f32[1,8], index: 6, kind: input, shape index: {}]
  %s7 = inlined_call_operand.hbm [shape: f32[2,4], index: 7, kind: output, shape index: {0}]
  %s8 = inlined_call_operand.hbm [shape: f32[2,8], index: 8, kind: output, shape index: {1}]
  %9 = xla_tuple %s7, %s8
  %s10 = sld [smem:[#allocation0]]
  $region46: #{fwd.5} parent=0
    _
  %s12 = ssub.s32 1, %s10
  %s13 = scalar_select 0, %s12, %s10
  $region1: #{fwd.5} parent=0
    #allocation2 [shape = 'u8[1024]{0}', space=vmem, size = 0x400, scoped, tag = 'output window, operand 0, single buffered']
    #allocation3 [shape = 's32[1]{0}', space=sflag, size = 0x4, scoped, tag = 'scoped memory for fwd.5']
    #allocation4 [shape = 'u8[1024]{0}', space=vmem, size = 0x400, scoped, tag = 'output window, operand 1, single buffered']
    #allocation5 [shape = 's32[1]{0}', space=sflag, size = 0x4, scoped, tag = 'scoped memory for fwd.5']
    %14 = vsyncpa [#allocation3], 0
    %15 = vsyncpa [#allocation5], 0
    // Predicated region
    $region2: #{fwd.5} parent=1 // pred_check
      _
    $region3: #{fwd.5} parent=1 // pred_check_branch
      %17 = sbr.rel (0) target = $region5
    $region4: #{fwd.5} parent=1 // pred_region
      _
    $region5: #{fwd.5} parent=1 // pred_fallthru
      _
    // Predicated region
    $region6: #{fwd.5} parent=1 // pred_check
      _
    $region7: #{fwd.5} parent=1 // pred_check_branch
      %19 = sbr.rel (0) target = $region9
    $region8: #{fwd.5} parent=1 // pred_region
      _
    $region9: #{fwd.5} parent=1 // pred_fallthru
      _
    // Predicated region
    $region10: #{fwd.5} parent=1 // pred_check
      _
    $region11: #{fwd.5} parent=1 // pred_check_branch
      %21 = sbr.rel (0) target = $region13
    $region12: #{fwd.5} parent=1 // pred_region
      _
    $region13: #{fwd.5} parent=1 // pred_fallthru
      _
    // Predicated region
    $region14: #{fwd.5} parent=1 // pred_check
      _
    $region15: #{fwd.5} parent=1 // pred_check_branch
      %23 = sbr.rel (0) target = $region17
    $region16: #{fwd.5} parent=1 // pred_region
      _
    $region17: #{fwd.5} parent=1 // pred_fallthru
      _
    // Predicated region
    $region18: #{fwd.5} parent=1 // pred_check
      _
    $region19: #{fwd.5} parent=1 // pred_check_branch
      %25 = sbr.rel (0) target = $region21
    $region20: #{fwd.5} parent=1 // pred_region
      _
    $region21: #{fwd.5} parent=1 // pred_fallthru
      _
    // Predicated region
    $region22: #{fwd.5} parent=1 // pred_check
      _
    $region23: #{fwd.5} parent=1 // pred_check_branch
      %27 = sbr.rel (0) target = $region25
    $region24: #{fwd.5} parent=1 // pred_region
      _
    $region25: #{fwd.5} parent=1 // pred_fallthru
      _
    // Predicated region
    $region26: #{fwd.5} parent=1 // pred_check
      _
    $region27: #{fwd.5} parent=1 // pred_check_branch
      %29 = sbr.rel (0) target = $region29
    $region28: #{fwd.5} parent=1 // pred_region
      _
    $region29: #{fwd.5} parent=1 // pred_fallthru
      _
    %v30 = vld [vmem:[%s0] sm:$0x3]
    %v31 = vld [vmem:[%s1] sm:$0xff]
    %v32 = vld [vmem:[%s1 + $0x8] sm:$0xff]
    %v33 = vld [vmem:[%s1 + $0x10] sm:$0xff]
    %v34 = vld [vmem:[%s1 + $0x18] sm:$0xff]
    %v35 = vld [vmem:[%s1 + $0x20] sm:$0xff]
    %v36 = vld [vmem:[%s1 + $0x28] sm:$0xff]
    %v37 = vld [vmem:[%s1 + $0x30] sm:$0xff]
    %v38 = vld [vmem:[%s1 + $0x38] sm:$0xff]
    %v39 = vld [vmem:[%s1 + $0x40] sm:$0xff]
    %v40 = vld [vmem:[%s1 + $0x48] sm:$0xff]
    %v41 = vld [vmem:[%s1 + $0x50] sm:$0xff]
    %v42 = vld [vmem:[%s1 + $0x58] sm:$0xff]
    %v43 = vld [vmem:[%s1 + $0x60] sm:$0xff]
    %v44 = vld [vmem:[%s1 + $0x68] sm:$0xff]
    %v45 = vld [vmem:[%s1 + $0x70] sm:$0xff]
    %v46 = vld [vmem:[%s1 + $0x78] sm:$0xff]
    %v47 = vld [vmem:[%s2] sm:$0x1]
    %v49 = vlaneseq
    %v50 = vshrl.u32 %v49, 7
    %v51 = vsub.s32 0, %v50
    %v52 = vrot.slane %v47, %v51
    %54 = vmatprep.subr.mxu0 0.0
    %55 = vmatpush1.msra.mxu0 %v46
    %56 = vmatprep.subr.mxu0 0.0
    %57 = vmatpush1.msra.mxu0 %v45
    %58 = vmatprep.subr.mxu0 0.0
    %59 = vmatpush1.msra.mxu0 %v44
    %60 = vmatprep.subr.mxu0 0.0
    %61 = vmatpush1.msra.mxu0 %v43
    %62 = vmatprep.subr.mxu0 0.0
    %63 = vmatpush1.msra.mxu0 %v42
    %64 = vmatprep.subr.mxu0 0.0
    %65 = vmatpush1.msra.mxu0 %v41
    %66 = vmatprep.subr.mxu0 0.0
    %67 = vmatpush1.msra.mxu0 %v40
    %68 = vmatprep.subr.mxu0 0.0
    %69 = vmatpush1.msra.mxu0 %v39
    %70 = vmatprep.subr.mxu0 0.0
    %71 = vmatpush1.msra.mxu0 %v38
    %72 = vmatprep.subr.mxu0 0.0
    %73 = vmatpush1.msra.mxu0 %v37
    %74 = vmatprep.subr.mxu0 0.0
    %75 = vmatpush1.msra.mxu0 %v36
    %76 = vmatprep.subr.mxu0 0.0
    %77 = vmatpush1.msra.mxu0 %v35
    %78 = vmatprep.subr.mxu0 0.0
    %79 = vmatpush1.msra.mxu0 %v34
    %80 = vmatprep.subr.mxu0 0.0
    %81 = vmatpush1.msra.mxu0 %v33
    %82 = vmatprep.subr.mxu0 0.0
    %83 = vmatpush1.msra.mxu0 %v32
    %84 = vmatprep.subr.mxu0 0.0
    %85 = vmatpush1.msra.mxu0 %v31
    %86 = vmatprep.subr.mxu0 0.0
    %87 = vmatpush2.msra.mxu0 0.0
    %88 = vmatprep.subr.mxu0 0.0
    %89 = vmatpush2.msra.mxu0 0.0
    %90 = vmatprep.subr.mxu0 0.0
    %91 = vmatpush2.msra.mxu0 0.0
    %92 = vmatprep.subr.mxu0 0.0
    %93 = vmatpush2.msra.mxu0 0.0
    %94 = vmatprep.subr.mxu0 0.0
    %95 = vmatpush2.msra.mxu0 0.0
    %96 = vmatprep.subr.mxu0 0.0
    %97 = vmatpush2.msra.mxu0 0.0
    %98 = vmatprep.subr.mxu0 0.0
    %99 = vmatpush2.msra.mxu0 0.0
    %100 = vmatprep.subr.mxu0 0.0
    %101 = vmatpush2.msra.mxu0 0.0
    %102 = vmatprep.subr.mxu0 0.0
    %103 = vmatpush2.msra.mxu0 0.0
    %104 = vmatprep.subr.mxu0 0.0
    %105 = vmatpush2.msra.mxu0 0.0
    %106 = vmatprep.subr.mxu0 0.0
    %107 = vmatpush2.msra.mxu0 0.0
    %108 = vmatprep.subr.mxu0 0.0
    %109 = vmatpush2.msra.mxu0 0.0
    %110 = vmatprep.subr.mxu0 0.0
    %111 = vmatpush2.msra.mxu0 0.0
    %112 = vmatprep.subr.mxu0 0.0
    %113 = vmatpush2.msra.mxu0 0.0
    %114 = vmatprep.subr.mxu0 0.0
    %115 = vmatpush2.msra.mxu0 0.0
    %116 = vmatprep.subr.mxu0 0.0
    %117 = vmatpush2.msra.mxu0 0.0
    %118 = vmatprep.mubr.f32.mxu0 0.0
    %119 = vmatmul.mubr.f32.gmra.mxu0 %v30
    %v120 = vpop.f32.mrf.mxu0
    %v121 = vadd.f32 %v52, %v120
    %v122 = vpop.f32.mrf.mxu0
    %123 = vdwg.mxu0
    %v124 = vmax.f32 %v121, 0.0
    %v125 = vld [vmem:[%s3] sm:$0xff]
    %v126 = vld [vmem:[%s3 + $0x8] sm:$0xff]
    %v127 = vld [vmem:[%s3 + $0x10] sm:$0xff]
    %v128 = vld [vmem:[%s3 + $0x18] sm:$0xff]
    %v129 = vld [vmem:[%s3 + $0x20] sm:$0xff]
    %v130 = vld [vmem:[%s3 + $0x28] sm:$0xff]
    %v131 = vld [vmem:[%s3 + $0x30] sm:$0xff]
    %v132 = vld [vmem:[%s3 + $0x38] sm:$0xff]
    %v133 = vld [vmem:[%s4] sm:$0x1]
    %v135 = vlaneseq
    %v136 = vshrl.u32 %v135, 7
    %v137 = vsub.s32 0, %v136
    %v138 = vrot.slane %v133, %v137
    %vm140 = vcmask 523264
    %v142 = vsel %vm140, %v124, 0
    %144 = vmatprep.subr.mxu0 0.0
    %145 = vmatpush1.msra.mxu0 0.0
    %146 = vmatprep.subr.mxu0 0.0
    %147 = vmatpush1.msra.mxu0 0.0
    %148 = vmatprep.subr.mxu0 0.0
    %149 = vmatpush1.msra.mxu0 0.0
    %150 = vmatprep.subr.mxu0 0.0
    %151 = vmatpush1.msra.mxu0 0.0
    %152 = vmatprep.subr.mxu0 0.0
    %153 = vmatpush1.msra.mxu0 0.0
    %154 = vmatprep.subr.mxu0 0.0
    %155 = vmatpush1.msra.mxu0 0.0
    %156 = vmatprep.subr.mxu0 0.0
    %157 = vmatpush1.msra.mxu0 0.0
    %158 = vmatprep.subr.mxu0 0.0
    %159 = vmatpush1.msra.mxu0 0.0
    %160 = vmatprep.subr.mxu0 0.0
    %161 = vmatpush1.msra.mxu0 %v132
    %162 = vmatprep.subr.mxu0 0.0
    %163 = vmatpush1.msra.mxu0 %v131
    %164 = vmatprep.subr.mxu0 0.0
    %165 = vmatpush1.msra.mxu0 %v130
    %166 = vmatprep.subr.mxu0 0.0
    %167 = vmatpush1.msra.mxu0 %v129
    %168 = vmatprep.subr.mxu0 0.0
    %169 = vmatpush1.msra.mxu0 %v128
    %170 = vmatprep.subr.mxu0 0.0
    %171 = vmatpush1.msra.mxu0 %v127
    %172 = vmatprep.subr.mxu0 0.0
    %173 = vmatpush1.msra.mxu0 %v126
    %174 = vmatprep.subr.mxu0 0.0
    %175 = vmatpush1.msra.mxu0 %v125
    %176 = vmatprep.subr.mxu0 0.0
    %177 = vmatpush2.msra.mxu0 0.0
    %178 = vmatprep.subr.mxu0 0.0
    %179 = vmatpush2.msra.mxu0 0.0
    %180 = vmatprep.subr.mxu0 0.0
    %181 = vmatpush2.msra.mxu0 0.0
    %182 = vmatprep.subr.mxu0 0.0
    %183 = vmatpush2.msra.mxu0 0.0
    %184 = vmatprep.subr.mxu0 0.0
    %185 = vmatpush2.msra.mxu0 0.0
    %186 = vmatprep.subr.mxu0 0.0
    %187 = vmatpush2.msra.mxu0 0.0
    %188 = vmatprep.subr.mxu0 0.0
    %189 = vmatpush2.msra.mxu0 0.0
    %190 = vmatprep.subr.mxu0 0.0
    %191 = vmatpush2.msra.mxu0 0.0
    %192 = vmatprep.subr.mxu0 0.0
    %193 = vmatpush2.msra.mxu0 0.0
    %194 = vmatprep.subr.mxu0 0.0
    %195 = vmatpush2.msra.mxu0 0.0
    %196 = vmatprep.subr.mxu0 0.0
    %197 = vmatpush2.msra.mxu0 0.0
    %198 = vmatprep.subr.mxu0 0.0
    %199 = vmatpush2.msra.mxu0 0.0
    %200 = vmatprep.subr.mxu0 0.0
    %201 = vmatpush2.msra.mxu0 0.0
    %202 = vmatprep.subr.mxu0 0.0
    %203 = vmatpush2.msra.mxu0 0.0
    %204 = vmatprep.subr.mxu0 0.0
    %205 = vmatpush2.msra.mxu0 0.0
    %206 = vmatprep.subr.mxu0 0.0
    %207 = vmatpush2.msra.mxu0 0.0
    %208 = vmatprep.mubr.f32.mxu0 0.0
    %209 = vmatmul.mubr.f32.gmra.mxu0 %v142
    %v210 = vpop.f32.mrf.mxu0
    %v211 = vadd.f32 %v138, %v210
    %v212 = vpop.f32.mrf.mxu0
    %213 = vdwg.mxu0
    %vm214 = vcmask 25600
    %215 = vst.msk [vmem:[#allocation2] sm:$0x3] %vm214, %v211
    %v216 = vld [vmem:[%s5] sm:$0xff]
    %v217 = vld [vmem:[%s5 + $0x8] sm:$0xff]
    %v218 = vld [vmem:[%s5 + $0x10] sm:$0xff]
    %v219 = vld [vmem:[%s5 + $0x18] sm:$0xff]
    %v220 = vld [vmem:[%s5 + $0x20] sm:$0xff]
    %v221 = vld [vmem:[%s5 + $0x28] sm:$0xff]
    %v222 = vld [vmem:[%s5 + $0x30] sm:$0xff]
    %v223 = vld [vmem:[%s5 + $0x38] sm:$0xff]
    %v224 = vld [vmem:[%s6] sm:$0x1]
    %v226 = vlaneseq
    %v227 = vshrl.u32 %v226, 7
    %v228 = vsub.s32 0, %v227
    %v229 = vrot.slane %v224, %v228
    %231 = vmatprep.subr.mxu0 0.0
    %232 = vmatpush1.msra.mxu0 0.0
    %233 = vmatprep.subr.mxu0 0.0
    %234 = vmatpush1.msra.mxu0 0.0
    %235 = vmatprep.subr.mxu0 0.0
    %236 = vmatpush1.msra.mxu0 0.0
    %237 = vmatprep.subr.mxu0 0.0
    %238 = vmatpush1.msra.mxu0 0.0
    %239 = vmatprep.subr.mxu0 0.0
    %240 = vmatpush1.msra.mxu0 0.0
    %241 = vmatprep.subr.mxu0 0.0
    %242 = vmatpush1.msra.mxu0 0.0
    %243 = vmatprep.subr.mxu0 0.0
    %244 = vmatpush1.msra.mxu0 0.0
    %245 = vmatprep.subr.mxu0 0.0
    %246 = vmatpush1.msra.mxu0 0.0
    %247 = vmatprep.subr.mxu0 0.0
    %248 = vmatpush1.msra.mxu0 %v223
    %249 = vmatprep.subr.mxu0 0.0
    %250 = vmatpush1.msra.mxu0 %v222
    %251 = vmatprep.subr.mxu0 0.0
    %252 = vmatpush1.msra.mxu0 %v221
    %253 = vmatprep.subr.mxu0 0.0
    %254 = vmatpush1.msra.mxu0 %v220
    %255 = vmatprep.subr.mxu0 0.0
    %256 = vmatpush1.msra.mxu0 %v219
    %257 = vmatprep.subr.mxu0 0.0
    %258 = vmatpush1.msra.mxu0 %v218
    %259 = vmatprep.subr.mxu0 0.0
    %260 = vmatpush1.msra.mxu0 %v217
    %261 = vmatprep.subr.mxu0 0.0
    %262 = vmatpush1.msra.mxu0 %v216
    %263 = vmatprep.subr.mxu0 0.0
    %264 = vmatpush2.msra.mxu0 0.0
    %265 = vmatprep.subr.mxu0 0.0
    %266 = vmatpush2.msra.mxu0 0.0
    %267 = vmatprep.subr.mxu0 0.0
    %268 = vmatpush2.msra.mxu0 0.0
    %269 = vmatprep.subr.mxu0 0.0
    %270 = vmatpush2.msra.mxu0 0.0
    %271 = vmatprep.subr.mxu0 0.0
    %272 = vmatpush2.msra.mxu0 0.0
    %273 = vmatprep.subr.mxu0 0.0
    %274 = vmatpush2.msra.mxu0 0.0
    %275 = vmatprep.subr.mxu0 0.0
    %276 = vmatpush2.msra.mxu0 0.0
    %277 = vmatprep.subr.mxu0 0.0
    %278 = vmatpush2.msra.mxu0 0.0
    %279 = vmatprep.subr.mxu0 0.0
    %280 = vmatpush2.msra.mxu0 0.0
    %281 = vmatprep.subr.mxu0 0.0
    %282 = vmatpush2.msra.mxu0 0.0
    %283 = vmatprep.subr.mxu0 0.0
    %284 = vmatpush2.msra.mxu0 0.0
    %285 = vmatprep.subr.mxu0 0.0
    %286 = vmatpush2.msra.mxu0 0.0
    %287 = vmatprep.subr.mxu0 0.0
    %288 = vmatpush2.msra.mxu0 0.0
    %289 = vmatprep.subr.mxu0 0.0
    %290 = vmatpush2.msra.mxu0 0.0
    %291 = vmatprep.subr.mxu0 0.0
    %292 = vmatpush2.msra.mxu0 0.0
    %293 = vmatprep.subr.mxu0 0.0
    %294 = vmatpush2.msra.mxu0 0.0
    %295 = vmatprep.mubr.f32.mxu0 0.0
    %296 = vmatmul.mubr.f32.gmra.mxu0 %v142
    %v297 = vpop.f32.mrf.mxu0
    %v298 = vadd.f32 %v229, %v297
    %v299 = vpop.f32.mrf.mxu0
    %300 = vdwg.mxu0
    %vm301 = vcmask 58368
    %302 = vst.msk [vmem:[#allocation4] sm:$0x3] %vm301, %v298
    // Predicated region
    $region30: #{fwd.5} parent=1 // pred_check
      _
    $region31: #{fwd.5} parent=1 // pred_check_branch
      %304 = sbr.rel (0) target = $region33
    $region32: #{fwd.5} parent=1 // pred_region
      %s306 = ssub.s32 32, 32
      %307 = vsyncadd [#allocation3], %s306
      %s309 = sshll.u32 [#allocation2], 4
      %s310 = int_to_ptr.vmem [resolvable:$true] %s309
      %312 = dma.vmem_to_hbm [thread:$0]  %s310, 32, %s7, [#allocation3]
    $region33: #{fwd.5} parent=1 // pred_fallthru
      _
    // Predicated region
    $region34: #{fwd.5} parent=1 // pred_check
      _
    $region35: #{fwd.5} parent=1 // pred_check_branch
      %314 = sbr.rel (0) target = $region37
    $region36: #{fwd.5} parent=1 // pred_region
      %s316 = ssub.s32 32, 32
      %317 = vsyncadd [#allocation5], %s316
      %s319 = sshll.u32 [#allocation4], 4
      %s320 = int_to_ptr.vmem [resolvable:$true] %s319
      %322 = dma.vmem_to_hbm [thread:$0]  %s320, 32, %s8, [#allocation5]
    $region37: #{fwd.5} parent=1 // pred_fallthru
      _
    // Predicated region
    $region38: #{fwd.5} parent=1 // pred_check
      _
    $region39: #{fwd.5} parent=1 // pred_check_branch
      %324 = sbr.rel (0) target = $region41
    $region40: #{fwd.5} parent=1 // pred_region
      %325 = dma.done [#allocation3], 32
    $region41: #{fwd.5} parent=1 // pred_fallthru
      _
    // Predicated region
    $region42: #{fwd.5} parent=1 // pred_check
      _
    $region43: #{fwd.5} parent=1 // pred_check_branch
      %327 = sbr.rel (0) target = $region45
    $region44: #{fwd.5} parent=1 // pred_region
      %328 = dma.done [#allocation5], 32
    $region45: #{fwd.5} parent=1 // pred_fallthru
      _
    %329 = vsyncpa [#allocation3], 1
    %330 = vsyncpa [#allocation5], 1

// kernel: fwd.4
$region0: #{fwd.4}
  #allocation0 [shape = 'u32[]', space=smem, size = 0x4, offset = 0x4, fixed_abs, tag = 'smem constant byte address 0x4 - core index']
  #allocation1 [shape = 'u32[144,128]{1,0:T(1,128)}', space=vmem, size = 0x12000, scoped, tag = 'internal scratch']
  %s0 = inlined_call_operand.vmem [shape: f32[8,32], index: 0, kind: input, shape index: {}]
  %s1 = inlined_call_operand.vmem [shape: s32[32,2], index: 1, kind: input, shape index: {}]
  %s2 = inlined_call_operand.vmem [shape: f32[32,4], index: 2, kind: input, shape index: {}]
  %s3 = inlined_call_operand.vmem [shape: f32[32,32], index: 3, kind: input, shape index: {}]
  %s4 = inlined_call_operand.vmem [shape: f32[1,32], index: 4, kind: input, shape index: {}]
  %s5 = inlined_call_operand.vmem [shape: f32[2,16], index: 5, kind: input, shape index: {}]
  %s6 = inlined_call_operand.vmem [shape: f32[2,16], index: 6, kind: input, shape index: {}]
  %s7 = inlined_call_operand.vmem [shape: f32[4,2], index: 7, kind: input, shape index: {}]
  %s8 = inlined_call_operand.vmem [shape: f32[1,2], index: 8, kind: input, shape index: {}]
  %s9 = inlined_call_operand.vmem [shape: f32[8,32], index: 9, kind: output, shape index: {0}]
  %s10 = inlined_call_operand.vmem [shape: f32[32,1], index: 10, kind: output, shape index: {1}]
  %11 = xla_tuple %s9, %s10
  %s12 = sld [smem:[#allocation0]]
  $region54: #{fwd.4} parent=0
    _
  %s14 = ssub.s32 1, %s12
  %s15 = scalar_select 0, %s14, %s12
  // Predicated region
  $region2: #{fwd.4} parent=0 // pred_check
    _
  $region3: #{fwd.4} parent=0 // pred_check_branch
    %17 = sbr.rel (0) target = $region5
  $region4: #{fwd.4} parent=0 // pred_region
    _
  $region5: #{fwd.4} parent=0 // pred_fallthru
    _
  // Predicated region
  $region6: #{fwd.4} parent=0 // pred_check
    _
  $region7: #{fwd.4} parent=0 // pred_check_branch
    %19 = sbr.rel (0) target = $region9
  $region8: #{fwd.4} parent=0 // pred_region
    _
  $region9: #{fwd.4} parent=0 // pred_fallthru
    _
  // Predicated region
  $region10: #{fwd.4} parent=0 // pred_check
    _
  $region11: #{fwd.4} parent=0 // pred_check_branch
    %21 = sbr.rel (0) target = $region13
  $region12: #{fwd.4} parent=0 // pred_region
    _
  $region13: #{fwd.4} parent=0 // pred_fallthru
    _
  // Predicated region
  $region14: #{fwd.4} parent=0 // pred_check
    _
  $region15: #{fwd.4} parent=0 // pred_check_branch
    %23 = sbr.rel (0) target = $region17
  $region16: #{fwd.4} parent=0 // pred_region
    _
  $region17: #{fwd.4} parent=0 // pred_fallthru
    _
  // Predicated region
  $region18: #{fwd.4} parent=0 // pred_check
    _
  $region19: #{fwd.4} parent=0 // pred_check_branch
    %25 = sbr.rel (0) target = $region21
  $region20: #{fwd.4} parent=0 // pred_region
    _
  $region21: #{fwd.4} parent=0 // pred_fallthru
    _
  // Predicated region
  $region22: #{fwd.4} parent=0 // pred_check
    _
  $region23: #{fwd.4} parent=0 // pred_check_branch
    %27 = sbr.rel (0) target = $region25
  $region24: #{fwd.4} parent=0 // pred_region
    _
  $region25: #{fwd.4} parent=0 // pred_fallthru
    _
  // Predicated region
  $region26: #{fwd.4} parent=0 // pred_check
    _
  $region27: #{fwd.4} parent=0 // pred_check_branch
    %29 = sbr.rel (0) target = $region29
  $region28: #{fwd.4} parent=0 // pred_region
    _
  $region29: #{fwd.4} parent=0 // pred_fallthru
    _
  // Predicated region
  $region30: #{fwd.4} parent=0 // pred_check
    _
  $region31: #{fwd.4} parent=0 // pred_check_branch
    %31 = sbr.rel (0) target = $region33
  $region32: #{fwd.4} parent=0 // pred_region
    _
  $region33: #{fwd.4} parent=0 // pred_fallthru
    _
  // Predicated region
  $region34: #{fwd.4} parent=0 // pred_check
    _
  $region35: #{fwd.4} parent=0 // pred_check_branch
    %33 = sbr.rel (0) target = $region37
  $region36: #{fwd.4} parent=0 // pred_region
    _
  $region37: #{fwd.4} parent=0 // pred_fallthru
    _
  %v34 = vld [vmem:[%s0] sm:$0xff]
  %v35 = vld [vmem:[%s3] sm:$0xff]
  %v36 = vld [vmem:[%s3 + $0x8] sm:$0xff]
  %v37 = vld [vmem:[%s3 + $0x10] sm:$0xff]
  %v38 = vld [vmem:[%s3 + $0x18] sm:$0xff]
  %v39 = vld [vmem:[%s4] sm:$0x1]
  %v41 = vlaneseq
  %v42 = vshrl.u32 %v41, 7
  %v43 = vsub.s32 0, %v42
  %v44 = vrot.slane %v39, %v43
  %vm46 = vcmask 261120
  %v48 = vsel %vm46, %v34, 0
  %50 = vmatprep.subr.mxu0 0.0
  %51 = vmatpush1.msra.mxu0 0.0
  %52 = vmatprep.subr.mxu0 0.0
  %53 = vmatpush1.msra.mxu0 0.0
  %54 = vmatprep.subr.mxu0 0.0
  %55 = vmatpush1.msra.mxu0 0.0
  %56 = vmatprep.subr.mxu0 0.0
  %57 = vmatpush1.msra.mxu0 0.0
  %58 = vmatprep.subr.mxu0 0.0
  %59 = vmatpush1.msra.mxu0 0.0
  %60 = vmatprep.subr.mxu0 0.0
  %61 = vmatpush1.msra.mxu0 0.0
  %62 = vmatprep.subr.mxu0 0.0
  %63 = vmatpush1.msra.mxu0 0.0
  %64 = vmatprep.subr.mxu0 0.0
  %65 = vmatpush1.msra.mxu0 0.0
  %66 = vmatprep.subr.mxu0 0.0
  %67 = vmatpush1.msra.mxu0 0.0
  %68 = vmatprep.subr.mxu0 0.0
  %69 = vmatpush1.msra.mxu0 0.0
  %70 = vmatprep.subr.mxu0 0.0
  %71 = vmatpush1.msra.mxu0 0.0
  %72 = vmatprep.subr.mxu0 0.0
  %73 = vmatpush1.msra.mxu0 0.0
  %74 = vmatprep.subr.mxu0 0.0
  %75 = vmatpush1.msra.mxu0 %v38
  %76 = vmatprep.subr.mxu0 0.0
  %77 = vmatpush1.msra.mxu0 %v37
  %78 = vmatprep.subr.mxu0 0.0
  %79 = vmatpush1.msra.mxu0 %v36
  %80 = vmatprep.subr.mxu0 0.0
  %81 = vmatpush1.msra.mxu0 %v35
  %82 = vmatprep.subr.mxu0 0.0
  %83 = vmatpush2.msra.mxu0 0.0
  %84 = vmatprep.subr.mxu0 0.0
  %85 = vmatpush2.msra.mxu0 0.0
  %86 = vmatprep.subr.mxu0 0.0
  %87 = vmatpush2.msra.mxu0 0.0
  %88 = vmatprep.subr.mxu0 0.0
  %89 = vmatpush2.msra.mxu0 0.0
  %90 = vmatprep.subr.mxu0 0.0
  %91 = vmatpush2.msra.mxu0 0.0
  %92 = vmatprep.subr.mxu0 0.0
  %93 = vmatpush2.msra.mxu0 0.0
  %94 = vmatprep.subr.mxu0 0.0
  %95 = vmatpush2.msra.mxu0 0.0
  %96 = vmatprep.subr.mxu0 0.0
  %97 = vmatpush2.msra.mxu0 0.0
  %98 = vmatprep.subr.mxu0 0.0
  %99 = vmatpush2.msra.mxu0 0.0
  %100 = vmatprep.subr.mxu0 0.0
  %101 = vmatpush2.msra.mxu0 0.0
  %102 = vmatprep.subr.mxu0 0.0
  %103 = vmatpush2.msra.mxu0 0.0
  %104 = vmatprep.subr.mxu0 0.0
  %105 = vmatpush2.msra.mxu0 0.0
  %106 = vmatprep.subr.mxu0 0.0
  %107 = vmatpush2.msra.mxu0 0.0
  %108 = vmatprep.subr.mxu0 0.0
  %109 = vmatpush2.msra.mxu0 0.0
  %110 = vmatprep.subr.mxu0 0.0
  %111 = vmatpush2.msra.mxu0 0.0
  %112 = vmatprep.subr.mxu0 0.0
  %113 = vmatpush2.msra.mxu0 0.0
  %114 = vmatprep.mubr.f32.mxu0 0.0
  %115 = vmatmul.mubr.f32.gmra.mxu0 %v48
  %v116 = vpop.f32.mrf.mxu0
  %v117 = vadd.f32 %v44, %v116
  %v118 = vpop.f32.mrf.mxu0
  %119 = vdwg.mxu0
  %v120 = vld [vmem:[%s2] sm:$0xff]
  %v121 = vld [vmem:[%s2 + $0x8] sm:$0xff]
  %v122 = vld [vmem:[%s2 + $0x10] sm:$0xff]
  %v123 = vld [vmem:[%s2 + $0x18] sm:$0xff]
  %v124 = vld [vmem:[%s7] sm:$0xf]
  %v125 = vld [vmem:[%s8] sm:$0x1]
  %v127 = vlaneseq
  %v128 = vshrl.u32 %v127, 7
  %v129 = vsub.s32 0, %v128
  %v130 = vrot.slane %v125, %v129
  %vm132 = vcmask 31744
  %v134 = vsel %vm132, %v120, 0
  %v137 = vsel %vm132, %v121, 0
  %v140 = vsel %vm132, %v122, 0
  %v143 = vsel %vm132, %v123, 0
  %vm145 = vcmask 1043456
  %v147 = vsel %vm145, %v124, 0
  %149 = vmatprep.subr.mxu0 0.0
  %150 = vmatpush1.msra.mxu0 0.0
  %151 = vmatprep.subr.mxu0 0.0
  %152 = vmatpush1.msra.mxu0 0.0
  %153 = vmatprep.subr.mxu0 0.0
  %154 = vmatpush1.msra.mxu0 0.0
  %155 = vmatprep.subr.mxu0 0.0
  %156 = vmatpush1.msra.mxu0 0.0
  %157 = vmatprep.subr.mxu0 0.0
  %158 = vmatpush1.msra.mxu0 0.0
  %159 = vmatprep.subr.mxu0 0.0
  %160 = vmatpush1.msra.mxu0 0.0
  %161 = vmatprep.subr.mxu0 0.0
  %162 = vmatpush1.msra.mxu0 0.0
  %163 = vmatprep.subr.mxu0 0.0
  %164 = vmatpush1.msra.mxu0 0.0
  %165 = vmatprep.subr.mxu0 0.0
  %166 = vmatpush1.msra.mxu0 0.0
  %167 = vmatprep.subr.mxu0 0.0
  %168 = vmatpush1.msra.mxu0 0.0
  %169 = vmatprep.subr.mxu0 0.0
  %170 = vmatpush1.msra.mxu0 0.0
  %171 = vmatprep.subr.mxu0 0.0
  %172 = vmatpush1.msra.mxu0 0.0
  %173 = vmatprep.subr.mxu0 0.0
  %174 = vmatpush1.msra.mxu0 0.0
  %175 = vmatprep.subr.mxu0 0.0
  %176 = vmatpush1.msra.mxu0 0.0
  %177 = vmatprep.subr.mxu0 0.0
  %178 = vmatpush1.msra.mxu0 0.0
  %179 = vmatprep.subr.mxu0 0.0
  %180 = vmatpush1.msra.mxu0 %v147
  %181 = vmatprep.subr.mxu0 0.0
  %182 = vmatpush2.msra.mxu0 0.0
  %183 = vmatprep.subr.mxu0 0.0
  %184 = vmatpush2.msra.mxu0 0.0
  %185 = vmatprep.subr.mxu0 0.0
  %186 = vmatpush2.msra.mxu0 0.0
  %187 = vmatprep.subr.mxu0 0.0
  %188 = vmatpush2.msra.mxu0 0.0
  %189 = vmatprep.subr.mxu0 0.0
  %190 = vmatpush2.msra.mxu0 0.0
  %191 = vmatprep.subr.mxu0 0.0
  %192 = vmatpush2.msra.mxu0 0.0
  %193 = vmatprep.subr.mxu0 0.0
  %194 = vmatpush2.msra.mxu0 0.0
  %195 = vmatprep.subr.mxu0 0.0
  %196 = vmatpush2.msra.mxu0 0.0
  %197 = vmatprep.subr.mxu0 0.0
  %198 = vmatpush2.msra.mxu0 0.0
  %199 = vmatprep.subr.mxu0 0.0
  %200 = vmatpush2.msra.mxu0 0.0
  %201 = vmatprep.subr.mxu0 0.0
  %202 = vmatpush2.msra.mxu0 0.0
  %203 = vmatprep.subr.mxu0 0.0
  %204 = vmatpush2.msra.mxu0 0.0
  %205 = vmatprep.subr.mxu0 0.0
  %206 = vmatpush2.msra.mxu0 0.0
  %207 = vmatprep.subr.mxu0 0.0
  %208 = vmatpush2.msra.mxu0 0.0
  %209 = vmatprep.subr.mxu0 0.0
  %210 = vmatpush2.msra.mxu0 0.0
  %211 = vmatprep.subr.mxu0 0.0
  %212 = vmatpush2.msra.mxu0 0.0
  %213 = vmatprep.mubr.f32.mxu0 0.0
  %214 = vmatmul.mubr.f32.gmra.mxu0 %v134
  %v215 = vpop.f32.mrf.mxu0
  %v216 = vadd.f32 %v130, %v215
  %v217 = vpop.f32.mrf.mxu0
  %218 = vmatprep.mubr.f32.mxu0 0.0
  %219 = vmatmul.mubr.f32.gmra.mxu0 %v137
  %v220 = vpop.f32.mrf.mxu0
  %v221 = vadd.f32 %v130, %v220
  %v222 = vpop.f32.mrf.mxu0
  %223 = vmatprep.mubr.f32.mxu0 0.0
  %224 = vmatmul.mubr.f32.gmra.mxu0 %v140
  %v225 = vpop.f32.mrf.mxu0
  %v226 = vadd.f32 %v130, %v225
  %v227 = vpop.f32.mrf.mxu0
  %228 = vmatprep.mubr.f32.mxu0 0.0
  %229 = vmatmul.mubr.f32.gmra.mxu0 %v143
  %v230 = vpop.f32.mrf.mxu0
  %v231 = vadd.f32 %v130, %v230
  %v232 = vpop.f32.mrf.mxu0
  %233 = vdwg.mxu0
  %v234 = vld [vmem:[%s1] sm:$0xff]
  %v235 = vld [vmem:[%s1 + $0x8] sm:$0xff]
  %v236 = vld [vmem:[%s1 + $0x10] sm:$0xff]
  %v237 = vld [vmem:[%s1 + $0x18] sm:$0xff]
  %v238 = vlaneseq
  %v239 = vand.u32 %v238, 127
  %240 = vset.pattern.permute.xlu0 0
  %241 = vperm.xlu0 %240, %v234
  %v242 = vpop.permute.xlu0 %241
  %243 = vset.pattern.permute.xlu0 0
  %244 = vperm.xlu0 %243, %v235
  %v245 = vpop.permute.xlu0 %244
  %246 = vset.pattern.permute.xlu0 0
  %247 = vperm.xlu0 %246, %v236
  %v248 = vpop.permute.xlu0 %247
  %249 = vset.pattern.permute.xlu0 0
  %250 = vperm.xlu0 %249, %v237
  %v251 = vpop.permute.xlu0 %250
  %vm252 = vcmp.eq.s32.totalorder %v239, %v242
  %vm253 = vcmp.eq.s32.totalorder %v239, %v245
  %vm254 = vcmp.eq.s32.totalorder %v239, %v248
  %vm255 = vcmp.eq.s32.totalorder %v239, %v251
  %v256 = vsel %vm252, 1, 0
  %v257 = vsel %vm253, 1, 0
  %v258 = vsel %vm254, 1, 0
  %v259 = vsel %vm255, 1, 0
  %v260 = vcvt.s32.f32 %v256
  %v261 = vcvt.s32.f32 %v257
  %v262 = vcvt.s32.f32 %v258
  %v263 = vcvt.s32.f32 %v259
  %264 = vset.pattern.permute.xlu0 1
  %265 = vperm.xlu0 %264, %v234
  %v266 = vpop.permute.xlu0 %265
  %267 = vset.pattern.permute.xlu0 1
  %268 = vperm.xlu0 %267, %v235
  %v269 = vpop.permute.xlu0 %268
  %270 = vset.pattern.permute.xlu0 1
  %271 = vperm.xlu0 %270, %v236
  %v272 = vpop.permute.xlu0 %271
  %273 = vset.pattern.permute.xlu0 1
  %274 = vperm.xlu0 %273, %v237
  %v275 = vpop.permute.xlu0 %274
  %vm276 = vcmp.eq.s32.totalorder %v239, %v266
  %vm277 = vcmp.eq.s32.totalorder %v239, %v269
  %vm278 = vcmp.eq.s32.totalorder %v239, %v272
  %vm279 = vcmp.eq.s32.totalorder %v239, %v275
  %v280 = vsel %vm276, 1, 0
  %v281 = vsel %vm277, 1, 0
  %v282 = vsel %vm278, 1, 0
  %v283 = vsel %vm279, 1, 0
  %v284 = vcvt.s32.f32 %v280
  %v285 = vcvt.s32.f32 %v281
  %v286 = vcvt.s32.f32 %v282
  %v287 = vcvt.s32.f32 %v283
  %288 = vxpose.xlu0.b32.start [1/16] %v284, 128
  %289 = vxpose.xlu0.b32.cont [2/16] %v285, 128
  %290 = vxpose.xlu0.b32.cont [3/16] %v286, 128
  %291 = vxpose.xlu0.b32.cont [4/16] %v287, 128
  %292 = vxpose.xlu0.b32.cont [5/16] 0.0, 128
  %293 = vxpose.xlu0.b32.cont [6/16] 0.0, 128
  %294 = vxpose.xlu0.b32.cont [7/16] 0.0, 128
  %295 = vxpose.xlu0.b32.cont [8/16] 0.0, 128
  %296 = vxpose.xlu0.b32.cont [9/16] 0.0, 128
  %297 = vxpose.xlu0.b32.cont [10/16] 0.0, 128
  %298 = vxpose.xlu0.b32.cont [11/16] 0.0, 128
  %299 = vxpose.xlu0.b32.cont [12/16] 0.0, 128
  %300 = vxpose.xlu0.b32.cont [13/16] 0.0, 128
  %301 = vxpose.xlu0.b32.cont [14/16] 0.0, 128
  %302 = vxpose.xlu0.b32.cont [15/16] 0.0, 128
  %303 = vxpose.xlu0.b32.end [16/16] 0.0, 128
  %v304 = vpop.trf.xlu0
  %v305 = vpop.trf.xlu0
  %v306 = vpop.trf.xlu0
  %v307 = vpop.trf.xlu0
  %v308 = vpop.trf.xlu0
  %v309 = vpop.trf.xlu0
  %v310 = vpop.trf.xlu0
  %v311 = vpop.trf.xlu0
  %v312 = vpop.trf.xlu0
  %v313 = vpop.trf.xlu0
  %v314 = vpop.trf.xlu0
  %v315 = vpop.trf.xlu0
  %v316 = vpop.trf.xlu0
  %v317 = vpop.trf.xlu0
  %v318 = vpop.trf.xlu0
  %v319 = vpop.trf.xlu0
  %v321 = vsel %vm46, %v304, 0
  %323 = vmatprep.subr.mxu0 0.0
  %324 = vmatpush1.msra.mxu0 0.0
  %325 = vmatprep.subr.mxu0 0.0
  %326 = vmatpush1.msra.mxu0 0.0
  %327 = vmatprep.subr.mxu0 0.0
  %328 = vmatpush1.msra.mxu0 0.0
  %329 = vmatprep.subr.mxu0 0.0
  %330 = vmatpush1.msra.mxu0 0.0
  %331 = vmatprep.subr.mxu0 0.0
  %332 = vmatpush1.msra.mxu0 0.0
  %333 = vmatprep.subr.mxu0 0.0
  %334 = vmatpush1.msra.mxu0 0.0
  %335 = vmatprep.subr.mxu0 0.0
  %336 = vmatpush1.msra.mxu0 0.0
  %337 = vmatprep.subr.mxu0 0.0
  %338 = vmatpush1.msra.mxu0 0.0
  %339 = vmatprep.subr.mxu0 0.0
  %340 = vmatpush1.msra.mxu0 0.0
  %341 = vmatprep.subr.mxu0 0.0
  %342 = vmatpush1.msra.mxu0 0.0
  %343 = vmatprep.subr.mxu0 0.0
  %344 = vmatpush1.msra.mxu0 0.0
  %345 = vmatprep.subr.mxu0 0.0
  %346 = vmatpush1.msra.mxu0 0.0
  %347 = vmatprep.subr.mxu0 0.0
  %348 = vmatpush1.msra.mxu0 %v263
  %349 = vmatprep.subr.mxu0 0.0
  %350 = vmatpush1.msra.mxu0 %v262
  %351 = vmatprep.subr.mxu0 0.0
  %352 = vmatpush1.msra.mxu0 %v261
  %353 = vmatprep.subr.mxu0 0.0
  %354 = vmatpush1.msra.mxu0 %v260
  %355 = vmatprep.subr.mxu0 0.0
  %356 = vmatpush2.msra.mxu0 0.0
  %357 = vmatprep.subr.mxu0 0.0
  %358 = vmatpush2.msra.mxu0 0.0
  %359 = vmatprep.subr.mxu0 0.0
  %360 = vmatpush2.msra.mxu0 0.0
  %361 = vmatprep.subr.mxu0 0.0
  %362 = vmatpush2.msra.mxu0 0.0
  %363 = vmatprep.subr.mxu0 0.0
  %364 = vmatpush2.msra.mxu0 0.0
  %365 = vmatprep.subr.mxu0 0.0
  %366 = vmatpush2.msra.mxu0 0.0
  %367 = vmatprep.subr.mxu0 0.0
  %368 = vmatpush2.msra.mxu0 0.0
  %369 = vmatprep.subr.mxu0 0.0
  %370 = vmatpush2.msra.mxu0 0.0
  %371 = vmatprep.subr.mxu0 0.0
  %372 = vmatpush2.msra.mxu0 0.0
  %373 = vmatprep.subr.mxu0 0.0
  %374 = vmatpush2.msra.mxu0 0.0
  %375 = vmatprep.subr.mxu0 0.0
  %376 = vmatpush2.msra.mxu0 0.0
  %377 = vmatprep.subr.mxu0 0.0
  %378 = vmatpush2.msra.mxu0 0.0
  %379 = vmatprep.subr.mxu0 0.0
  %380 = vmatpush2.msra.mxu0 0.0
  %381 = vmatprep.subr.mxu0 0.0
  %382 = vmatpush2.msra.mxu0 0.0
  %383 = vmatprep.subr.mxu0 0.0
  %384 = vmatpush2.msra.mxu0 0.0
  %385 = vmatprep.subr.mxu0 0.0
  %386 = vmatpush2.msra.mxu0 0.0
  %387 = vmatprep.mubr.f32.mxu0 0.0
  %388 = vmatmul.mubr.f32.gmra.mxu0 %v321
  %v389 = vpop.f32.mrf.mxu0
  %v390 = vadd.f32 0.0, %v389
  %v391 = vpop.f32.mrf.mxu0
  %392 = vdwg.mxu0
  %vm393 = vcmp.gt.f32.partialorder %v390, 0.0
  %v394 = vsel %vm393, 1.0, 0.0
  %v395 = vld [vmem:[%s5] sm:$0x1]
  %v396 = vlaneseq
  %v397 = vshrl.u32 %v396, 7
  %v398 = vsub.s32 0, %v397
  %v399 = vrot.slane %v395, %v398
  %v400 = vmul.f32 %v117, %v399
  %vm401 = vcmask 130048
  %v402 = vsel %vm401, %v400, 0.0
  %403 = vadd.xlane.f32.xlu0 %v402
  %v404 = vpop.xlane.xlu0 %403
  %v405 = vld [vmem:[%s6] sm:$0x1]
  %v406 = vlaneseq
  %v407 = vshrl.u32 %v406, 7
  %v408 = vsub.s32 0, %v407
  %v409 = vrot.slane %v405, %v408
  %v410 = vmul.f32 %v117, %v409
  %v411 = vsel %vm401, %v410, 0.0
  %412 = vadd.xlane.f32.xlu0 %v411
  %v413 = vpop.xlane.xlu0 %412
  %415 = vset.pattern.permute.xlu0 0
  %416 = vperm.xlu0 %415, %v216
  %v417 = vpop.permute.xlu0 %416
  %420 = vset.pattern.permute.xlu0 0
  %421 = vperm.xlu0 %420, %v221
  %v422 = vpop.permute.xlu0 %421
  %425 = vset.pattern.permute.xlu0 0
  %426 = vperm.xlu0 %425, %v226
  %v427 = vpop.permute.xlu0 %426
  %430 = vset.pattern.permute.xlu0 0
  %431 = vperm.xlu0 %430, %v231
  %v432 = vpop.permute.xlu0 %431
  %v434 = vmul.f32 %v260, %v417
  %v435 = vmul.f32 %v261, %v422
  %v436 = vmul.f32 %v262, %v427
  %v437 = vmul.f32 %v263, %v432
  %438 = vmatprep.subr.mxu0 0.0
  %439 = vmatpush1.msra.mxu0 0.0
  %440 = vmatprep.subr.mxu0 0.0
  %441 = vmatpush1.msra.mxu0 0.0
  %442 = vmatprep.subr.mxu0 0.0
  %443 = vmatpush1.msra.mxu0 0.0
  %444 = vmatprep.subr.mxu0 0.0
  %445 = vmatpush1.msra.mxu0 0.0
  %446 = vmatprep.subr.mxu0 0.0
  %447 = vmatpush1.msra.mxu0 0.0
  %448 = vmatprep.subr.mxu0 0.0
  %449 = vmatpush1.msra.mxu0 0.0
  %450 = vmatprep.subr.mxu0 0.0
  %451 = vmatpush1.msra.mxu0 0.0
  %452 = vmatprep.subr.mxu0 0.0
  %453 = vmatpush1.msra.mxu0 0.0
  %454 = vmatprep.subr.mxu0 0.0
  %455 = vmatpush1.msra.mxu0 0.0
  %456 = vmatprep.subr.mxu0 0.0
  %457 = vmatpush1.msra.mxu0 0.0
  %458 = vmatprep.subr.mxu0 0.0
  %459 = vmatpush1.msra.mxu0 0.0
  %460 = vmatprep.subr.mxu0 0.0
  %461 = vmatpush1.msra.mxu0 0.0
  %462 = vmatprep.subr.mxu0 0.0
  %463 = vmatpush1.msra.mxu0 %v437
  %464 = vmatprep.subr.mxu0 0.0
  %465 = vmatpush1.msra.mxu0 %v436
  %466 = vmatprep.subr.mxu0 0.0
  %467 = vmatpush1.msra.mxu0 %v435
  %468 = vmatprep.subr.mxu0 0.0
  %469 = vmatpush1.msra.mxu0 %v434
  %470 = vmatprep.subr.mxu0 0.0
  %471 = vmatpush2.msra.mxu0 0.0
  %472 = vmatprep.subr.mxu0 0.0
  %473 = vmatpush2.msra.mxu0 0.0
  %474 = vmatprep.subr.mxu0 0.0
  %475 = vmatpush2.msra.mxu0 0.0
  %476 = vmatprep.subr.mxu0 0.0
  %477 = vmatpush2.msra.mxu0 0.0
  %478 = vmatprep.subr.mxu0 0.0
  %479 = vmatpush2.msra.mxu0 0.0
  %480 = vmatprep.subr.mxu0 0.0
  %481 = vmatpush2.msra.mxu0 0.0
  %482 = vmatprep.subr.mxu0 0.0
  %483 = vmatpush2.msra.mxu0 0.0
  %484 = vmatprep.subr.mxu0 0.0
  %485 = vmatpush2.msra.mxu0 0.0
  %486 = vmatprep.subr.mxu0 0.0
  %487 = vmatpush2.msra.mxu0 0.0
  %488 = vmatprep.subr.mxu0 0.0
  %489 = vmatpush2.msra.mxu0 0.0
  %490 = vmatprep.subr.mxu0 0.0
  %491 = vmatpush2.msra.mxu0 0.0
  %492 = vmatprep.subr.mxu0 0.0
  %493 = vmatpush2.msra.mxu0 0.0
  %494 = vmatprep.subr.mxu0 0.0
  %495 = vmatpush2.msra.mxu0 0.0
  %496 = vmatprep.subr.mxu0 0.0
  %497 = vmatpush2.msra.mxu0 0.0
  %498 = vmatprep.subr.mxu0 0.0
  %499 = vmatpush2.msra.mxu0 0.0
  %500 = vmatprep.subr.mxu0 0.0
  %501 = vmatpush2.msra.mxu0 0.0
  %502 = vmatprep.mubr.f32.mxu0 0.0
  %503 = vmatmul.mubr.f32.gmra.mxu0 %v321
  %v504 = vpop.f32.mrf.mxu0
  %v505 = vadd.f32 0.0, %v504
  %v506 = vpop.f32.mrf.mxu0
  %507 = vdwg.mxu0
  %508 = vxpose.xlu0.b32.start [1/16] %v404, 128
  %509 = vxpose.xlu0.b32.cont [2/16] 0.0, 128
  %510 = vxpose.xlu0.b32.cont [3/16] 0.0, 128
  %511 = vxpose.xlu0.b32.cont [4/16] 0.0, 128
  %512 = vxpose.xlu0.b32.cont [5/16] 0.0, 128
  %513 = vxpose.xlu0.b32.cont [6/16] 0.0, 128
  %514 = vxpose.xlu0.b32.cont [7/16] 0.0, 128
  %515 = vxpose.xlu0.b32.cont [8/16] 0.0, 128
  %516 = vxpose.xlu0.b32.cont [9/16] 0.0, 128
  %517 = vxpose.xlu0.b32.cont [10/16] 0.0, 128
  %518 = vxpose.xlu0.b32.cont [11/16] 0.0, 128
  %519 = vxpose.xlu0.b32.cont [12/16] 0.0, 128
  %520 = vxpose.xlu0.b32.cont [13/16] 0.0, 128
  %521 = vxpose.xlu0.b32.cont [14/16] 0.0, 128
  %522 = vxpose.xlu0.b32.cont [15/16] 0.0, 128
  %523 = vxpose.xlu0.b32.end [16/16] 0.0, 128
  %v524 = vpop.trf.xlu0
  %v525 = vpop.trf.xlu0
  %v526 = vpop.trf.xlu0
  %v527 = vpop.trf.xlu0
  %v528 = vpop.trf.xlu0
  %v529 = vpop.trf.xlu0
  %v530 = vpop.trf.xlu0
  %v531 = vpop.trf.xlu0
  %v532 = vpop.trf.xlu0
  %v533 = vpop.trf.xlu0
  %v534 = vpop.trf.xlu0
  %v535 = vpop.trf.xlu0
  %v536 = vpop.trf.xlu0
  %v537 = vpop.trf.xlu0
  %v538 = vpop.trf.xlu0
  %v539 = vpop.trf.xlu0
  %v540 = vlaneseq
  %v541 = vshrl.u32 %v540, 7
  %v542 = vsub.s32 0, %v541
  %v543 = vrot.slane %v524, %v542
  %v544 = vadd.f32 %v413, %v543
  %v545 = vadd.f32 %v544, %v505
  %vm546 = vcmp.gt.f32.partialorder %v545, 0.0
  %v547 = vmul.f32 %v545, 0.2
  %v548 = vsel %vm546, %v545, %v547
  %vm549 = vcmp.gt.f32.partialorder %v394, 0.0
  %v550 = vsel %vm549, %v548, -1e+30
  %vm551 = vcmask 64512
  %v552 = vsel %vm551, %v550, -inf
  %553 = vmax.xlane.f32.xlu0 %v552
  %v554 = vpop.xlane.xlu0 %553
  %v555 = vsub.f32 %v550, %v554
  %v556 = vmul.f32 %v555, 1.442695
  %v557 = vpow.pop %v556
  %v558 = vmul.f32 %v557, %v394
  %v559 = vsel %vm551, %v558, 0.0
  %560 = vadd.xlane.f32.xlu0 %v559
  %v561 = vpop.xlane.xlu0 %560
  %v562 = vmax.f32 %v561, 1e-30
  %v563 = vrcp.pop %v562
  %v564 = vmul.f32 %v558, %v563
  %v566 = vsel %vm551, %v564, 0
  %568 = vmatprep.subr.mxu0 0.0
  %569 = vmatpush1.msra.mxu0 0.0
  %570 = vmatprep.subr.mxu0 0.0
  %571 = vmatpush1.msra.mxu0 0.0
  %572 = vmatprep.subr.mxu0 0.0
  %573 = vmatpush1.msra.mxu0 0.0
  %574 = vmatprep.subr.mxu0 0.0
  %575 = vmatpush1.msra.mxu0 0.0
  %576 = vmatprep.subr.mxu0 0.0
  %577 = vmatpush1.msra.mxu0 0.0
  %578 = vmatprep.subr.mxu0 0.0
  %579 = vmatpush1.msra.mxu0 0.0
  %580 = vmatprep.subr.mxu0 0.0
  %581 = vmatpush1.msra.mxu0 0.0
  %582 = vmatprep.subr.mxu0 0.0
  %583 = vmatpush1.msra.mxu0 0.0
  %584 = vmatprep.subr.mxu0 0.0
  %585 = vmatpush1.msra.mxu0 0.0
  %586 = vmatprep.subr.mxu0 0.0
  %587 = vmatpush1.msra.mxu0 0.0
  %588 = vmatprep.subr.mxu0 0.0
  %589 = vmatpush1.msra.mxu0 0.0
  %590 = vmatprep.subr.mxu0 0.0
  %591 = vmatpush1.msra.mxu0 0.0
  %592 = vmatprep.subr.mxu0 0.0
  %593 = vmatpush1.msra.mxu0 0.0
  %594 = vmatprep.subr.mxu0 0.0
  %595 = vmatpush1.msra.mxu0 0.0
  %596 = vmatprep.subr.mxu0 0.0
  %597 = vmatpush1.msra.mxu0 0.0
  %598 = vmatprep.subr.mxu0 0.0
  %599 = vmatpush1.msra.mxu0 %v117
  %600 = vmatprep.subr.mxu0 0.0
  %601 = vmatpush2.msra.mxu0 0.0
  %602 = vmatprep.subr.mxu0 0.0
  %603 = vmatpush2.msra.mxu0 0.0
  %604 = vmatprep.subr.mxu0 0.0
  %605 = vmatpush2.msra.mxu0 0.0
  %606 = vmatprep.subr.mxu0 0.0
  %607 = vmatpush2.msra.mxu0 0.0
  %608 = vmatprep.subr.mxu0 0.0
  %609 = vmatpush2.msra.mxu0 0.0
  %610 = vmatprep.subr.mxu0 0.0
  %611 = vmatpush2.msra.mxu0 0.0
  %612 = vmatprep.subr.mxu0 0.0
  %613 = vmatpush2.msra.mxu0 0.0
  %614 = vmatprep.subr.mxu0 0.0
  %615 = vmatpush2.msra.mxu0 0.0
  %616 = vmatprep.subr.mxu0 0.0
  %617 = vmatpush2.msra.mxu0 0.0
  %618 = vmatprep.subr.mxu0 0.0
  %619 = vmatpush2.msra.mxu0 0.0
  %620 = vmatprep.subr.mxu0 0.0
  %621 = vmatpush2.msra.mxu0 0.0
  %622 = vmatprep.subr.mxu0 0.0
  %623 = vmatpush2.msra.mxu0 0.0
  %624 = vmatprep.subr.mxu0 0.0
  %625 = vmatpush2.msra.mxu0 0.0
  %626 = vmatprep.subr.mxu0 0.0
  %627 = vmatpush2.msra.mxu0 0.0
  %628 = vmatprep.subr.mxu0 0.0
  %629 = vmatpush2.msra.mxu0 0.0
  %630 = vmatprep.subr.mxu0 0.0
  %631 = vmatpush2.msra.mxu0 0.0
  %632 = vmatprep.mubr.f32.mxu0 0.0
  %633 = vmatmul.mubr.f32.gmra.mxu0 %v566
  %v634 = vpop.f32.mrf.mxu0
  %v635 = vadd.f32 0.0, %v634
  %v636 = vpop.f32.mrf.mxu0
  %637 = vdwg.mxu0
  %638 = vst.msk [vmem:[%s9] sm:$0xff] %vm401, %v635
  %v640 = vsel %vm551, %v284, 0
  %v643 = vsel %vm551, %v285, 0
  %v646 = vsel %vm551, %v286, 0
  %v649 = vsel %vm551, %v287, 0
  %651 = vmatprep.subr.mxu0 0.0
  %652 = vmatpush1.msra.mxu0 0.0
  %653 = vmatprep.subr.mxu0 0.0
  %654 = vmatpush1.msra.mxu0 0.0
  %655 = vmatprep.subr.mxu0 0.0
  %656 = vmatpush1.msra.mxu0 0.0
  %657 = vmatprep.subr.mxu0 0.0
  %658 = vmatpush1.msra.mxu0 0.0
  %659 = vmatprep.subr.mxu0 0.0
  %660 = vmatpush1.msra.mxu0 0.0
  %661 = vmatprep.subr.mxu0 0.0
  %662 = vmatpush1.msra.mxu0 0.0
  %663 = vmatprep.subr.mxu0 0.0
  %664 = vmatpush1.msra.mxu0 0.0
  %665 = vmatprep.subr.mxu0 0.0
  %666 = vmatpush1.msra.mxu0 0.0
  %667 = vmatprep.subr.mxu0 0.0
  %668 = vmatpush1.msra.mxu0 0.0
  %669 = vmatprep.subr.mxu0 0.0
  %670 = vmatpush1.msra.mxu0 0.0
  %671 = vmatprep.subr.mxu0 0.0
  %672 = vmatpush1.msra.mxu0 0.0
  %673 = vmatprep.subr.mxu0 0.0
  %674 = vmatpush1.msra.mxu0 0.0
  %675 = vmatprep.subr.mxu0 0.0
  %676 = vmatpush1.msra.mxu0 0.0
  %677 = vmatprep.subr.mxu0 0.0
  %678 = vmatpush1.msra.mxu0 0.0
  %679 = vmatprep.subr.mxu0 0.0
  %680 = vmatpush1.msra.mxu0 0.0
  %681 = vmatprep.subr.mxu0 0.0
  %682 = vmatpush1.msra.mxu0 %v564
  %683 = vmatprep.subr.mxu0 0.0
  %684 = vmatpush2.msra.mxu0 0.0
  %685 = vmatprep.subr.mxu0 0.0
  %686 = vmatpush2.msra.mxu0 0.0
  %687 = vmatprep.subr.mxu0 0.0
  %688 = vmatpush2.msra.mxu0 0.0
  %689 = vmatprep.subr.mxu0 0.0
  %690 = vmatpush2.msra.mxu0 0.0
  %691 = vmatprep.subr.mxu0 0.0
  %692 = vmatpush2.msra.mxu0 0.0
  %693 = vmatprep.subr.mxu0 0.0
  %694 = vmatpush2.msra.mxu0 0.0
  %695 = vmatprep.subr.mxu0 0.0
  %696 = vmatpush2.msra.mxu0 0.0
  %697 = vmatprep.subr.mxu0 0.0
  %698 = vmatpush2.msra.mxu0 0.0
  %699 = vmatprep.subr.mxu0 0.0
  %700 = vmatpush2.msra.mxu0 0.0
  %701 = vmatprep.subr.mxu0 0.0
  %702 = vmatpush2.msra.mxu0 0.0
  %703 = vmatprep.subr.mxu0 0.0
  %704 = vmatpush2.msra.mxu0 0.0
  %705 = vmatprep.subr.mxu0 0.0
  %706 = vmatpush2.msra.mxu0 0.0
  %707 = vmatprep.subr.mxu0 0.0
  %708 = vmatpush2.msra.mxu0 0.0
  %709 = vmatprep.subr.mxu0 0.0
  %710 = vmatpush2.msra.mxu0 0.0
  %711 = vmatprep.subr.mxu0 0.0
  %712 = vmatpush2.msra.mxu0 0.0
  %713 = vmatprep.subr.mxu0 0.0
  %714 = vmatpush2.msra.mxu0 0.0
  %715 = vmatprep.mubr.f32.mxu0 0.0
  %716 = vmatmul.mubr.f32.gmra.mxu0 %v640
  %v717 = vpop.f32.mrf.mxu0
  %v718 = vadd.f32 0.0, %v717
  %v719 = vpop.f32.mrf.mxu0
  %720 = vmatprep.mubr.f32.mxu0 0.0
  %721 = vmatmul.mubr.f32.gmra.mxu0 %v643
  %v722 = vpop.f32.mrf.mxu0
  %v723 = vadd.f32 0.0, %v722
  %v724 = vpop.f32.mrf.mxu0
  %725 = vmatprep.mubr.f32.mxu0 0.0
  %726 = vmatmul.mubr.f32.gmra.mxu0 %v646
  %v727 = vpop.f32.mrf.mxu0
  %v728 = vadd.f32 0.0, %v727
  %v729 = vpop.f32.mrf.mxu0
  %730 = vmatprep.mubr.f32.mxu0 0.0
  %731 = vmatmul.mubr.f32.gmra.mxu0 %v649
  %v732 = vpop.f32.mrf.mxu0
  %v733 = vadd.f32 0.0, %v732
  %v734 = vpop.f32.mrf.mxu0
  %735 = vdwg.mxu0
  %v736 = vmul.f32 %v718, %v260
  %v737 = vmul.f32 %v723, %v261
  %v738 = vmul.f32 %v728, %v262
  %v739 = vmul.f32 %v733, %v263
  %v740 = vsel %vm551, %v736, 0.0
  %741 = vadd.xlane.f32.xlu0 %v740
  %v742 = vpop.xlane.xlu0 %741
  %v743 = vsel %vm551, %v737, 0.0
  %744 = vadd.xlane.f32.xlu0 %v743
  %v745 = vpop.xlane.xlu0 %744
  %v746 = vsel %vm551, %v738, 0.0
  %747 = vadd.xlane.f32.xlu0 %v746
  %v748 = vpop.xlane.xlu0 %747
  %v749 = vsel %vm551, %v739, 0.0
  %750 = vadd.xlane.f32.xlu0 %v749
  %v751 = vpop.xlane.xlu0 %750
  %v752 = vadd.f32 %v742, 0.0
  %v753 = vadd.f32 %v745, 0.0
  %v754 = vadd.f32 %v748, 0.0
  %v755 = vadd.f32 %v751, 0.0
  %v756 = vld [vmem:[%s5 + $0x1] sm:$0x1]
  %v757 = vlaneseq
  %v758 = vshrl.u32 %v757, 7
  %v759 = vsub.s32 0, %v758
  %v760 = vrot.slane %v756, %v759
  %762 = vrot.lane.b32.xlu0 %v760, 16
  %v763 = vpop.permute.xlu0 %762
  %v765 = vmul.f32 %v117, %v763
  %767 = vrot.lane.b32.xlu0 %v765, 112
  %v768 = vpop.permute.xlu0 %767
  %v770 = vsel %vm401, %v768, 0.0
  %771 = vadd.xlane.f32.xlu0 %v770
  %v772 = vpop.xlane.xlu0 %771
  %v773 = vld [vmem:[%s6 + $0x1] sm:$0x1]
  %v774 = vlaneseq
  %v775 = vshrl.u32 %v774, 7
  %v776 = vsub.s32 0, %v775
  %v777 = vrot.slane %v773, %v776
  %779 = vrot.lane.b32.xlu0 %v777, 16
  %v780 = vpop.permute.xlu0 %779
  %v782 = vmul.f32 %v117, %v780
  %784 = vrot.lane.b32.xlu0 %v782, 112
  %v785 = vpop.permute.xlu0 %784
  %v787 = vsel %vm401, %v785, 0.0
  %788 = vadd.xlane.f32.xlu0 %v787
  %v789 = vpop.xlane.xlu0 %788
  %790 = vset.pattern.permute.xlu0 1
  %791 = vperm.xlu0 %790, %v216
  %v792 = vpop.permute.xlu0 %791
  %794 = vset.pattern.permute.xlu0 1
  %795 = vperm.xlu0 %794, %v221
  %v796 = vpop.permute.xlu0 %795
  %798 = vset.pattern.permute.xlu0 1
  %799 = vperm.xlu0 %798, %v226
  %v800 = vpop.permute.xlu0 %799
  %802 = vset.pattern.permute.xlu0 1
  %803 = vperm.xlu0 %802, %v231
  %v804 = vpop.permute.xlu0 %803
  %v806 = vmul.f32 %v260, %v792
  %v807 = vmul.f32 %v261, %v796
  %v808 = vmul.f32 %v262, %v800
  %v809 = vmul.f32 %v263, %v804
  %810 = vmatprep.subr.mxu0 0.0
  %811 = vmatpush1.msra.mxu0 0.0
  %812 = vmatprep.subr.mxu0 0.0
  %813 = vmatpush1.msra.mxu0 0.0
  %814 = vmatprep.subr.mxu0 0.0
  %815 = vmatpush1.msra.mxu0 0.0
  %816 = vmatprep.subr.mxu0 0.0
  %817 = vmatpush1.msra.mxu0 0.0
  %818 = vmatprep.subr.mxu0 0.0
  %819 = vmatpush1.msra.mxu0 0.0
  %820 = vmatprep.subr.mxu0 0.0
  %821 = vmatpush1.msra.mxu0 0.0
  %822 = vmatprep.subr.mxu0 0.0
  %823 = vmatpush1.msra.mxu0 0.0
  %824 = vmatprep.subr.mxu0 0.0
  %825 = vmatpush1.msra.mxu0 0.0
  %826 = vmatprep.subr.mxu0 0.0
  %827 = vmatpush1.msra.mxu0 0.0
  %828 = vmatprep.subr.mxu0 0.0
  %829 = vmatpush1.msra.mxu0 0.0
  %830 = vmatprep.subr.mxu0 0.0
  %831 = vmatpush1.msra.mxu0 0.0
  %832 = vmatprep.subr.mxu0 0.0
  %833 = vmatpush1.msra.mxu0 0.0
  %834 = vmatprep.subr.mxu0 0.0
  %835 = vmatpush1.msra.mxu0 %v809
  %836 = vmatprep.subr.mxu0 0.0
  %837 = vmatpush1.msra.mxu0 %v808
  %838 = vmatprep.subr.mxu0 0.0
  %839 = vmatpush1.msra.mxu0 %v807
  %840 = vmatprep.subr.mxu0 0.0
  %841 = vmatpush1.msra.mxu0 %v806
  %842 = vmatprep.subr.mxu0 0.0
  %843 = vmatpush2.msra.mxu0 0.0
  %844 = vmatprep.subr.mxu0 0.0
  %845 = vmatpush2.msra.mxu0 0.0
  %846 = vmatprep.subr.mxu0 0.0
  %847 = vmatpush2.msra.mxu0 0.0
  %848 = vmatprep.subr.mxu0 0.0
  %849 = vmatpush2.msra.mxu0 0.0
  %850 = vmatprep.subr.mxu0 0.0
  %851 = vmatpush2.msra.mxu0 0.0
  %852 = vmatprep.subr.mxu0 0.0
  %853 = vmatpush2.msra.mxu0 0.0
  %854 = vmatprep.subr.mxu0 0.0
  %855 = vmatpush2.msra.mxu0 0.0
  %856 = vmatprep.subr.mxu0 0.0
  %857 = vmatpush2.msra.mxu0 0.0
  %858 = vmatprep.subr.mxu0 0.0
  %859 = vmatpush2.msra.mxu0 0.0
  %860 = vmatprep.subr.mxu0 0.0
  %861 = vmatpush2.msra.mxu0 0.0
  %862 = vmatprep.subr.mxu0 0.0
  %863 = vmatpush2.msra.mxu0 0.0
  %864 = vmatprep.subr.mxu0 0.0
  %865 = vmatpush2.msra.mxu0 0.0
  %866 = vmatprep.subr.mxu0 0.0
  %867 = vmatpush2.msra.mxu0 0.0
  %868 = vmatprep.subr.mxu0 0.0
  %869 = vmatpush2.msra.mxu0 0.0
  %870 = vmatprep.subr.mxu0 0.0
  %871 = vmatpush2.msra.mxu0 0.0
  %872 = vmatprep.subr.mxu0 0.0
  %873 = vmatpush2.msra.mxu0 0.0
  %874 = vmatprep.mubr.f32.mxu0 0.0
  %875 = vmatmul.mubr.f32.gmra.mxu0 %v321
  %v876 = vpop.f32.mrf.mxu0
  %v877 = vadd.f32 0.0, %v876
  %v878 = vpop.f32.mrf.mxu0
  %879 = vdwg.mxu0
  %880 = vxpose.xlu0.b32.start [1/16] %v772, 128
  %881 = vxpose.xlu0.b32.cont [2/16] 0.0, 128
  %882 = vxpose.xlu0.b32.cont [3/16] 0.0, 128
  %883 = vxpose.xlu0.b32.cont [4/16] 0.0, 128
  %884 = vxpose.xlu0.b32.cont [5/16] 0.0, 128
  %885 = vxpose.xlu0.b32.cont [6/16] 0.0, 128
  %886 = vxpose.xlu0.b32.cont [7/16] 0.0, 128
  %887 = vxpose.xlu0.b32.cont [8/16] 0.0, 128
  %888 = vxpose.xlu0.b32.cont [9/16] 0.0, 128
  %889 = vxpose.xlu0.b32.cont [10/16] 0.0, 128
  %890 = vxpose.xlu0.b32.cont [11/16] 0.0, 128
  %891 = vxpose.xlu0.b32.cont [12/16] 0.0, 128
  %892 = vxpose.xlu0.b32.cont [13/16] 0.0, 128
  %893 = vxpose.xlu0.b32.cont [14/16] 0.0, 128
  %894 = vxpose.xlu0.b32.cont [15/16] 0.0, 128
  %895 = vxpose.xlu0.b32.end [16/16] 0.0, 128
  %v896 = vpop.trf.xlu0
  %v897 = vpop.trf.xlu0
  %v898 = vpop.trf.xlu0
  %v899 = vpop.trf.xlu0
  %v900 = vpop.trf.xlu0
  %v901 = vpop.trf.xlu0
  %v902 = vpop.trf.xlu0
  %v903 = vpop.trf.xlu0
  %v904 = vpop.trf.xlu0
  %v905 = vpop.trf.xlu0
  %v906 = vpop.trf.xlu0
  %v907 = vpop.trf.xlu0
  %v908 = vpop.trf.xlu0
  %v909 = vpop.trf.xlu0
  %v910 = vpop.trf.xlu0
  %v911 = vpop.trf.xlu0
  %v912 = vlaneseq
  %v913 = vshrl.u32 %v912, 7
  %v914 = vsub.s32 0, %v913
  %v915 = vrot.slane %v896, %v914
  %v916 = vadd.f32 %v789, %v915
  %v917 = vadd.f32 %v916, %v877
  %vm918 = vcmp.gt.f32.partialorder %v917, 0.0
  %v919 = vmul.f32 %v917, 0.2
  %v920 = vsel %vm918, %v917, %v919
  %v921 = vsel %vm549, %v920, -1e+30
  %v922 = vsel %vm551, %v921, -inf
  %923 = vmax.xlane.f32.xlu0 %v922
  %v924 = vpop.xlane.xlu0 %923
  %v925 = vsub.f32 %v921, %v924
  %v926 = vmul.f32 %v925, 1.442695
  %v927 = vpow.pop %v926
  %v928 = vmul.f32 %v927, %v394
  %v929 = vsel %vm551, %v928, 0.0
  %930 = vadd.xlane.f32.xlu0 %v929
  %v931 = vpop.xlane.xlu0 %930
  %v932 = vmax.f32 %v931, 1e-30
  %v933 = vrcp.pop %v932
  %v934 = vmul.f32 %v928, %v933
  %936 = vrot.lane.b32.xlu0 %v117, 112
  %v937 = vpop.permute.xlu0 %936
  %v940 = vsel %vm551, %v934, 0
  %942 = vmatprep.subr.mxu0 0.0
  %943 = vmatpush1.msra.mxu0 0.0
  %944 = vmatprep.subr.mxu0 0.0
  %945 = vmatpush1.msra.mxu0 0.0
  %946 = vmatprep.subr.mxu0 0.0
  %947 = vmatpush1.msra.mxu0 0.0
  %948 = vmatprep.subr.mxu0 0.0
  %949 = vmatpush1.msra.mxu0 0.0
  %950 = vmatprep.subr.mxu0 0.0
  %951 = vmatpush1.msra.mxu0 0.0
  %952 = vmatprep.subr.mxu0 0.0
  %953 = vmatpush1.msra.mxu0 0.0
  %954 = vmatprep.subr.mxu0 0.0
  %955 = vmatpush1.msra.mxu0 0.0
  %956 = vmatprep.subr.mxu0 0.0
  %957 = vmatpush1.msra.mxu0 0.0
  %958 = vmatprep.subr.mxu0 0.0
  %959 = vmatpush1.msra.mxu0 0.0
  %960 = vmatprep.subr.mxu0 0.0
  %961 = vmatpush1.msra.mxu0 0.0
  %962 = vmatprep.subr.mxu0 0.0
  %963 = vmatpush1.msra.mxu0 0.0
  %964 = vmatprep.subr.mxu0 0.0
  %965 = vmatpush1.msra.mxu0 0.0
  %966 = vmatprep.subr.mxu0 0.0
  %967 = vmatpush1.msra.mxu0 0.0
  %968 = vmatprep.subr.mxu0 0.0
  %969 = vmatpush1.msra.mxu0 0.0
  %970 = vmatprep.subr.mxu0 0.0
  %971 = vmatpush1.msra.mxu0 0.0
  %972 = vmatprep.subr.mxu0 0.0
  %973 = vmatpush1.msra.mxu0 %v937
  %974 = vmatprep.subr.mxu0 0.0
  %975 = vmatpush2.msra.mxu0 0.0
  %976 = vmatprep.subr.mxu0 0.0
  %977 = vmatpush2.msra.mxu0 0.0
  %978 = vmatprep.subr.mxu0 0.0
  %979 = vmatpush2.msra.mxu0 0.0
  %980 = vmatprep.subr.mxu0 0.0
  %981 = vmatpush2.msra.mxu0 0.0
  %982 = vmatprep.subr.mxu0 0.0
  %983 = vmatpush2.msra.mxu0 0.0
  %984 = vmatprep.subr.mxu0 0.0
  %985 = vmatpush2.msra.mxu0 0.0
  %986 = vmatprep.subr.mxu0 0.0
  %987 = vmatpush2.msra.mxu0 0.0
  %988 = vmatprep.subr.mxu0 0.0
  %989 = vmatpush2.msra.mxu0 0.0
  %990 = vmatprep.subr.mxu0 0.0
  %991 = vmatpush2.msra.mxu0 0.0
  %992 = vmatprep.subr.mxu0 0.0
  %993 = vmatpush2.msra.mxu0 0.0
  %994 = vmatprep.subr.mxu0 0.0
  %995 = vmatpush2.msra.mxu0 0.0
  %996 = vmatprep.subr.mxu0 0.0
  %997 = vmatpush2.msra.mxu0 0.0
  %998 = vmatprep.subr.mxu0 0.0
  %999 = vmatpush2.msra.mxu0 0.0
  %1000 = vmatprep.subr.mxu0 0.0
  %1001 = vmatpush2.msra.mxu0 0.0
  %1002 = vmatprep.subr.mxu0 0.0
  %1003 = vmatpush2.msra.mxu0 0.0
  %1004 = vmatprep.subr.mxu0 0.0
  %1005 = vmatpush2.msra.mxu0 0.0
  %1006 = vmatprep.mubr.f32.mxu0 0.0
  %1007 = vmatmul.mubr.f32.gmra.mxu0 %v940
  %v1008 = vpop.f32.mrf.mxu0
  %v1009 = vadd.f32 0.0, %v1008
  %v1010 = vpop.f32.mrf.mxu0
  %1011 = vdwg.mxu0
  %1013 = vrot.lane.b32.xlu0 %v1009, 16
  %v1014 = vpop.permute.xlu0 %1013
  %vm1016 = vcmask 261248
  %1017 = vst.msk [vmem:[%s9] sm:$0xff] %vm1016, %v1014
  %1018 = vmatprep.subr.mxu0 0.0
  %1019 = vmatpush1.msra.mxu0 0.0
  %1020 = vmatprep.subr.mxu0 0.0
  %1021 = vmatpush1.msra.mxu0 0.0
  %1022 = vmatprep.subr.mxu0 0.0
  %1023 = vmatpush1.msra.mxu0 0.0
  %1024 = vmatprep.subr.mxu0 0.0
  %1025 = vmatpush1.msra.mxu0 0.0
  %1026 = vmatprep.subr.mxu0 0.0
  %1027 = vmatpush1.msra.mxu0 0.0
  %1028 = vmatprep.subr.mxu0 0.0
  %1029 = vmatpush1.msra.mxu0 0.0
  %1030 = vmatprep.subr.mxu0 0.0
  %1031 = vmatpush1.msra.mxu0 0.0
  %1032 = vmatprep.subr.mxu0 0.0
  %1033 = vmatpush1.msra.mxu0 0.0
  %1034 = vmatprep.subr.mxu0 0.0
  %1035 = vmatpush1.msra.mxu0 0.0
  %1036 = vmatprep.subr.mxu0 0.0
  %1037 = vmatpush1.msra.mxu0 0.0
  %1038 = vmatprep.subr.mxu0 0.0
  %1039 = vmatpush1.msra.mxu0 0.0
  %1040 = vmatprep.subr.mxu0 0.0
  %1041 = vmatpush1.msra.mxu0 0.0
  %1042 = vmatprep.subr.mxu0 0.0
  %1043 = vmatpush1.msra.mxu0 0.0
  %1044 = vmatprep.subr.mxu0 0.0
  %1045 = vmatpush1.msra.mxu0 0.0
  %1046 = vmatprep.subr.mxu0 0.0
  %1047 = vmatpush1.msra.mxu0 0.0
  %1048 = vmatprep.subr.mxu0 0.0
  %1049 = vmatpush1.msra.mxu0 %v934
  %1050 = vmatprep.subr.mxu0 0.0
  %1051 = vmatpush2.msra.mxu0 0.0
  %1052 = vmatprep.subr.mxu0 0.0
  %1053 = vmatpush2.msra.mxu0 0.0
  %1054 = vmatprep.subr.mxu0 0.0
  %1055 = vmatpush2.msra.mxu0 0.0
  %1056 = vmatprep.subr.mxu0 0.0
  %1057 = vmatpush2.msra.mxu0 0.0
  %1058 = vmatprep.subr.mxu0 0.0
  %1059 = vmatpush2.msra.mxu0 0.0
  %1060 = vmatprep.subr.mxu0 0.0
  %1061 = vmatpush2.msra.mxu0 0.0
  %1062 = vmatprep.subr.mxu0 0.0
  %1063 = vmatpush2.msra.mxu0 0.0
  %1064 = vmatprep.subr.mxu0 0.0
  %1065 = vmatpush2.msra.mxu0 0.0
  %1066 = vmatprep.subr.mxu0 0.0
  %1067 = vmatpush2.msra.mxu0 0.0
  %1068 = vmatprep.subr.mxu0 0.0
  %1069 = vmatpush2.msra.mxu0 0.0
  %1070 = vmatprep.subr.mxu0 0.0
  %1071 = vmatpush2.msra.mxu0 0.0
  %1072 = vmatprep.subr.mxu0 0.0
  %1073 = vmatpush2.msra.mxu0 0.0
  %1074 = vmatprep.subr.mxu0 0.0
  %1075 = vmatpush2.msra.mxu0 0.0
  %1076 = vmatprep.subr.mxu0 0.0
  %1077 = vmatpush2.msra.mxu0 0.0
  %1078 = vmatprep.subr.mxu0 0.0
  %1079 = vmatpush2.msra.mxu0 0.0
  %1080 = vmatprep.subr.mxu0 0.0
  %1081 = vmatpush2.msra.mxu0 0.0
  %1082 = vmatprep.mubr.f32.mxu0 0.0
  %1083 = vmatmul.mubr.f32.gmra.mxu0 %v640
  %v1084 = vpop.f32.mrf.mxu0
  %v1085 = vadd.f32 0.0, %v1084
  %v1086 = vpop.f32.mrf.mxu0
  %1087 = vmatprep.mubr.f32.mxu0 0.0
  %1088 = vmatmul.mubr.f32.gmra.mxu0 %v643
  %v1089 = vpop.f32.mrf.mxu0
  %v1090 = vadd.f32 0.0, %v1089
  %v1091 = vpop.f32.mrf.mxu0
  %1092 = vmatprep.mubr.f32.mxu0 0.0
  %1093 = vmatmul.mubr.f32.gmra.mxu0 %v646
  %v1094 = vpop.f32.mrf.mxu0
  %v1095 = vadd.f32 0.0, %v1094
  %v1096 = vpop.f32.mrf.mxu0
  %1097 = vmatprep.mubr.f32.mxu0 0.0
  %1098 = vmatmul.mubr.f32.gmra.mxu0 %v649
  %v1099 = vpop.f32.mrf.mxu0
  %v1100 = vadd.f32 0.0, %v1099
  %v1101 = vpop.f32.mrf.mxu0
  %1102 = vdwg.mxu0
  %v1103 = vmul.f32 %v1085, %v260
  %v1104 = vmul.f32 %v1090, %v261
  %v1105 = vmul.f32 %v1095, %v262
  %v1106 = vmul.f32 %v1100, %v263
  %v1107 = vsel %vm551, %v1103, 0.0
  %1108 = vadd.xlane.f32.xlu0 %v1107
  %v1109 = vpop.xlane.xlu0 %1108
  %v1110 = vsel %vm551, %v1104, 0.0
  %1111 = vadd.xlane.f32.xlu0 %v1110
  %v1112 = vpop.xlane.xlu0 %1111
  %v1113 = vsel %vm551, %v1105, 0.0
  %1114 = vadd.xlane.f32.xlu0 %v1113
  %v1115 = vpop.xlane.xlu0 %1114
  %v1116 = vsel %vm551, %v1106, 0.0
  %1117 = vadd.xlane.f32.xlu0 %v1116
  %v1118 = vpop.xlane.xlu0 %1117
  %v1119 = vadd.f32 %v752, %v1109
  %v1120 = vadd.f32 %v753, %v1112
  %v1121 = vadd.f32 %v754, %v1115
  %v1122 = vadd.f32 %v755, %v1118
  %v1123 = vrcp.pop 2.0
  %v1124 = vmul.f32 %v1119, %v1123
  %v1125 = vmul.f32 %v1120, %v1123
  %v1126 = vmul.f32 %v1121, %v1123
  %v1127 = vmul.f32 %v1122, %v1123
  %vm1128 = vcmask 7168
  %1129 = vst.msk [vmem:[%s10] sm:$0xff] %vm1128, %v1124
  %1130 = vst.msk [vmem:[%s10 + $0x8] sm:$0xff] %vm1128, %v1125
  %1131 = vst.msk [vmem:[%s10 + $0x10] sm:$0xff] %vm1128, %v1126
  %1132 = vst.msk [vmem:[%s10 + $0x18] sm:$0xff] %vm1128, %v1127
  // Predicated region
  $region38: #{fwd.4} parent=0 // pred_check
    _
  $region39: #{fwd.4} parent=0 // pred_check_branch
    %1134 = sbr.rel (0) target = $region41
  $region40: #{fwd.4} parent=0 // pred_region
    _
  $region41: #{fwd.4} parent=0 // pred_fallthru
    _
  // Predicated region
  $region42: #{fwd.4} parent=0 // pred_check
    _
  $region43: #{fwd.4} parent=0 // pred_check_branch
    %1136 = sbr.rel (0) target = $region45
  $region44: #{fwd.4} parent=0 // pred_region
    _
  $region45: #{fwd.4} parent=0 // pred_fallthru
    _
  // Predicated region
  $region46: #{fwd.4} parent=0 // pred_check
    _
  $region47: #{fwd.4} parent=0 // pred_check_branch
    %1138 = sbr.rel (0) target = $region49
  $region48: #{fwd.4} parent=0 // pred_region
    _
  $region49: #{fwd.4} parent=0 // pred_fallthru
    _
  // Predicated region
  $region50: #{fwd.4} parent=0 // pred_check
    _
  $region51: #{fwd.4} parent=0 // pred_check_branch
    %1140 = sbr.rel (0) target = $region53
  $region52: #{fwd.4} parent=0 // pred_region
    _
  $region53: #{fwd.4} parent=0 // pred_fallthru
    _

// kernel: fwd.3
$region0: #{fwd.3}
  #allocation0 [shape = 'u32[]', space=smem, size = 0x4, offset = 0x4, fixed_abs, tag = 'smem constant byte address 0x4 - core index']
  #allocation1 [shape = 'u32[144,128]{1,0:T(1,128)}', space=vmem, size = 0x12000, scoped, tag = 'internal scratch']
  #allocation2 [shape = 'f32[1,1]{1,0:T(1,128)S(1)}', space=vmem, size = 0x200, scoped, tag = 'scoped memory for fwd.3']
  %s0 = inlined_call_operand.vmem [shape: f32[2,256,4], index: 0, kind: input, shape index: {}]
  %s1 = inlined_call_operand.vmem [shape: f32[4,16], index: 1, kind: input, shape index: {}]
  %s2 = inlined_call_operand.vmem [shape: f32[4,32], index: 2, kind: input, shape index: {}]
  %s3 = inlined_call_operand.vmem [shape: f32[1,32], index: 3, kind: input, shape index: {}]
  %s4 = inlined_call_operand.vmem [shape: f32[32,8], index: 4, kind: input, shape index: {}]
  %s5 = inlined_call_operand.vmem [shape: f32[1,8], index: 5, kind: input, shape index: {}]
  %s6 = inlined_call_operand.vmem [shape: f32[8,32], index: 6, kind: input, shape index: {}]
  %s7 = inlined_call_operand.vmem [shape: f32[1,32], index: 7, kind: input, shape index: {}]
  %s8 = inlined_call_operand.vmem [shape: f32[1,2], index: 8, kind: input, shape index: {}]
  %s9 = inlined_call_operand.<no memory space> [shape: f32[1,1], index: 9, kind: input, shape index: {}]
  %s10 = inlined_call_operand.vmem [shape: f32[32,32], index: 10, kind: input, shape index: {}]
  %s11 = inlined_call_operand.vmem [shape: f32[1,32], index: 11, kind: input, shape index: {}]
  %s12 = inlined_call_operand.vmem [shape: f32[32,32], index: 12, kind: input, shape index: {}]
  %s13 = inlined_call_operand.vmem [shape: f32[1,32], index: 13, kind: input, shape index: {}]
  %s14 = inlined_call_operand.vmem [shape: f32[16,32], index: 14, kind: input, shape index: {}]
  %s15 = inlined_call_operand.vmem [shape: f32[1,32], index: 15, kind: input, shape index: {}]
  %s16 = inlined_call_operand.vmem [shape: f32[2,4,32], index: 16, kind: output, shape index: {0}]
  %s17 = inlined_call_operand.hbm [shape: f32[2,4,256], index: 17, kind: output, shape index: {1}]
  %18 = xla_tuple %s16, %s17
  %s19 = sld [smem:[#allocation0]]
  $region105: #{fwd.3} parent=0
    _
  %s21 = ssub.s32 1, %s19
  %s22 = scalar_select 0, %s21, %s19
  %v23 = vstv %s9
  %24 = vst [vmem:[#allocation2] sm:$0x1] %v23
  $region1: #{fwd.3} parent=0
    #allocation3 [shape = 'u8[8192]{0}', space=vmem, size = 0x2000, scoped, tag = 'output window, operand 1']
    #allocation4 [shape = 's32[2]{0}', space=sflag, size = 0x8, scoped, tag = 'scoped memory for fwd.3']
    %25 = vsyncpa [#allocation4], 0
    %s26 = scalar_lea.sflag [#allocation4], 1
    %27 = vsyncpa %s26, 0
    loop: start=0, step=1, limit=4
    $region2: #{fwd.3} parent=1 // loop_pre_header
      _
    $region3: #{fwd.3} parent=1 // loop_header
      %s29 = sphi 0, %s33
      %p30 = scmp.ge.s32.totalorder %s29, 4
      %s39 = sphi 0, %s41
      %s42 = sphi 0, %s39
      %s43 = sphi 0, %s42
      %s59 = sphi 0, %s43
      %s63 = sphi 0, %s63
      %s65 = sphi 0, %s63
      %s66 = sphi 0, %s65
      %s80 = sphi 0, %s66
      %s84 = sphi 0, %s84
      %s86 = sphi 0, %s84
      %s87 = sphi 0, %s86
      %s101 = sphi 0, %s87
      %s105 = sphi 0, %s105
      %s107 = sphi 0, %s105
      %s108 = sphi 0, %s107
      %s122 = sphi 0, %s108
      %s126 = sphi 0, %s126
      %s128 = sphi 0, %s126
      %s129 = sphi 0, %s128
      %s143 = sphi 0, %s129
      %s147 = sphi 0, %s147
      %s149 = sphi 0, %s147
      %s150 = sphi 0, %s149
      %s164 = sphi 0, %s150
      %s168 = sphi 0, %s168
      %s170 = sphi 0, %s168
      %s171 = sphi 0, %s170
      %s185 = sphi 0, %s171
      %s189 = sphi 0, %s189
      %s191 = sphi 0, %s189
      %s192 = sphi 0, %s191
      %s206 = sphi 0, %s192
      %s210 = sphi 0, %s210
      %s212 = sphi 0, %s210
      %s213 = sphi 0, %s212
      %s227 = sphi 0, %s213
      %s231 = sphi 0, %s231
      %s233 = sphi 0, %s231
      %s234 = sphi 0, %s233
      %s248 = sphi 0, %s234
      %s252 = sphi 0, %s252
      %s254 = sphi 0, %s252
      %s255 = sphi 0, %s254
      %s269 = sphi 0, %s255
      %s273 = sphi 0, %s273
      %s275 = sphi 0, %s273
      %s276 = sphi 0, %s275
      %s290 = sphi 0, %s276
      %s294 = sphi 0, %s294
      %s296 = sphi 0, %s294
      %s297 = sphi 0, %s296
      %s311 = sphi 0, %s297
      %s315 = sphi 0, %s315
      %s317 = sphi 0, %s315
      %s318 = sphi 0, %s317
      %s332 = sphi 0, %s318
      %s336 = sphi 0, %s336
      %s338 = sphi 0, %s336
      %s339 = sphi 0, %s338
      %s353 = sphi 0, %s339
      %s357 = sphi 0, %s357
      %s359 = sphi 0, %s357
      %s360 = sphi 0, %s359
      %s374 = sphi 0, %s360
      %s380 = sphi 0, %s382
      %s383 = sphi 0, %s380
      %s384 = sphi 0, %s383
      %s400 = sphi 0, %s384
      %s406 = sphi 0, %s408
      %s409 = sphi 0, %s406
      %s410 = sphi 0, %s409
      %s426 = sphi 0, %s410
    $region4: #{fwd.3} parent=1 // loop_header_branch
      %32 = sbr.rel (%p30) target = $region8
    $region5: #{fwd.3} parent=1 // loop_body
      %s34 = ssub.s32 %s29, 1
      %s35 = ssub.s32 %s29, 2
      %s36 = sadd.s32 %s29, 1
      %s37 = ssub.s32 %s29, %s36
      %p38 = scmp.eq.s32.totalorder %s37, 0
      %s40 = sadd.s32 %s39, 1
      %s41 = scalar_select %p38, %s39, %s40
      %p44 = pneg %p38
      %p45 = scmp.eq.s32.totalorder %s29, 1
      %p46 = por %p44, %p45
      %p47 = scmp.ne.s32.totalorder %s39, %s42
      %p48 = scmp.eq.s32.totalorder %s29, 0
      %p49 = por %p47, %p48
      %p50 = scmp.ne.s32.totalorder %s39, %s42
      %p51 = scmp.eq.s32.totalorder %s34, 1
      %p52 = por %p50, %p51
      %p53 = scmp.ne.s32.totalorder %s42, %s43
      %p54 = scmp.eq.s32.totalorder %s34, 0
      %p55 = por %p53, %p54
      %p56 = scmp.ne.s32.totalorder %s42, %s43
      %p57 = scmp.eq.s32.totalorder %s35, 1
      %p58 = por %p56, %p57
      %p60 = scmp.ne.s32.totalorder %s43, %s59
      %p61 = scmp.eq.s32.totalorder %s35, 0
      %p62 = por %p60, %p61
      %s64 = sadd.s32 %s63, 1
      %p67 = scmp.eq.s32.totalorder %s29, 1
      %p68 = scmp.ne.s32.totalorder %s63, %s65
      %p69 = scmp.eq.s32.totalorder %s29, 0
      %p70 = por %p68, %p69
      %p71 = scmp.ne.s32.totalorder %s63, %s65
      %p72 = scmp.eq.s32.totalorder %s34, 1
      %p73 = por %p71, %p72
      %p74 = scmp.ne.s32.totalorder %s65, %s66
      %p75 = scmp.eq.s32.totalorder %s34, 0
      %p76 = por %p74, %p75
      %p77 = scmp.ne.s32.totalorder %s65, %s66
      %p78 = scmp.eq.s32.totalorder %s35, 1
      %p79 = por %p77, %p78
      %p81 = scmp.ne.s32.totalorder %s66, %s80
      %p82 = scmp.eq.s32.totalorder %s35, 0
      %p83 = por %p81, %p82
      %s85 = sadd.s32 %s84, 1
      %p88 = scmp.eq.s32.totalorder %s29, 1
      %p89 = scmp.ne.s32.totalorder %s84, %s86
      %p90 = scmp.eq.s32.totalorder %s29, 0
      %p91 = por %p89, %p90
      %p92 = scmp.ne.s32.totalorder %s84, %s86
      %p93 = scmp.eq.s32.totalorder %s34, 1
      %p94 = por %p92, %p93
      %p95 = scmp.ne.s32.totalorder %s86, %s87
      %p96 = scmp.eq.s32.totalorder %s34, 0
      %p97 = por %p95, %p96
      %p98 = scmp.ne.s32.totalorder %s86, %s87
      %p99 = scmp.eq.s32.totalorder %s35, 1
      %p100 = por %p98, %p99
      %p102 = scmp.ne.s32.totalorder %s87, %s101
      %p103 = scmp.eq.s32.totalorder %s35, 0
      %p104 = por %p102, %p103
      %s106 = sadd.s32 %s105, 1
      %p109 = scmp.eq.s32.totalorder %s29, 1
      %p110 = scmp.ne.s32.totalorder %s105, %s107
      %p111 = scmp.eq.s32.totalorder %s29, 0
      %p112 = por %p110, %p111
      %p113 = scmp.ne.s32.totalorder %s105, %s107
      %p114 = scmp.eq.s32.totalorder %s34, 1
      %p115 = por %p113, %p114
      %p116 = scmp.ne.s32.totalorder %s107, %s108
      %p117 = scmp.eq.s32.totalorder %s34, 0
      %p118 = por %p116, %p117
      %p119 = scmp.ne.s32.totalorder %s107, %s108
      %p120 = scmp.eq.s32.totalorder %s35, 1
      %p121 = por %p119, %p120
      %p123 = scmp.ne.s32.totalorder %s108, %s122
      %p124 = scmp.eq.s32.totalorder %s35, 0
      %p125 = por %p123, %p124
      %s127 = sadd.s32 %s126, 1
      %p130 = scmp.eq.s32.totalorder %s29, 1
      %p131 = scmp.ne.s32.totalorder %s126, %s128
      %p132 = scmp.eq.s32.totalorder %s29, 0
      %p133 = por %p131, %p132
      %p134 = scmp.ne.s32.totalorder %s126, %s128
      %p135 = scmp.eq.s32.totalorder %s34, 1
      %p136 = por %p134, %p135
      %p137 = scmp.ne.s32.totalorder %s128, %s129
      %p138 = scmp.eq.s32.totalorder %s34, 0
      %p139 = por %p137, %p138
      %p140 = scmp.ne.s32.totalorder %s128, %s129
      %p141 = scmp.eq.s32.totalorder %s35, 1
      %p142 = por %p140, %p141
      %p144 = scmp.ne.s32.totalorder %s129, %s143
      %p145 = scmp.eq.s32.totalorder %s35, 0
      %p146 = por %p144, %p145
      %s148 = sadd.s32 %s147, 1
      %p151 = scmp.eq.s32.totalorder %s29, 1
      %p152 = scmp.ne.s32.totalorder %s147, %s149
      %p153 = scmp.eq.s32.totalorder %s29, 0
      %p154 = por %p152, %p153
      %p155 = scmp.ne.s32.totalorder %s147, %s149
      %p156 = scmp.eq.s32.totalorder %s34, 1
      %p157 = por %p155, %p156
      %p158 = scmp.ne.s32.totalorder %s149, %s150
      %p159 = scmp.eq.s32.totalorder %s34, 0
      %p160 = por %p158, %p159
      %p161 = scmp.ne.s32.totalorder %s149, %s150
      %p162 = scmp.eq.s32.totalorder %s35, 1
      %p163 = por %p161, %p162
      %p165 = scmp.ne.s32.totalorder %s150, %s164
      %p166 = scmp.eq.s32.totalorder %s35, 0
      %p167 = por %p165, %p166
      %s169 = sadd.s32 %s168, 1
      %p172 = scmp.eq.s32.totalorder %s29, 1
      %p173 = scmp.ne.s32.totalorder %s168, %s170
      %p174 = scmp.eq.s32.totalorder %s29, 0
      %p175 = por %p173, %p174
      %p176 = scmp.ne.s32.totalorder %s168, %s170
      %p177 = scmp.eq.s32.totalorder %s34, 1
      %p178 = por %p176, %p177
      %p179 = scmp.ne.s32.totalorder %s170, %s171
      %p180 = scmp.eq.s32.totalorder %s34, 0
      %p181 = por %p179, %p180
      %p182 = scmp.ne.s32.totalorder %s170, %s171
      %p183 = scmp.eq.s32.totalorder %s35, 1
      %p184 = por %p182, %p183
      %p186 = scmp.ne.s32.totalorder %s171, %s185
      %p187 = scmp.eq.s32.totalorder %s35, 0
      %p188 = por %p186, %p187
      %s190 = sadd.s32 %s189, 1
      %p193 = scmp.eq.s32.totalorder %s29, 1
      %p194 = scmp.ne.s32.totalorder %s189, %s191
      %p195 = scmp.eq.s32.totalorder %s29, 0
      %p196 = por %p194, %p195
      %p197 = scmp.ne.s32.totalorder %s189, %s191
      %p198 = scmp.eq.s32.totalorder %s34, 1
      %p199 = por %p197, %p198
      %p200 = scmp.ne.s32.totalorder %s191, %s192
      %p201 = scmp.eq.s32.totalorder %s34, 0
      %p202 = por %p200, %p201
      %p203 = scmp.ne.s32.totalorder %s191, %s192
      %p204 = scmp.eq.s32.totalorder %s35, 1
      %p205 = por %p203, %p204
      %p207 = scmp.ne.s32.totalorder %s192, %s206
      %p208 = scmp.eq.s32.totalorder %s35, 0
      %p209 = por %p207, %p208
      %s211 = sadd.s32 %s210, 1
      %p214 = scmp.eq.s32.totalorder %s29, 1
      %p215 = scmp.ne.s32.totalorder %s210, %s212
      %p216 = scmp.eq.s32.totalorder %s29, 0
      %p217 = por %p215, %p216
      %p218 = scmp.ne.s32.totalorder %s210, %s212
      %p219 = scmp.eq.s32.totalorder %s34, 1
      %p220 = por %p218, %p219
      %p221 = scmp.ne.s32.totalorder %s212, %s213
      %p222 = scmp.eq.s32.totalorder %s34, 0
      %p223 = por %p221, %p222
      %p224 = scmp.ne.s32.totalorder %s212, %s213
      %p225 = scmp.eq.s32.totalorder %s35, 1
      %p226 = por %p224, %p225
      %p228 = scmp.ne.s32.totalorder %s213, %s227
      %p229 = scmp.eq.s32.totalorder %s35, 0
      %p230 = por %p228, %p229
      %s232 = sadd.s32 %s231, 1
      %p235 = scmp.eq.s32.totalorder %s29, 1
      %p236 = scmp.ne.s32.totalorder %s231, %s233
      %p237 = scmp.eq.s32.totalorder %s29, 0
      %p238 = por %p236, %p237
      %p239 = scmp.ne.s32.totalorder %s231, %s233
      %p240 = scmp.eq.s32.totalorder %s34, 1
      %p241 = por %p239, %p240
      %p242 = scmp.ne.s32.totalorder %s233, %s234
      %p243 = scmp.eq.s32.totalorder %s34, 0
      %p244 = por %p242, %p243
      %p245 = scmp.ne.s32.totalorder %s233, %s234
      %p246 = scmp.eq.s32.totalorder %s35, 1
      %p247 = por %p245, %p246
      %p249 = scmp.ne.s32.totalorder %s234, %s248
      %p250 = scmp.eq.s32.totalorder %s35, 0
      %p251 = por %p249, %p250
      %s253 = sadd.s32 %s252, 1
      %p256 = scmp.eq.s32.totalorder %s29, 1
      %p257 = scmp.ne.s32.totalorder %s252, %s254
      %p258 = scmp.eq.s32.totalorder %s29, 0
      %p259 = por %p257, %p258
      %p260 = scmp.ne.s32.totalorder %s252, %s254
      %p261 = scmp.eq.s32.totalorder %s34, 1
      %p262 = por %p260, %p261
      %p263 = scmp.ne.s32.totalorder %s254, %s255
      %p264 = scmp.eq.s32.totalorder %s34, 0
      %p265 = por %p263, %p264
      %p266 = scmp.ne.s32.totalorder %s254, %s255
      %p267 = scmp.eq.s32.totalorder %s35, 1
      %p268 = por %p266, %p267
      %p270 = scmp.ne.s32.totalorder %s255, %s269
      %p271 = scmp.eq.s32.totalorder %s35, 0
      %p272 = por %p270, %p271
      %s274 = sadd.s32 %s273, 1
      %p277 = scmp.eq.s32.totalorder %s29, 1
      %p278 = scmp.ne.s32.totalorder %s273, %s275
      %p279 = scmp.eq.s32.totalorder %s29, 0
      %p280 = por %p278, %p279
      %p281 = scmp.ne.s32.totalorder %s273, %s275
      %p282 = scmp.eq.s32.totalorder %s34, 1
      %p283 = por %p281, %p282
      %p284 = scmp.ne.s32.totalorder %s275, %s276
      %p285 = scmp.eq.s32.totalorder %s34, 0
      %p286 = por %p284, %p285
      %p287 = scmp.ne.s32.totalorder %s275, %s276
      %p288 = scmp.eq.s32.totalorder %s35, 1
      %p289 = por %p287, %p288
      %p291 = scmp.ne.s32.totalorder %s276, %s290
      %p292 = scmp.eq.s32.totalorder %s35, 0
      %p293 = por %p291, %p292
      %s295 = sadd.s32 %s294, 1
      %p298 = scmp.eq.s32.totalorder %s29, 1
      %p299 = scmp.ne.s32.totalorder %s294, %s296
      %p300 = scmp.eq.s32.totalorder %s29, 0
      %p301 = por %p299, %p300
      %p302 = scmp.ne.s32.totalorder %s294, %s296
      %p303 = scmp.eq.s32.totalorder %s34, 1
      %p304 = por %p302, %p303
      %p305 = scmp.ne.s32.totalorder %s296, %s297
      %p306 = scmp.eq.s32.totalorder %s34, 0
      %p307 = por %p305, %p306
      %p308 = scmp.ne.s32.totalorder %s296, %s297
      %p309 = scmp.eq.s32.totalorder %s35, 1
      %p310 = por %p308, %p309
      %p312 = scmp.ne.s32.totalorder %s297, %s311
      %p313 = scmp.eq.s32.totalorder %s35, 0
      %p314 = por %p312, %p313
      %s316 = sadd.s32 %s315, 1
      %p319 = scmp.eq.s32.totalorder %s29, 1
      %p320 = scmp.ne.s32.totalorder %s315, %s317
      %p321 = scmp.eq.s32.totalorder %s29, 0
      %p322 = por %p320, %p321
      %p323 = scmp.ne.s32.totalorder %s315, %s317
      %p324 = scmp.eq.s32.totalorder %s34, 1
      %p325 = por %p323, %p324
      %p326 = scmp.ne.s32.totalorder %s317, %s318
      %p327 = scmp.eq.s32.totalorder %s34, 0
      %p328 = por %p326, %p327
      %p329 = scmp.ne.s32.totalorder %s317, %s318
      %p330 = scmp.eq.s32.totalorder %s35, 1
      %p331 = por %p329, %p330
      %p333 = scmp.ne.s32.totalorder %s318, %s332
      %p334 = scmp.eq.s32.totalorder %s35, 0
      %p335 = por %p333, %p334
      %s337 = sadd.s32 %s336, 1
      %p340 = scmp.eq.s32.totalorder %s29, 1
      %p341 = scmp.ne.s32.totalorder %s336, %s338
      %p342 = scmp.eq.s32.totalorder %s29, 0
      %p343 = por %p341, %p342
      %p344 = scmp.ne.s32.totalorder %s336, %s338
      %p345 = scmp.eq.s32.totalorder %s34, 1
      %p346 = por %p344, %p345
      %p347 = scmp.ne.s32.totalorder %s338, %s339
      %p348 = scmp.eq.s32.totalorder %s34, 0
      %p349 = por %p347, %p348
      %p350 = scmp.ne.s32.totalorder %s338, %s339
      %p351 = scmp.eq.s32.totalorder %s35, 1
      %p352 = por %p350, %p351
      %p354 = scmp.ne.s32.totalorder %s339, %s353
      %p355 = scmp.eq.s32.totalorder %s35, 0
      %p356 = por %p354, %p355
      %s358 = sadd.s32 %s357, 1
      %p361 = scmp.eq.s32.totalorder %s29, 1
      %p362 = scmp.ne.s32.totalorder %s357, %s359
      %p363 = scmp.eq.s32.totalorder %s29, 0
      %p364 = por %p362, %p363
      %p365 = scmp.ne.s32.totalorder %s357, %s359
      %p366 = scmp.eq.s32.totalorder %s34, 1
      %p367 = por %p365, %p366
      %p368 = scmp.ne.s32.totalorder %s359, %s360
      %p369 = scmp.eq.s32.totalorder %s34, 0
      %p370 = por %p368, %p369
      %p371 = scmp.ne.s32.totalorder %s359, %s360
      %p372 = scmp.eq.s32.totalorder %s35, 1
      %p373 = por %p371, %p372
      %p375 = scmp.ne.s32.totalorder %s360, %s374
      %p376 = scmp.eq.s32.totalorder %s35, 0
      %p377 = por %p375, %p376
      %s378 = ssub.s32 %s29, %s36
      %p379 = scmp.eq.s32.totalorder %s378, 0
      %s381 = sadd.s32 %s380, 1
      %s382 = scalar_select %p379, %s380, %s381
      %p385 = pneg %p379
      %p386 = scmp.eq.s32.totalorder %s29, 1
      %p387 = por %p385, %p386
      %p388 = scmp.ne.s32.totalorder %s380, %s383
      %p389 = scmp.eq.s32.totalorder %s29, 0
      %p390 = por %p388, %p389
      %p391 = scmp.ne.s32.totalorder %s380, %s383
      %p392 = scmp.eq.s32.totalorder %s34, 1
      %p393 = por %p391, %p392
      %p394 = scmp.ne.s32.totalorder %s383, %s384
      %p395 = scmp.eq.s32.totalorder %s34, 0
      %p396 = por %p394, %p395
      %p397 = scmp.ne.s32.totalorder %s383, %s384
      %p398 = scmp.eq.s32.totalorder %s35, 1
      %p399 = por %p397, %p398
      %p401 = scmp.ne.s32.totalorder %s384, %s400
      %p402 = scmp.eq.s32.totalorder %s35, 0
      %p403 = por %p401, %p402
      %s404 = ssub.s32 %s29, %s36
      %p405 = scmp.eq.s32.totalorder %s404, 0
      %s407 = sadd.s32 %s406, 1
      %s408 = scalar_select %p405, %s406, %s407
      %p411 = pneg %p405
      %p412 = scmp.eq.s32.totalorder %s29, 1
      %p413 = por %p411, %p412
      %p414 = scmp.ne.s32.totalorder %s406, %s409
      %p415 = scmp.eq.s32.totalorder %s29, 0
      %p416 = por %p414, %p415
      %p417 = scmp.ne.s32.totalorder %s406, %s409
      %p418 = scmp.eq.s32.totalorder %s34, 1
      %p419 = por %p417, %p418
      %p420 = scmp.ne.s32.totalorder %s409, %s410
      %p421 = scmp.eq.s32.totalorder %s34, 0
      %p422 = por %p420, %p421
      %p423 = scmp.ne.s32.totalorder %s409, %s410
      %p424 = scmp.eq.s32.totalorder %s35, 1
      %p425 = por %p423, %p424
      %p427 = scmp.ne.s32.totalorder %s410, %s426
      %p428 = scmp.eq.s32.totalorder %s35, 0
      %p429 = por %p427, %p428
      %p430 = scmp.le.s32.totalorder 1, %s29
      %p431 = scmp.lt.s32.totalorder %s29, 3
      %p432 = pnand %p430, %p431
      %p433 = pneg %p432
      // Predicated region
      $region9: #{fwd.3} parent=5 // pred_check
        _
      $region10: #{fwd.3} parent=5 // pred_check_branch
        %435 = sbr.rel (%p432) target = $region12
      $region11: #{fwd.3} parent=5 // pred_region
        %s436 = ssub.s32 %s29, 1
        // Predicated region
        $region13: #{fwd.3} parent=11 // pred_check
          %p437 = pneg %p76
        $region14: #{fwd.3} parent=11 // pred_check_branch
          %439 = sbr.rel (%p437) target = $region16
        $region15: #{fwd.3} parent=11 // pred_region
          _
        $region16: #{fwd.3} parent=11 // pred_fallthru
          _
        // Predicated region
        $region17: #{fwd.3} parent=11 // pred_check
          %p440 = pneg %p97
        $region18: #{fwd.3} parent=11 // pred_check_branch
          %442 = sbr.rel (%p440) target = $region20
        $region19: #{fwd.3} parent=11 // pred_region
          _
        $region20: #{fwd.3} parent=11 // pred_fallthru
          _
        // Predicated region
        $region21: #{fwd.3} parent=11 // pred_check
          %p443 = pneg %p118
        $region22: #{fwd.3} parent=11 // pred_check_branch
          %445 = sbr.rel (%p443) target = $region24
        $region23: #{fwd.3} parent=11 // pred_region
          _
        $region24: #{fwd.3} parent=11 // pred_fallthru
          _
        // Predicated region
        $region25: #{fwd.3} parent=11 // pred_check
          %p446 = pneg %p139
        $region26: #{fwd.3} parent=11 // pred_check_branch
          %448 = sbr.rel (%p446) target = $region28
        $region27: #{fwd.3} parent=11 // pred_region
          _
        $region28: #{fwd.3} parent=11 // pred_fallthru
          _
        // Predicated region
        $region29: #{fwd.3} parent=11 // pred_check
          %p449 = pneg %p160
        $region30: #{fwd.3} parent=11 // pred_check_branch
          %451 = sbr.rel (%p449) target = $region32
        $region31: #{fwd.3} parent=11 // pred_region
          _
        $region32: #{fwd.3} parent=11 // pred_fallthru
          _
        // Predicated region
        $region33: #{fwd.3} parent=11 // pred_check
          %p452 = pneg %p181
        $region34: #{fwd.3} parent=11 // pred_check_branch
          %454 = sbr.rel (%p452) target = $region36
        $region35: #{fwd.3} parent=11 // pred_region
          _
        $region36: #{fwd.3} parent=11 // pred_fallthru
          _
        // Predicated region
        $region37: #{fwd.3} parent=11 // pred_check
          %p455 = pneg %p202
        $region38: #{fwd.3} parent=11 // pred_check_branch
          %457 = sbr.rel (%p455) target = $region40
        $region39: #{fwd.3} parent=11 // pred_region
          _
        $region40: #{fwd.3} parent=11 // pred_fallthru
          _
        // Predicated region
        $region41: #{fwd.3} parent=11 // pred_check
          %p458 = pneg %p223
        $region42: #{fwd.3} parent=11 // pred_check_branch
          %460 = sbr.rel (%p458) target = $region44
        $region43: #{fwd.3} parent=11 // pred_region
          _
        $region44: #{fwd.3} parent=11 // pred_fallthru
          _
        // Predicated region
        $region45: #{fwd.3} parent=11 // pred_check
          %p461 = pneg %p244
        $region46: #{fwd.3} parent=11 // pred_check_branch
          %463 = sbr.rel (%p461) target = $region48
        $region47: #{fwd.3} parent=11 // pred_region
          _
        $region48: #{fwd.3} parent=11 // pred_fallthru
          _
        // Predicated region
        $region49: #{fwd.3} parent=11 // pred_check
          %p464 = pneg %p265
        $region50: #{fwd.3} parent=11 // pred_check_branch
          %466 = sbr.rel (%p464) target = $region52
        $region51: #{fwd.3} parent=11 // pred_region
          _
        $region52: #{fwd.3} parent=11 // pred_fallthru
          _
        // Predicated region
        $region53: #{fwd.3} parent=11 // pred_check
          %p467 = pneg %p286
        $region54: #{fwd.3} parent=11 // pred_check_branch
          %469 = sbr.rel (%p467) target = $region56
        $region55: #{fwd.3} parent=11 // pred_region
          _
        $region56: #{fwd.3} parent=11 // pred_fallthru
          _
        // Predicated region
        $region57: #{fwd.3} parent=11 // pred_check
          %p470 = pneg %p307
        $region58: #{fwd.3} parent=11 // pred_check_branch
          %472 = sbr.rel (%p470) target = $region60
        $region59: #{fwd.3} parent=11 // pred_region
          _
        $region60: #{fwd.3} parent=11 // pred_fallthru
          _
        // Predicated region
        $region61: #{fwd.3} parent=11 // pred_check
          %p473 = pneg %p328
        $region62: #{fwd.3} parent=11 // pred_check_branch
          %475 = sbr.rel (%p473) target = $region64
        $region63: #{fwd.3} parent=11 // pred_region
          _
        $region64: #{fwd.3} parent=11 // pred_fallthru
          _
        // Predicated region
        $region65: #{fwd.3} parent=11 // pred_check
          %p476 = pneg %p349
        $region66: #{fwd.3} parent=11 // pred_check_branch
          %478 = sbr.rel (%p476) target = $region68
        $region67: #{fwd.3} parent=11 // pred_region
          _
        $region68: #{fwd.3} parent=11 // pred_fallthru
          _
        // Predicated region
        $region69: #{fwd.3} parent=11 // pred_check
          %p479 = pneg %p370
        $region70: #{fwd.3} parent=11 // pred_check_branch
          %481 = sbr.rel (%p479) target = $region72
        $region71: #{fwd.3} parent=11 // pred_region
          _
        $region72: #{fwd.3} parent=11 // pred_fallthru
          _
      $region12: #{fwd.3} parent=5 // pred_fallthru
        _
      %p482 = scmp.lt.s32.totalorder %s29, 2
      // Predicated region
      $region73: #{fwd.3} parent=5 // pred_check
        %p483 = pneg %p482
      $region74: #{fwd.3} parent=5 // pred_check_branch
        %485 = sbr.rel (%p483) target = $region76
      $region75: #{fwd.3} parent=5 // pred_region
        // Predicated region
        $region77: #{fwd.3} parent=75 // pred_check
          %p486 = pneg %p49
        $region78: #{fwd.3} parent=75 // pred_check_branch
          %488 = sbr.rel (%p486) target = $region80
        $region79: #{fwd.3} parent=75 // pred_region
          %p489 = scmp.lt.s32.totalorder %s29, 1
          %s490 = scalar_select %p489, %s29, 1
          %s491 = smul.addr %s490, 32
          %s492 = smul.addr %s491, 8
          %s493 = scalar_lea.vmem %s0, %s492
        $region80: #{fwd.3} parent=75 // pred_fallthru
          _
      $region76: #{fwd.3} parent=5 // pred_fallthru
        _
      %p494 = scmp.le.s32.totalorder 1, %s29
      %p495 = scmp.lt.s32.totalorder %s29, 3
      %p496 = pnand %p494, %p495
      %p497 = pneg %p496
      // Predicated region
      $region81: #{fwd.3} parent=5 // pred_check
        _
      $region82: #{fwd.3} parent=5 // pred_check_branch
        %499 = sbr.rel (%p496) target = $region84
      $region83: #{fwd.3} parent=5 // pred_region
        %s500 = ssub.s32 %s29, 1
        %p501 = scmp.lt.s32.totalorder %s34, 1
        %s502 = scalar_select %p501, %s34, 1
        %s503 = smul.addr %s502, 32
        %s504 = smul.addr %s503, 8
        %s505 = scalar_lea.vmem %s0, %s504
        %p506 = pneg %p55
        %p507 = pneg %p52
        %p508 = pneg %p76
        %p509 = pneg %p73
        %p510 = pneg %p97
        %p511 = pneg %p94
        %p512 = pneg %p118
        %p513 = pneg %p115
        %p514 = pneg %p139
        %p515 = pneg %p136
        %p516 = pneg %p160
        %p517 = pneg %p157
        %p518 = pneg %p181
        %p519 = pneg %p178
        %p520 = pneg %p202
        %p521 = pneg %p199
        %p522 = pneg %p223
        %p523 = pneg %p220
        %p524 = pneg %p244
        %p525 = pneg %p241
        %p526 = pneg %p265
        %p527 = pneg %p262
        %p528 = pneg %p286
        %p529 = pneg %p283
        %p530 = pneg %p307
        %p531 = pneg %p304
        %p532 = pneg %p328
        %p533 = pneg %p325
        %p534 = pneg %p349
        %p535 = pneg %p346
        %p536 = pneg %p370
        %p537 = pneg %p367
        %p538 = pneg %p396
        %p539 = pneg %p393
        %p540 = scmp.lt.s32.totalorder %s34, 1
        %s541 = scalar_select %p540, %s34, 1
        %s542 = smul.addr %s541, 4
        %s543 = scalar_lea.vmem %s16, %s542
        %p544 = pneg %p422
        %p545 = pneg %p419
        %s546 = sand.u32 %s409, 1
        %s547 = scalar_lea.sflag [#allocation4], %s546
        %s548 = sand.u32 %s409, 1
        %s549 = smul.addr %s548, 8
        %s550 = scalar_lea.vmem [#allocation3], %s549
        %p551 = scmp.lt.s32.totalorder %s34, 1
        %s552 = scalar_select %p551, %s34, 1
        %s553 = smul.addr %s552, 32
        %s554 = smul.addr %s553, 8
        %s555 = scalar_lea.vmem %s0, %s554
        %p556 = scmp.lt.s32.totalorder %s34, 1
        %s557 = scalar_select %p556, %s34, 1
        %s558 = smul.addr %s557, 4
        %s559 = scalar_lea.vmem %s16, %s558
        %v560 = vld [vmem:[%s555] sm:$0xff]
        %v561 = vld [vmem:[%s555 + $0x8] sm:$0xff]
        %v562 = vld [vmem:[%s555 + $0x10] sm:$0xff]
        %v563 = vld [vmem:[%s555 + $0x18] sm:$0xff]
        %v564 = vld [vmem:[%s555 + $0x20] sm:$0xff]
        %v565 = vld [vmem:[%s555 + $0x28] sm:$0xff]
        %v566 = vld [vmem:[%s555 + $0x30] sm:$0xff]
        %v567 = vld [vmem:[%s555 + $0x38] sm:$0xff]
        %v568 = vld [vmem:[%s555 + $0x40] sm:$0xff]
        %v569 = vld [vmem:[%s555 + $0x48] sm:$0xff]
        %v570 = vld [vmem:[%s555 + $0x50] sm:$0xff]
        %v571 = vld [vmem:[%s555 + $0x58] sm:$0xff]
        %v572 = vld [vmem:[%s555 + $0x60] sm:$0xff]
        %v573 = vld [vmem:[%s555 + $0x68] sm:$0xff]
        %v574 = vld [vmem:[%s555 + $0x70] sm:$0xff]
        %v575 = vld [vmem:[%s555 + $0x78] sm:$0xff]
        %v576 = vld [vmem:[%s555 + $0x80] sm:$0xff]
        %v577 = vld [vmem:[%s555 + $0x88] sm:$0xff]
        %v578 = vld [vmem:[%s555 + $0x90] sm:$0xff]
        %v579 = vld [vmem:[%s555 + $0x98] sm:$0xff]
        %v580 = vld [vmem:[%s555 + $0xa0] sm:$0xff]
        %v581 = vld [vmem:[%s555 + $0xa8] sm:$0xff]
        %v582 = vld [vmem:[%s555 + $0xb0] sm:$0xff]
        %v583 = vld [vmem:[%s555 + $0xb8] sm:$0xff]
        %v584 = vld [vmem:[%s555 + $0xc0] sm:$0xff]
        %v585 = vld [vmem:[%s555 + $0xc8] sm:$0xff]
        %v586 = vld [vmem:[%s555 + $0xd0] sm:$0xff]
        %v587 = vld [vmem:[%s555 + $0xd8] sm:$0xff]
        %v588 = vld [vmem:[%s555 + $0xe0] sm:$0xff]
        %v589 = vld [vmem:[%s555 + $0xe8] sm:$0xff]
        %v590 = vld [vmem:[%s555 + $0xf0] sm:$0xff]
        %v591 = vld [vmem:[%s555 + $0xf8] sm:$0xff]
        %v592 = vld [vmem:[%s2] sm:$0xf]
        %v593 = vld [vmem:[%s3] sm:$0x1]
        %v595 = vlaneseq
        %v596 = vshrl.u32 %v595, 7
        %v597 = vsub.s32 0, %v596
        %v598 = vrot.slane %v593, %v597
        %vm600 = vcmask 31744
        %v602 = vsel %vm600, %v560, 0
        %v605 = vsel %vm600, %v561, 0
        %v608 = vsel %vm600, %v562, 0
        %v611 = vsel %vm600, %v563, 0
        %v614 = vsel %vm600, %v564, 0
        %v617 = vsel %vm600, %v565, 0
        %v620 = vsel %vm600, %v566, 0
        %v623 = vsel %vm600, %v567, 0
        %v626 = vsel %vm600, %v568, 0
        %v629 = vsel %vm600, %v569, 0
        %v632 = vsel %vm600, %v570, 0
        %v635 = vsel %vm600, %v571, 0
        %v638 = vsel %vm600, %v572, 0
        %v641 = vsel %vm600, %v573, 0
        %v644 = vsel %vm600, %v574, 0
        %v647 = vsel %vm600, %v575, 0
        %v650 = vsel %vm600, %v576, 0
        %v653 = vsel %vm600, %v577, 0
        %v656 = vsel %vm600, %v578, 0
        %v659 = vsel %vm600, %v579, 0
        %v662 = vsel %vm600, %v580, 0
        %v665 = vsel %vm600, %v581, 0
        %v668 = vsel %vm600, %v582, 0
        %v671 = vsel %vm600, %v583, 0
        %v674 = vsel %vm600, %v584, 0
        %v677 = vsel %vm600, %v585, 0
        %v680 = vsel %vm600, %v586, 0
        %v683 = vsel %vm600, %v587, 0
        %v686 = vsel %vm600, %v588, 0
        %v689 = vsel %vm600, %v589, 0
        %v692 = vsel %vm600, %v590, 0
        %v695 = vsel %vm600, %v591, 0
        %vm697 = vcmask 1043456
        %v699 = vsel %vm697, %v592, 0
        %701 = vmatprep.subr.mxu0 0.0
        %702 = vmatpush1.msra.mxu0 0.0
        %703 = vmatprep.subr.mxu0 0.0
        %704 = vmatpush1.msra.mxu0 0.0
        %705 = vmatprep.subr.mxu0 0.0
        %706 = vmatpush1.msra.mxu0 0.0
        %707 = vmatprep.subr.mxu0 0.0
        %708 = vmatpush1.msra.mxu0 0.0
        %709 = vmatprep.subr.mxu0 0.0
        %710 = vmatpush1.msra.mxu0 0.0
        %711 = vmatprep.subr.mxu0 0.0
        %712 = vmatpush1.msra.mxu0 0.0
        %713 = vmatprep.subr.mxu0 0.0
        %714 = vmatpush1.msra.mxu0 0.0
        %715 = vmatprep.subr.mxu0 0.0
        %716 = vmatpush1.msra.mxu0 0.0
        %717 = vmatprep.subr.mxu0 0.0
        %718 = vmatpush1.msra.mxu0 0.0
        %719 = vmatprep.subr.mxu0 0.0
        %720 = vmatpush1.msra.mxu0 0.0
        %721 = vmatprep.subr.mxu0 0.0
        %722 = vmatpush1.msra.mxu0 0.0
        %723 = vmatprep.subr.mxu0 0.0
        %724 = vmatpush1.msra.mxu0 0.0
        %725 = vmatprep.subr.mxu0 0.0
        %726 = vmatpush1.msra.mxu0 0.0
        %727 = vmatprep.subr.mxu0 0.0
        %728 = vmatpush1.msra.mxu0 0.0
        %729 = vmatprep.subr.mxu0 0.0
        %730 = vmatpush1.msra.mxu0 0.0
        %731 = vmatprep.subr.mxu0 0.0
        %732 = vmatpush1.msra.mxu0 %v699
        %733 = vmatprep.subr.mxu0 0.0
        %734 = vmatpush2.msra.mxu0 0.0
        %735 = vmatprep.subr.mxu0 0.0
        %736 = vmatpush2.msra.mxu0 0.0
        %737 = vmatprep.subr.mxu0 0.0
        %738 = vmatpush2.msra.mxu0 0.0
        %739 = vmatprep.subr.mxu0 0.0
        %740 = vmatpush2.msra.mxu0 0.0
        %741 = vmatprep.subr.mxu0 0.0
        %742 = vmatpush2.msra.mxu0 0.0
        %743 = vmatprep.subr.mxu0 0.0
        %744 = vmatpush2.msra.mxu0 0.0
        %745 = vmatprep.subr.mxu0 0.0
        %746 = vmatpush2.msra.mxu0 0.0
        %747 = vmatprep.subr.mxu0 0.0
        %748 = vmatpush2.msra.mxu0 0.0
        %749 = vmatprep.subr.mxu0 0.0
        %750 = vmatpush2.msra.mxu0 0.0
        %751 = vmatprep.subr.mxu0 0.0
        %752 = vmatpush2.msra.mxu0 0.0
        %753 = vmatprep.subr.mxu0 0.0
        %754 = vmatpush2.msra.mxu0 0.0
        %755 = vmatprep.subr.mxu0 0.0
        %756 = vmatpush2.msra.mxu0 0.0
        %757 = vmatprep.subr.mxu0 0.0
        %758 = vmatpush2.msra.mxu0 0.0
        %759 = vmatprep.subr.mxu0 0.0
        %760 = vmatpush2.msra.mxu0 0.0
        %761 = vmatprep.subr.mxu0 0.0
        %762 = vmatpush2.msra.mxu0 0.0
        %763 = vmatprep.subr.mxu0 0.0
        %764 = vmatpush2.msra.mxu0 0.0
        %765 = vmatprep.mubr.f32.mxu0 0.0
        %766 = vmatmul.mubr.f32.gmra.mxu0 %v602
        %v767 = vpop.f32.mrf.mxu0
        %v768 = vadd.f32 %v598, %v767
        %v769 = vpop.f32.mrf.mxu0
        %770 = vmatprep.mubr.f32.mxu0 0.0
        %771 = vmatmul.mubr.f32.gmra.mxu0 %v605
        %v772 = vpop.f32.mrf.mxu0
        %v773 = vadd.f32 %v598, %v772
        %v774 = vpop.f32.mrf.mxu0
        %775 = vmatprep.mubr.f32.mxu0 0.0
        %776 = vmatmul.mubr.f32.gmra.mxu0 %v608
        %v777 = vpop.f32.mrf.mxu0
        %v778 = vadd.f32 %v598, %v777
        %v779 = vpop.f32.mrf.mxu0
        %780 = vmatprep.mubr.f32.mxu0 0.0
        %781 = vmatmul.mubr.f32.gmra.mxu0 %v611
        %v782 = vpop.f32.mrf.mxu0
        %v783 = vadd.f32 %v598, %v782
        %v784 = vpop.f32.mrf.mxu0
        %785 = vmatprep.mubr.f32.mxu0 0.0
        %786 = vmatmul.mubr.f32.gmra.mxu0 %v614
        %v787 = vpop.f32.mrf.mxu0
        %v788 = vadd.f32 %v598, %v787
        %v789 = vpop.f32.mrf.mxu0
        %790 = vmatprep.mubr.f32.mxu0 0.0
        %791 = vmatmul.mubr.f32.gmra.mxu0 %v617
        %v792 = vpop.f32.mrf.mxu0
        %v793 = vadd.f32 %v598, %v792
        %v794 = vpop.f32.mrf.mxu0
        %795 = vmatprep.mubr.f32.mxu0 0.0
        %796 = vmatmul.mubr.f32.gmra.mxu0 %v620
        %v797 = vpop.f32.mrf.mxu0
        %v798 = vadd.f32 %v598, %v797
        %v799 = vpop.f32.mrf.mxu0
        %800 = vmatprep.mubr.f32.mxu0 0.0
        %801 = vmatmul.mubr.f32.gmra.mxu0 %v623
        %v802 = vpop.f32.mrf.mxu0
        %v803 = vadd.f32 %v598, %v802
        %v804 = vpop.f32.mrf.mxu0
        %805 = vmatprep.mubr.f32.mxu0 0.0
        %806 = vmatmul.mubr.f32.gmra.mxu0 %v626
        %v807 = vpop.f32.mrf.mxu0
        %v808 = vadd.f32 %v598, %v807
        %v809 = vpop.f32.mrf.mxu0
        %810 = vmatprep.mubr.f32.mxu0 0.0
        %811 = vmatmul.mubr.f32.gmra.mxu0 %v629
        %v812 = vpop.f32.mrf.mxu0
        %v813 = vadd.f32 %v598, %v812
        %v814 = vpop.f32.mrf.mxu0
        %815 = vmatprep.mubr.f32.mxu0 0.0
        %816 = vmatmul.mubr.f32.gmra.mxu0 %v632
        %v817 = vpop.f32.mrf.mxu0
        %v818 = vadd.f32 %v598, %v817
        %v819 = vpop.f32.mrf.mxu0
        %820 = vmatprep.mubr.f32.mxu0 0.0
        %821 = vmatmul.mubr.f32.gmra.mxu0 %v635
        %v822 = vpop.f32.mrf.mxu0
        %v823 = vadd.f32 %v598, %v822
        %v824 = vpop.f32.mrf.mxu0
        %825 = vmatprep.mubr.f32.mxu0 0.0
        %826 = vmatmul.mubr.f32.gmra.mxu0 %v638
        %v827 = vpop.f32.mrf.mxu0
        %v828 = vadd.f32 %v598, %v827
        %v829 = vpop.f32.mrf.mxu0
        %830 = vmatprep.mubr.f32.mxu0 0.0
        %831 = vmatmul.mubr.f32.gmra.mxu0 %v641
        %v832 = vpop.f32.mrf.mxu0
        %v833 = vadd.f32 %v598, %v832
        %v834 = vpop.f32.mrf.mxu0
        %835 = vmatprep.mubr.f32.mxu0 0.0
        %836 = vmatmul.mubr.f32.gmra.mxu0 %v644
        %v837 = vpop.f32.mrf.mxu0
        %v838 = vadd.f32 %v598, %v837
        %v839 = vpop.f32.mrf.mxu0
        %840 = vmatprep.mubr.f32.mxu0 0.0
        %841 = vmatmul.mubr.f32.gmra.mxu0 %v647
        %v842 = vpop.f32.mrf.mxu0
        %v843 = vadd.f32 %v598, %v842
        %v844 = vpop.f32.mrf.mxu0
        %845 = vmatprep.mubr.f32.mxu0 0.0
        %846 = vmatmul.mubr.f32.gmra.mxu0 %v650
        %v847 = vpop.f32.mrf.mxu0
        %v848 = vadd.f32 %v598, %v847
        %v849 = vpop.f32.mrf.mxu0
        %850 = vmatprep.mubr.f32.mxu0 0.0
        %851 = vmatmul.mubr.f32.gmra.mxu0 %v653
        %v852 = vpop.f32.mrf.mxu0
        %v853 = vadd.f32 %v598, %v852
        %v854 = vpop.f32.mrf.mxu0
        %855 = vmatprep.mubr.f32.mxu0 0.0
        %856 = vmatmul.mubr.f32.gmra.mxu0 %v656
        %v857 = vpop.f32.mrf.mxu0
        %v858 = vadd.f32 %v598, %v857
        %v859 = vpop.f32.mrf.mxu0
        %860 = vmatprep.mubr.f32.mxu0 0.0
        %861 = vmatmul.mubr.f32.gmra.mxu0 %v659
        %v862 = vpop.f32.mrf.mxu0
        %v863 = vadd.f32 %v598, %v862
        %v864 = vpop.f32.mrf.mxu0
        %865 = vmatprep.mubr.f32.mxu0 0.0
        %866 = vmatmul.mubr.f32.gmra.mxu0 %v662
        %v867 = vpop.f32.mrf.mxu0
        %v868 = vadd.f32 %v598, %v867
        %v869 = vpop.f32.mrf.mxu0
        %870 = vmatprep.mubr.f32.mxu0 0.0
        %871 = vmatmul.mubr.f32.gmra.mxu0 %v665
        %v872 = vpop.f32.mrf.mxu0
        %v873 = vadd.f32 %v598, %v872
        %v874 = vpop.f32.mrf.mxu0
        %875 = vmatprep.mubr.f32.mxu0 0.0
        %876 = vmatmul.mubr.f32.gmra.mxu0 %v668
        %v877 = vpop.f32.mrf.mxu0
        %v878 = vadd.f32 %v598, %v877
        %v879 = vpop.f32.mrf.mxu0
        %880 = vmatprep.mubr.f32.mxu0 0.0
        %881 = vmatmul.mubr.f32.gmra.mxu0 %v671
        %v882 = vpop.f32.mrf.mxu0
        %v883 = vadd.f32 %v598, %v882
        %v884 = vpop.f32.mrf.mxu0
        %885 = vmatprep.mubr.f32.mxu0 0.0
        %886 = vmatmul.mubr.f32.gmra.mxu0 %v674
        %v887 = vpop.f32.mrf.mxu0
        %v888 = vadd.f32 %v598, %v887
        %v889 = vpop.f32.mrf.mxu0
        %890 = vmatprep.mubr.f32.mxu0 0.0
        %891 = vmatmul.mubr.f32.gmra.mxu0 %v677
        %v892 = vpop.f32.mrf.mxu0
        %v893 = vadd.f32 %v598, %v892
        %v894 = vpop.f32.mrf.mxu0
        %895 = vmatprep.mubr.f32.mxu0 0.0
        %896 = vmatmul.mubr.f32.gmra.mxu0 %v680
        %v897 = vpop.f32.mrf.mxu0
        %v898 = vadd.f32 %v598, %v897
        %v899 = vpop.f32.mrf.mxu0
        %900 = vmatprep.mubr.f32.mxu0 0.0
        %901 = vmatmul.mubr.f32.gmra.mxu0 %v683
        %v902 = vpop.f32.mrf.mxu0
        %v903 = vadd.f32 %v598, %v902
        %v904 = vpop.f32.mrf.mxu0
        %905 = vmatprep.mubr.f32.mxu0 0.0
        %906 = vmatmul.mubr.f32.gmra.mxu0 %v686
        %v907 = vpop.f32.mrf.mxu0
        %v908 = vadd.f32 %v598, %v907
        %v909 = vpop.f32.mrf.mxu0
        %910 = vmatprep.mubr.f32.mxu0 0.0
        %911 = vmatmul.mubr.f32.gmra.mxu0 %v689
        %v912 = vpop.f32.mrf.mxu0
        %v913 = vadd.f32 %v598, %v912
        %v914 = vpop.f32.mrf.mxu0
        %915 = vmatprep.mubr.f32.mxu0 0.0
        %916 = vmatmul.mubr.f32.gmra.mxu0 %v692
        %v917 = vpop.f32.mrf.mxu0
        %v918 = vadd.f32 %v598, %v917
        %v919 = vpop.f32.mrf.mxu0
        %920 = vmatprep.mubr.f32.mxu0 0.0
        %921 = vmatmul.mubr.f32.gmra.mxu0 %v695
        %v922 = vpop.f32.mrf.mxu0
        %v923 = vadd.f32 %v598, %v922
        %v924 = vpop.f32.mrf.mxu0
        %925 = vdwg.mxu0
        %v926 = vmax.f32 %v768, 0.0
        %v927 = vmax.f32 %v773, 0.0
        %v928 = vmax.f32 %v778, 0.0
        %v929 = vmax.f32 %v783, 0.0
        %v930 = vmax.f32 %v788, 0.0
        %v931 = vmax.f32 %v793, 0.0
        %v932 = vmax.f32 %v798, 0.0
        %v933 = vmax.f32 %v803, 0.0
        %v934 = vmax.f32 %v808, 0.0
        %v935 = vmax.f32 %v813, 0.0
        %v936 = vmax.f32 %v818, 0.0
        %v937 = vmax.f32 %v823, 0.0
        %v938 = vmax.f32 %v828, 0.0
        %v939 = vmax.f32 %v833, 0.0
        %v940 = vmax.f32 %v838, 0.0
        %v941 = vmax.f32 %v843, 0.0
        %v942 = vmax.f32 %v848, 0.0
        %v943 = vmax.f32 %v853, 0.0
        %v944 = vmax.f32 %v858, 0.0
        %v945 = vmax.f32 %v863, 0.0
        %v946 = vmax.f32 %v868, 0.0
        %v947 = vmax.f32 %v873, 0.0
        %v948 = vmax.f32 %v878, 0.0
        %v949 = vmax.f32 %v883, 0.0
        %v950 = vmax.f32 %v888, 0.0
        %v951 = vmax.f32 %v893, 0.0
        %v952 = vmax.f32 %v898, 0.0
        %v953 = vmax.f32 %v903, 0.0
        %v954 = vmax.f32 %v908, 0.0
        %v955 = vmax.f32 %v913, 0.0
        %v956 = vmax.f32 %v918, 0.0
        %v957 = vmax.f32 %v923, 0.0
        %vm958 = vcmask 261120
        %v959 = vsel %vm958, %v926, 0.0
        %v960 = vsel %vm958, %v927, 0.0
        %v961 = vadd.f32 %v959, %v960
        %v962 = vsel %vm958, %v928, 0.0
        %v963 = vadd.f32 %v961, %v962
        %v964 = vsel %vm958, %v929, 0.0
        %v965 = vadd.f32 %v963, %v964
        %v966 = vsel %vm958, %v930, 0.0
        %v967 = vadd.f32 %v965, %v966
        %v968 = vsel %vm958, %v931, 0.0
        %v969 = vadd.f32 %v967, %v968
        %v970 = vsel %vm958, %v932, 0.0
        %v971 = vadd.f32 %v969, %v970
        %v972 = vsel %vm958, %v933, 0.0
        %v973 = vadd.f32 %v971, %v972
        %v974 = vsel %vm958, %v934, 0.0
        %v975 = vadd.f32 %v973, %v974
        %v976 = vsel %vm958, %v935, 0.0
        %v977 = vadd.f32 %v975, %v976
        %v978 = vsel %vm958, %v936, 0.0
        %v979 = vadd.f32 %v977, %v978
        %v980 = vsel %vm958, %v937, 0.0
        %v981 = vadd.f32 %v979, %v980
        %v982 = vsel %vm958, %v938, 0.0
        %v983 = vadd.f32 %v981, %v982
        %v984 = vsel %vm958, %v939, 0.0
        %v985 = vadd.f32 %v983, %v984
        %v986 = vsel %vm958, %v940, 0.0
        %v987 = vadd.f32 %v985, %v986
        %v988 = vsel %vm958, %v941, 0.0
        %v989 = vadd.f32 %v987, %v988
        %v990 = vsel %vm958, %v942, 0.0
        %v991 = vadd.f32 %v989, %v990
        %v992 = vsel %vm958, %v943, 0.0
        %v993 = vadd.f32 %v991, %v992
        %v994 = vsel %vm958, %v944, 0.0
        %v995 = vadd.f32 %v993, %v994
        %v996 = vsel %vm958, %v945, 0.0
        %v997 = vadd.f32 %v995, %v996
        %v998 = vsel %vm958, %v946, 0.0
        %v999 = vadd.f32 %v997, %v998
        %v1000 = vsel %vm958, %v947, 0.0
        %v1001 = vadd.f32 %v999, %v1000
        %v1002 = vsel %vm958, %v948, 0.0
        %v1003 = vadd.f32 %v1001, %v1002
        %v1004 = vsel %vm958, %v949, 0.0
        %v1005 = vadd.f32 %v1003, %v1004
        %v1006 = vsel %vm958, %v950, 0.0
        %v1007 = vadd.f32 %v1005, %v1006
        %v1008 = vsel %vm958, %v951, 0.0
        %v1009 = vadd.f32 %v1007, %v1008
        %v1010 = vsel %vm958, %v952, 0.0
        %v1011 = vadd.f32 %v1009, %v1010
        %v1012 = vsel %vm958, %v953, 0.0
        %v1013 = vadd.f32 %v1011, %v1012
        %v1014 = vsel %vm958, %v954, 0.0
        %v1015 = vadd.f32 %v1013, %v1014
        %v1016 = vsel %vm958, %v955, 0.0
        %v1017 = vadd.f32 %v1015, %v1016
        %v1018 = vsel %vm958, %v956, 0.0
        %v1019 = vadd.f32 %v1017, %v1018
        %v1020 = vsel %vm958, %v957, 0.0
        %v1021 = vadd.f32 %v1019, %v1020
        %v1022 = vrot.slane %v1021, 4
        %v1023 = vadd.f32 %v1021, %v1022
        %v1024 = vrot.slane %v1023, 2
        %v1025 = vadd.f32 %v1023, %v1024
        %v1026 = vrot.slane %v1025, 1
        %v1027 = vadd.f32 %v1025, %v1026
        %v1028 = vrcp.pop 256.0
        %v1029 = vmul.f32 %v1027, %v1028
        %v1030 = vsel %vm958, %v926, -inf
        %v1031 = vsel %vm958, %v927, -inf
        %v1032 = vsel %vm958, %v928, -inf
        %v1033 = vsel %vm958, %v929, -inf
        %v1034 = vsel %vm958, %v930, -inf
        %v1035 = vmax.f32 %v1030, %v1034
        %v1036 = vsel %vm958, %v931, -inf
        %v1037 = vmax.f32 %v1031, %v1036
        %v1038 = vsel %vm958, %v932, -inf
        %v1039 = vmax.f32 %v1032, %v1038
        %v1040 = vsel %vm958, %v933, -inf
        %v1041 = vmax.f32 %v1033, %v1040
        %v1042 = vsel %vm958, %v934, -inf
        %v1043 = vmax.f32 %v1035, %v1042
        %v1044 = vsel %vm958, %v935, -inf
        %v1045 = vmax.f32 %v1037, %v1044
        %v1046 = vsel %vm958, %v936, -inf
        %v1047 = vmax.f32 %v1039, %v1046
        %v1048 = vsel %vm958, %v937, -inf
        %v1049 = vmax.f32 %v1041, %v1048
        %v1050 = vsel %vm958, %v938, -inf
        %v1051 = vmax.f32 %v1043, %v1050
        %v1052 = vsel %vm958, %v939, -inf
        %v1053 = vmax.f32 %v1045, %v1052
        %v1054 = vsel %vm958, %v940, -inf
        %v1055 = vmax.f32 %v1047, %v1054
        %v1056 = vsel %vm958, %v941, -inf
        %v1057 = vmax.f32 %v1049, %v1056
        %v1058 = vsel %vm958, %v942, -inf
        %v1059 = vmax.f32 %v1051, %v1058
        %v1060 = vsel %vm958, %v943, -inf
        %v1061 = vmax.f32 %v1053, %v1060
        %v1062 = vsel %vm958, %v944, -inf
        %v1063 = vmax.f32 %v1055, %v1062
        %v1064 = vsel %vm958, %v945, -inf
        %v1065 = vmax.f32 %v1057, %v1064
        %v1066 = vsel %vm958, %v946, -inf
        %v1067 = vmax.f32 %v1059, %v1066
        %v1068 = vsel %vm958, %v947, -inf
        %v1069 = vmax.f32 %v1061, %v1068
        %v1070 = vsel %vm958, %v948, -inf
        %v1071 = vmax.f32 %v1063, %v1070
        %v1072 = vsel %vm958, %v949, -inf
        %v1073 = vmax.f32 %v1065, %v1072
        %v1074 = vsel %vm958, %v950, -inf
        %v1075 = vmax.f32 %v1067, %v1074
        %v1076 = vsel %vm958, %v951, -inf
        %v1077 = vmax.f32 %v1069, %v1076
        %v1078 = vsel %vm958, %v952, -inf
        %v1079 = vmax.f32 %v1071, %v1078
        %v1080 = vsel %vm958, %v953, -inf
        %v1081 = vmax.f32 %v1073, %v1080
        %v1082 = vsel %vm958, %v954, -inf
        %v1083 = vmax.f32 %v1075, %v1082
        %v1084 = vsel %vm958, %v955, -inf
        %v1085 = vmax.f32 %v1077, %v1084
        %v1086 = vsel %vm958, %v956, -inf
        %v1087 = vmax.f32 %v1079, %v1086
        %v1088 = vsel %vm958, %v957, -inf
        %v1089 = vmax.f32 %v1081, %v1088
        %v1090 = vmax.f32 %v1083, %v1085
        %v1091 = vmax.f32 %v1087, %v1089
        %v1092 = vmax.f32 %v1090, %v1091
        %v1093 = vrot.slane %v1092, 4
        %v1094 = vmax.f32 %v1092, %v1093
        %v1095 = vrot.slane %v1094, 2
        %v1096 = vmax.f32 %v1094, %v1095
        %v1097 = vrot.slane %v1096, 1
        %v1098 = vmax.f32 %v1096, %v1097
        %v1099 = vld [vmem:[%s4] sm:$0xff]
        %v1100 = vld [vmem:[%s4 + $0x8] sm:$0xff]
        %v1101 = vld [vmem:[%s4 + $0x10] sm:$0xff]
        %v1102 = vld [vmem:[%s4 + $0x18] sm:$0xff]
        %v1103 = vld [vmem:[%s5] sm:$0x1]
        %v1105 = vsel %vm958, %v1029, 0
        %1107 = vmatprep.subr.mxu0 0.0
        %1108 = vmatpush1.msra.mxu0 0.0
        %1109 = vmatprep.subr.mxu0 0.0
        %1110 = vmatpush1.msra.mxu0 0.0
        %1111 = vmatprep.subr.mxu0 0.0
        %1112 = vmatpush1.msra.mxu0 0.0
        %1113 = vmatprep.subr.mxu0 0.0
        %1114 = vmatpush1.msra.mxu0 0.0
        %1115 = vmatprep.subr.mxu0 0.0
        %1116 = vmatpush1.msra.mxu0 0.0
        %1117 = vmatprep.subr.mxu0 0.0
        %1118 = vmatpush1.msra.mxu0 0.0
        %1119 = vmatprep.subr.mxu0 0.0
        %1120 = vmatpush1.msra.mxu0 0.0
        %1121 = vmatprep.subr.mxu0 0.0
        %1122 = vmatpush1.msra.mxu0 0.0
        %1123 = vmatprep.subr.mxu0 0.0
        %1124 = vmatpush1.msra.mxu0 0.0
        %1125 = vmatprep.subr.mxu0 0.0
        %1126 = vmatpush1.msra.mxu0 0.0
        %1127 = vmatprep.subr.mxu0 0.0
        %1128 = vmatpush1.msra.mxu0 0.0
        %1129 = vmatprep.subr.mxu0 0.0
        %1130 = vmatpush1.msra.mxu0 0.0
        %1131 = vmatprep.subr.mxu0 0.0
        %1132 = vmatpush1.msra.mxu0 %v1102
        %1133 = vmatprep.subr.mxu0 0.0
        %1134 = vmatpush1.msra.mxu0 %v1101
        %1135 = vmatprep.subr.mxu0 0.0
        %1136 = vmatpush1.msra.mxu0 %v1100
        %1137 = vmatprep.subr.mxu0 0.0
        %1138 = vmatpush1.msra.mxu0 %v1099
        %1139 = vmatprep.subr.mxu0 0.0
        %1140 = vmatpush2.msra.mxu0 0.0
        %1141 = vmatprep.subr.mxu0 0.0
        %1142 = vmatpush2.msra.mxu0 0.0
        %1143 = vmatprep.subr.mxu0 0.0
        %1144 = vmatpush2.msra.mxu0 0.0
        %1145 = vmatprep.subr.mxu0 0.0
        %1146 = vmatpush2.msra.mxu0 0.0
        %1147 = vmatprep.subr.mxu0 0.0
        %1148 = vmatpush2.msra.mxu0 0.0
        %1149 = vmatprep.subr.mxu0 0.0
        %1150 = vmatpush2.msra.mxu0 0.0
        %1151 = vmatprep.subr.mxu0 0.0
        %1152 = vmatpush2.msra.mxu0 0.0
        %1153 = vmatprep.subr.mxu0 0.0
        %1154 = vmatpush2.msra.mxu0 0.0
        %1155 = vmatprep.subr.mxu0 0.0
        %1156 = vmatpush2.msra.mxu0 0.0
        %1157 = vmatprep.subr.mxu0 0.0
        %1158 = vmatpush2.msra.mxu0 0.0
        %1159 = vmatprep.subr.mxu0 0.0
        %1160 = vmatpush2.msra.mxu0 0.0
        %1161 = vmatprep.subr.mxu0 0.0
        %1162 = vmatpush2.msra.mxu0 0.0
        %1163 = vmatprep.subr.mxu0 0.0
        %1164 = vmatpush2.msra.mxu0 0.0
        %1165 = vmatprep.subr.mxu0 0.0
        %1166 = vmatpush2.msra.mxu0 0.0
        %1167 = vmatprep.subr.mxu0 0.0
        %1168 = vmatpush2.msra.mxu0 0.0
        %1169 = vmatprep.subr.mxu0 0.0
        %1170 = vmatpush2.msra.mxu0 0.0
        %1171 = vmatprep.mubr.f32.mxu0 0.0
        %1172 = vmatmul.mubr.f32.gmra.mxu0 %v1105
        %v1173 = vpop.f32.mrf.mxu0
        %v1174 = vadd.f32 %v1103, %v1173
        %v1175 = vpop.f32.mrf.mxu0
        %1176 = vdwg.mxu0
        %v1177 = vmax.f32 %v1174, 0.0
        %v1178 = vld [vmem:[%s6] sm:$0xff]
        %v1179 = vld [vmem:[%s7] sm:$0x1]
        %vm1180 = vcmask 64512
        %v1182 = vsel %vm1180, %v1177, 0
        %1184 = vmatprep.subr.mxu0 0.0
        %1185 = vmatpush1.msra.mxu0 0.0
        %1186 = vmatprep.subr.mxu0 0.0
        %1187 = vmatpush1.msra.mxu0 0.0
        %1188 = vmatprep.subr.mxu0 0.0
        %1189 = vmatpush1.msra.mxu0 0.0
        %1190 = vmatprep.subr.mxu0 0.0
        %1191 = vmatpush1.msra.mxu0 0.0
        %1192 = vmatprep.subr.mxu0 0.0
        %1193 = vmatpush1.msra.mxu0 0.0
        %1194 = vmatprep.subr.mxu0 0.0
        %1195 = vmatpush1.msra.mxu0 0.0
        %1196 = vmatprep.subr.mxu0 0.0
        %1197 = vmatpush1.msra.mxu0 0.0
        %1198 = vmatprep.subr.mxu0 0.0
        %1199 = vmatpush1.msra.mxu0 0.0
        %1200 = vmatprep.subr.mxu0 0.0
        %1201 = vmatpush1.msra.mxu0 0.0
        %1202 = vmatprep.subr.mxu0 0.0
        %1203 = vmatpush1.msra.mxu0 0.0
        %1204 = vmatprep.subr.mxu0 0.0
        %1205 = vmatpush1.msra.mxu0 0.0
        %1206 = vmatprep.subr.mxu0 0.0
        %1207 = vmatpush1.msra.mxu0 0.0
        %1208 = vmatprep.subr.mxu0 0.0
        %1209 = vmatpush1.msra.mxu0 0.0
        %1210 = vmatprep.subr.mxu0 0.0
        %1211 = vmatpush1.msra.mxu0 0.0
        %1212 = vmatprep.subr.mxu0 0.0
        %1213 = vmatpush1.msra.mxu0 0.0
        %1214 = vmatprep.subr.mxu0 0.0
        %1215 = vmatpush1.msra.mxu0 %v1178
        %1216 = vmatprep.subr.mxu0 0.0
        %1217 = vmatpush2.msra.mxu0 0.0
        %1218 = vmatprep.subr.mxu0 0.0
        %1219 = vmatpush2.msra.mxu0 0.0
        %1220 = vmatprep.subr.mxu0 0.0
        %1221 = vmatpush2.msra.mxu0 0.0
        %1222 = vmatprep.subr.mxu0 0.0
        %1223 = vmatpush2.msra.mxu0 0.0
        %1224 = vmatprep.subr.mxu0 0.0
        %1225 = vmatpush2.msra.mxu0 0.0
        %1226 = vmatprep.subr.mxu0 0.0
        %1227 = vmatpush2.msra.mxu0 0.0
        %1228 = vmatprep.subr.mxu0 0.0
        %1229 = vmatpush2.msra.mxu0 0.0
        %1230 = vmatprep.subr.mxu0 0.0
        %1231 = vmatpush2.msra.mxu0 0.0
        %1232 = vmatprep.subr.mxu0 0.0
        %1233 = vmatpush2.msra.mxu0 0.0
        %1234 = vmatprep.subr.mxu0 0.0
        %1235 = vmatpush2.msra.mxu0 0.0
        %1236 = vmatprep.subr.mxu0 0.0
        %1237 = vmatpush2.msra.mxu0 0.0
        %1238 = vmatprep.subr.mxu0 0.0
        %1239 = vmatpush2.msra.mxu0 0.0
        %1240 = vmatprep.subr.mxu0 0.0
        %1241 = vmatpush2.msra.mxu0 0.0
        %1242 = vmatprep.subr.mxu0 0.0
        %1243 = vmatpush2.msra.mxu0 0.0
        %1244 = vmatprep.subr.mxu0 0.0
        %1245 = vmatpush2.msra.mxu0 0.0
        %1246 = vmatprep.subr.mxu0 0.0
        %1247 = vmatpush2.msra.mxu0 0.0
        %1248 = vmatprep.mubr.f32.mxu0 0.0
        %1249 = vmatmul.mubr.f32.gmra.mxu0 %v1182
        %v1250 = vpop.f32.mrf.mxu0
        %v1251 = vadd.f32 %v1179, %v1250
        %v1252 = vpop.f32.mrf.mxu0
        %1253 = vdwg.mxu0
        %v1255 = vsel %vm958, %v1098, 0
        %1257 = vmatprep.subr.mxu0 0.0
        %1258 = vmatpush1.msra.mxu0 0.0
        %1259 = vmatprep.subr.mxu0 0.0
        %1260 = vmatpush1.msra.mxu0 0.0
        %1261 = vmatprep.subr.mxu0 0.0
        %1262 = vmatpush1.msra.mxu0 0.0
        %1263 = vmatprep.subr.mxu0 0.0
        %1264 = vmatpush1.msra.mxu0 0.0
        %1265 = vmatprep.subr.mxu0 0.0
        %1266 = vmatpush1.msra.mxu0 0.0
        %1267 = vmatprep.subr.mxu0 0.0
        %1268 = vmatpush1.msra.mxu0 0.0
        %1269 = vmatprep.subr.mxu0 0.0
        %1270 = vmatpush1.msra.mxu0 0.0
        %1271 = vmatprep.subr.mxu0 0.0
        %1272 = vmatpush1.msra.mxu0 0.0
        %1273 = vmatprep.subr.mxu0 0.0
        %1274 = vmatpush1.msra.mxu0 0.0
        %1275 = vmatprep.subr.mxu0 0.0
        %1276 = vmatpush1.msra.mxu0 0.0
        %1277 = vmatprep.subr.mxu0 0.0
        %1278 = vmatpush1.msra.mxu0 0.0
        %1279 = vmatprep.subr.mxu0 0.0
        %1280 = vmatpush1.msra.mxu0 0.0
        %1281 = vmatprep.subr.mxu0 0.0
        %1282 = vmatpush1.msra.mxu0 %v1102
        %1283 = vmatprep.subr.mxu0 0.0
        %1284 = vmatpush1.msra.mxu0 %v1101
        %1285 = vmatprep.subr.mxu0 0.0
        %1286 = vmatpush1.msra.mxu0 %v1100
        %1287 = vmatprep.subr.mxu0 0.0
        %1288 = vmatpush1.msra.mxu0 %v1099
        %1289 = vmatprep.subr.mxu0 0.0
        %1290 = vmatpush2.msra.mxu0 0.0
        %1291 = vmatprep.subr.mxu0 0.0
        %1292 = vmatpush2.msra.mxu0 0.0
        %1293 = vmatprep.subr.mxu0 0.0
        %1294 = vmatpush2.msra.mxu0 0.0
        %1295 = vmatprep.subr.mxu0 0.0
        %1296 = vmatpush2.msra.mxu0 0.0
        %1297 = vmatprep.subr.mxu0 0.0
        %1298 = vmatpush2.msra.mxu0 0.0
        %1299 = vmatprep.subr.mxu0 0.0
        %1300 = vmatpush2.msra.mxu0 0.0
        %1301 = vmatprep.subr.mxu0 0.0
        %1302 = vmatpush2.msra.mxu0 0.0
        %1303 = vmatprep.subr.mxu0 0.0
        %1304 = vmatpush2.msra.mxu0 0.0
        %1305 = vmatprep.subr.mxu0 0.0
        %1306 = vmatpush2.msra.mxu0 0.0
        %1307 = vmatprep.subr.mxu0 0.0
        %1308 = vmatpush2.msra.mxu0 0.0
        %1309 = vmatprep.subr.mxu0 0.0
        %1310 = vmatpush2.msra.mxu0 0.0
        %1311 = vmatprep.subr.mxu0 0.0
        %1312 = vmatpush2.msra.mxu0 0.0
        %1313 = vmatprep.subr.mxu0 0.0
        %1314 = vmatpush2.msra.mxu0 0.0
        %1315 = vmatprep.subr.mxu0 0.0
        %1316 = vmatpush2.msra.mxu0 0.0
        %1317 = vmatprep.subr.mxu0 0.0
        %1318 = vmatpush2.msra.mxu0 0.0
        %1319 = vmatprep.subr.mxu0 0.0
        %1320 = vmatpush2.msra.mxu0 0.0
        %1321 = vmatprep.mubr.f32.mxu0 0.0
        %1322 = vmatmul.mubr.f32.gmra.mxu0 %v1255
        %v1323 = vpop.f32.mrf.mxu0
        %v1324 = vadd.f32 %v1103, %v1323
        %v1325 = vpop.f32.mrf.mxu0
        %1326 = vdwg.mxu0
        %v1327 = vmax.f32 %v1324, 0.0
        %v1329 = vsel %vm1180, %v1327, 0
        %1331 = vmatprep.subr.mxu0 0.0
        %1332 = vmatpush1.msra.mxu0 0.0
        %1333 = vmatprep.subr.mxu0 0.0
        %1334 = vmatpush1.msra.mxu0 0.0
        %1335 = vmatprep.subr.mxu0 0.0
        %1336 = vmatpush1.msra.mxu0 0.0
        %1337 = vmatprep.subr.mxu0 0.0
        %1338 = vmatpush1.msra.mxu0 0.0
        %1339 = vmatprep.subr.mxu0 0.0
        %1340 = vmatpush1.msra.mxu0 0.0
        %1341 = vmatprep.subr.mxu0 0.0
        %1342 = vmatpush1.msra.mxu0 0.0
        %1343 = vmatprep.subr.mxu0 0.0
        %1344 = vmatpush1.msra.mxu0 0.0
        %1345 = vmatprep.subr.mxu0 0.0
        %1346 = vmatpush1.msra.mxu0 0.0
        %1347 = vmatprep.subr.mxu0 0.0
        %1348 = vmatpush1.msra.mxu0 0.0
        %1349 = vmatprep.subr.mxu0 0.0
        %1350 = vmatpush1.msra.mxu0 0.0
        %1351 = vmatprep.subr.mxu0 0.0
        %1352 = vmatpush1.msra.mxu0 0.0
        %1353 = vmatprep.subr.mxu0 0.0
        %1354 = vmatpush1.msra.mxu0 0.0
        %1355 = vmatprep.subr.mxu0 0.0
        %1356 = vmatpush1.msra.mxu0 0.0
        %1357 = vmatprep.subr.mxu0 0.0
        %1358 = vmatpush1.msra.mxu0 0.0
        %1359 = vmatprep.subr.mxu0 0.0
        %1360 = vmatpush1.msra.mxu0 0.0
        %1361 = vmatprep.subr.mxu0 0.0
        %1362 = vmatpush1.msra.mxu0 %v1178
        %1363 = vmatprep.subr.mxu0 0.0
        %1364 = vmatpush2.msra.mxu0 0.0
        %1365 = vmatprep.subr.mxu0 0.0
        %1366 = vmatpush2.msra.mxu0 0.0
        %1367 = vmatprep.subr.mxu0 0.0
        %1368 = vmatpush2.msra.mxu0 0.0
        %1369 = vmatprep.subr.mxu0 0.0
        %1370 = vmatpush2.msra.mxu0 0.0
        %1371 = vmatprep.subr.mxu0 0.0
        %1372 = vmatpush2.msra.mxu0 0.0
        %1373 = vmatprep.subr.mxu0 0.0
        %1374 = vmatpush2.msra.mxu0 0.0
        %1375 = vmatprep.subr.mxu0 0.0
        %1376 = vmatpush2.msra.mxu0 0.0
        %1377 = vmatprep.subr.mxu0 0.0
        %1378 = vmatpush2.msra.mxu0 0.0
        %1379 = vmatprep.subr.mxu0 0.0
        %1380 = vmatpush2.msra.mxu0 0.0
        %1381 = vmatprep.subr.mxu0 0.0
        %1382 = vmatpush2.msra.mxu0 0.0
        %1383 = vmatprep.subr.mxu0 0.0
        %1384 = vmatpush2.msra.mxu0 0.0
        %1385 = vmatprep.subr.mxu0 0.0
        %1386 = vmatpush2.msra.mxu0 0.0
        %1387 = vmatprep.subr.mxu0 0.0
        %1388 = vmatpush2.msra.mxu0 0.0
        %1389 = vmatprep.subr.mxu0 0.0
        %1390 = vmatpush2.msra.mxu0 0.0
        %1391 = vmatprep.subr.mxu0 0.0
        %1392 = vmatpush2.msra.mxu0 0.0
        %1393 = vmatprep.subr.mxu0 0.0
        %1394 = vmatpush2.msra.mxu0 0.0
        %1395 = vmatprep.mubr.f32.mxu0 0.0
        %1396 = vmatmul.mubr.f32.gmra.mxu0 %v1329
        %v1397 = vpop.f32.mrf.mxu0
        %v1398 = vadd.f32 %v1179, %v1397
        %v1399 = vpop.f32.mrf.mxu0
        %1400 = vdwg.mxu0
        %v1401 = vadd.f32 %v1251, %v1398
        %v1402 = vxor.u32 %v1401, 2147483648
        %v1403 = vmul.f32 %v1402, 1.442695
        %v1404 = vpow.pop %v1403
        %v1405 = vadd.f32 %v1404, 1.0
        %v1406 = vrcp.pop %v1405
        %v1407 = vmul.f32 1.0, %v1406
        %v1408 = vlaneseq
        %v1409 = vshrl.u32 %v1408, 7
        %v1410 = vsub.s32 0, %v1409
        %v1411 = vrot.slane %v1407, %v1410
        %v1412 = vmul.f32 %v926, %v1411
        %v1413 = vmul.f32 %v927, %v1411
        %v1414 = vmul.f32 %v928, %v1411
        %v1415 = vmul.f32 %v929, %v1411
        %v1416 = vmul.f32 %v930, %v1411
        %v1417 = vmul.f32 %v931, %v1411
        %v1418 = vmul.f32 %v932, %v1411
        %v1419 = vmul.f32 %v933, %v1411
        %v1420 = vmul.f32 %v934, %v1411
        %v1421 = vmul.f32 %v935, %v1411
        %v1422 = vmul.f32 %v936, %v1411
        %v1423 = vmul.f32 %v937, %v1411
        %v1424 = vmul.f32 %v938, %v1411
        %v1425 = vmul.f32 %v939, %v1411
        %v1426 = vmul.f32 %v940, %v1411
        %v1427 = vmul.f32 %v941, %v1411
        %v1428 = vmul.f32 %v942, %v1411
        %v1429 = vmul.f32 %v943, %v1411
        %v1430 = vmul.f32 %v944, %v1411
        %v1431 = vmul.f32 %v945, %v1411
        %v1432 = vmul.f32 %v946, %v1411
        %v1433 = vmul.f32 %v947, %v1411
        %v1434 = vmul.f32 %v948, %v1411
        %v1435 = vmul.f32 %v949, %v1411
        %v1436 = vmul.f32 %v950, %v1411
        %v1437 = vmul.f32 %v951, %v1411
        %v1438 = vmul.f32 %v952, %v1411
        %v1439 = vmul.f32 %v953, %v1411
        %v1440 = vmul.f32 %v954, %v1411
        %v1441 = vmul.f32 %v955, %v1411
        %v1442 = vmul.f32 %v956, %v1411
        %v1443 = vmul.f32 %v957, %v1411
        %v1444 = vsel %vm958, %v1412, 0.0
        %1445 = vadd.xlane.f32.xlu0 %v1444
        %v1446 = vpop.xlane.xlu0 %1445
        %v1447 = vsel %vm958, %v1413, 0.0
        %1448 = vadd.xlane.f32.xlu0 %v1447
        %v1449 = vpop.xlane.xlu0 %1448
        %v1450 = vsel %vm958, %v1414, 0.0
        %1451 = vadd.xlane.f32.xlu0 %v1450
        %v1452 = vpop.xlane.xlu0 %1451
        %v1453 = vsel %vm958, %v1415, 0.0
        %1454 = vadd.xlane.f32.xlu0 %v1453
        %v1455 = vpop.xlane.xlu0 %1454
        %v1456 = vsel %vm958, %v1416, 0.0
        %1457 = vadd.xlane.f32.xlu0 %v1456
        %v1458 = vpop.xlane.xlu0 %1457
        %v1459 = vsel %vm958, %v1417, 0.0
        %1460 = vadd.xlane.f32.xlu0 %v1459
        %v1461 = vpop.xlane.xlu0 %1460
        %v1462 = vsel %vm958, %v1418, 0.0
        %1463 = vadd.xlane.f32.xlu0 %v1462
        %v1464 = vpop.xlane.xlu0 %1463
        %v1465 = vsel %vm958, %v1419, 0.0
        %1466 = vadd.xlane.f32.xlu0 %v1465
        %v1467 = vpop.xlane.xlu0 %1466
        %v1468 = vsel %vm958, %v1420, 0.0
        %1469 = vadd.xlane.f32.xlu0 %v1468
        %v1470 = vpop.xlane.xlu0 %1469
        %v1471 = vsel %vm958, %v1421, 0.0
        %1472 = vadd.xlane.f32.xlu0 %v1471
        %v1473 = vpop.xlane.xlu0 %1472
        %v1474 = vsel %vm958, %v1422, 0.0
        %1475 = vadd.xlane.f32.xlu0 %v1474
        %v1476 = vpop.xlane.xlu0 %1475
        %v1477 = vsel %vm958, %v1423, 0.0
        %1478 = vadd.xlane.f32.xlu0 %v1477
        %v1479 = vpop.xlane.xlu0 %1478
        %v1480 = vsel %vm958, %v1424, 0.0
        %1481 = vadd.xlane.f32.xlu0 %v1480
        %v1482 = vpop.xlane.xlu0 %1481
        %v1483 = vsel %vm958, %v1425, 0.0
        %1484 = vadd.xlane.f32.xlu0 %v1483
        %v1485 = vpop.xlane.xlu0 %1484
        %v1486 = vsel %vm958, %v1426, 0.0
        %1487 = vadd.xlane.f32.xlu0 %v1486
        %v1488 = vpop.xlane.xlu0 %1487
        %v1489 = vsel %vm958, %v1427, 0.0
        %1490 = vadd.xlane.f32.xlu0 %v1489
        %v1491 = vpop.xlane.xlu0 %1490
        %v1492 = vsel %vm958, %v1428, 0.0
        %1493 = vadd.xlane.f32.xlu0 %v1492
        %v1494 = vpop.xlane.xlu0 %1493
        %v1495 = vsel %vm958, %v1429, 0.0
        %1496 = vadd.xlane.f32.xlu0 %v1495
        %v1497 = vpop.xlane.xlu0 %1496
        %v1498 = vsel %vm958, %v1430, 0.0
        %1499 = vadd.xlane.f32.xlu0 %v1498
        %v1500 = vpop.xlane.xlu0 %1499
        %v1501 = vsel %vm958, %v1431, 0.0
        %1502 = vadd.xlane.f32.xlu0 %v1501
        %v1503 = vpop.xlane.xlu0 %1502
        %v1504 = vsel %vm958, %v1432, 0.0
        %1505 = vadd.xlane.f32.xlu0 %v1504
        %v1506 = vpop.xlane.xlu0 %1505
        %v1507 = vsel %vm958, %v1433, 0.0
        %1508 = vadd.xlane.f32.xlu0 %v1507
        %v1509 = vpop.xlane.xlu0 %1508
        %v1510 = vsel %vm958, %v1434, 0.0
        %1511 = vadd.xlane.f32.xlu0 %v1510
        %v1512 = vpop.xlane.xlu0 %1511
        %v1513 = vsel %vm958, %v1435, 0.0
        %1514 = vadd.xlane.f32.xlu0 %v1513
        %v1515 = vpop.xlane.xlu0 %1514
        %v1516 = vsel %vm958, %v1436, 0.0
        %1517 = vadd.xlane.f32.xlu0 %v1516
        %v1518 = vpop.xlane.xlu0 %1517
        %v1519 = vsel %vm958, %v1437, 0.0
        %1520 = vadd.xlane.f32.xlu0 %v1519
        %v1521 = vpop.xlane.xlu0 %1520
        %v1522 = vsel %vm958, %v1438, 0.0
        %1523 = vadd.xlane.f32.xlu0 %v1522
        %v1524 = vpop.xlane.xlu0 %1523
        %v1525 = vsel %vm958, %v1439, 0.0
        %1526 = vadd.xlane.f32.xlu0 %v1525
        %v1527 = vpop.xlane.xlu0 %1526
        %v1528 = vsel %vm958, %v1440, 0.0
        %1529 = vadd.xlane.f32.xlu0 %v1528
        %v1530 = vpop.xlane.xlu0 %1529
        %v1531 = vsel %vm958, %v1441, 0.0
        %1532 = vadd.xlane.f32.xlu0 %v1531
        %v1533 = vpop.xlane.xlu0 %1532
        %v1534 = vsel %vm958, %v1442, 0.0
        %1535 = vadd.xlane.f32.xlu0 %v1534
        %v1536 = vpop.xlane.xlu0 %1535
        %v1537 = vsel %vm958, %v1443, 0.0
        %1538 = vadd.xlane.f32.xlu0 %v1537
        %v1539 = vpop.xlane.xlu0 %1538
        %v1540 = vrcp.pop 32.0
        %v1541 = vmul.f32 %v1446, %v1540
        %v1542 = vmul.f32 %v1449, %v1540
        %v1543 = vmul.f32 %v1452, %v1540
        %v1544 = vmul.f32 %v1455, %v1540
        %v1545 = vmul.f32 %v1458, %v1540
        %v1546 = vmul.f32 %v1461, %v1540
        %v1547 = vmul.f32 %v1464, %v1540
        %v1548 = vmul.f32 %v1467, %v1540
        %v1549 = vmul.f32 %v1470, %v1540
        %v1550 = vmul.f32 %v1473, %v1540
        %v1551 = vmul.f32 %v1476, %v1540
        %v1552 = vmul.f32 %v1479, %v1540
        %v1553 = vmul.f32 %v1482, %v1540
        %v1554 = vmul.f32 %v1485, %v1540
        %v1555 = vmul.f32 %v1488, %v1540
        %v1556 = vmul.f32 %v1491, %v1540
        %v1557 = vmul.f32 %v1494, %v1540
        %v1558 = vmul.f32 %v1497, %v1540
        %v1559 = vmul.f32 %v1500, %v1540
        %v1560 = vmul.f32 %v1503, %v1540
        %v1561 = vmul.f32 %v1506, %v1540
        %v1562 = vmul.f32 %v1509, %v1540
        %v1563 = vmul.f32 %v1512, %v1540
        %v1564 = vmul.f32 %v1515, %v1540
        %v1565 = vmul.f32 %v1518, %v1540
        %v1566 = vmul.f32 %v1521, %v1540
        %v1567 = vmul.f32 %v1524, %v1540
        %v1568 = vmul.f32 %v1527, %v1540
        %v1569 = vmul.f32 %v1530, %v1540
        %v1570 = vmul.f32 %v1533, %v1540
        %v1571 = vmul.f32 %v1536, %v1540
        %v1572 = vmul.f32 %v1539, %v1540
        %v1573 = vsel %vm958, %v1412, -inf
        %1574 = vmax.xlane.f32.xlu0 %v1573
        %v1575 = vpop.xlane.xlu0 %1574
        %v1576 = vsel %vm958, %v1413, -inf
        %1577 = vmax.xlane.f32.xlu0 %v1576
        %v1578 = vpop.xlane.xlu0 %1577
        %v1579 = vsel %vm958, %v1414, -inf
        %1580 = vmax.xlane.f32.xlu0 %v1579
        %v1581 = vpop.xlane.xlu0 %1580
        %v1582 = vsel %vm958, %v1415, -inf
        %1583 = vmax.xlane.f32.xlu0 %v1582
        %v1584 = vpop.xlane.xlu0 %1583
        %v1585 = vsel %vm958, %v1416, -inf
        %1586 = vmax.xlane.f32.xlu0 %v1585
        %v1587 = vpop.xlane.xlu0 %1586
        %v1588 = vsel %vm958, %v1417, -inf
        %1589 = vmax.xlane.f32.xlu0 %v1588
        %v1590 = vpop.xlane.xlu0 %1589
        %v1591 = vsel %vm958, %v1418, -inf
        %1592 = vmax.xlane.f32.xlu0 %v1591
        %v1593 = vpop.xlane.xlu0 %1592
        %v1594 = vsel %vm958, %v1419, -inf
        %1595 = vmax.xlane.f32.xlu0 %v1594
        %v1596 = vpop.xlane.xlu0 %1595
        %v1597 = vsel %vm958, %v1420, -inf
        %1598 = vmax.xlane.f32.xlu0 %v1597
        %v1599 = vpop.xlane.xlu0 %1598
        %v1600 = vsel %vm958, %v1421, -inf
        %1601 = vmax.xlane.f32.xlu0 %v1600
        %v1602 = vpop.xlane.xlu0 %1601
        %v1603 = vsel %vm958, %v1422, -inf
        %1604 = vmax.xlane.f32.xlu0 %v1603
        %v1605 = vpop.xlane.xlu0 %1604
        %v1606 = vsel %vm958, %v1423, -inf
        %1607 = vmax.xlane.f32.xlu0 %v1606
        %v1608 = vpop.xlane.xlu0 %1607
        %v1609 = vsel %vm958, %v1424, -inf
        %1610 = vmax.xlane.f32.xlu0 %v1609
        %v1611 = vpop.xlane.xlu0 %1610
        %v1612 = vsel %vm958, %v1425, -inf
        %1613 = vmax.xlane.f32.xlu0 %v1612
        %v1614 = vpop.xlane.xlu0 %1613
        %v1615 = vsel %vm958, %v1426, -inf
        %1616 = vmax.xlane.f32.xlu0 %v1615
        %v1617 = vpop.xlane.xlu0 %1616
        %v1618 = vsel %vm958, %v1427, -inf
        %1619 = vmax.xlane.f32.xlu0 %v1618
        %v1620 = vpop.xlane.xlu0 %1619
        %v1621 = vsel %vm958, %v1428, -inf
        %1622 = vmax.xlane.f32.xlu0 %v1621
        %v1623 = vpop.xlane.xlu0 %1622
        %v1624 = vsel %vm958, %v1429, -inf
        %1625 = vmax.xlane.f32.xlu0 %v1624
        %v1626 = vpop.xlane.xlu0 %1625
        %v1627 = vsel %vm958, %v1430, -inf
        %1628 = vmax.xlane.f32.xlu0 %v1627
        %v1629 = vpop.xlane.xlu0 %1628
        %v1630 = vsel %vm958, %v1431, -inf
        %1631 = vmax.xlane.f32.xlu0 %v1630
        %v1632 = vpop.xlane.xlu0 %1631
        %v1633 = vsel %vm958, %v1432, -inf
        %1634 = vmax.xlane.f32.xlu0 %v1633
        %v1635 = vpop.xlane.xlu0 %1634
        %v1636 = vsel %vm958, %v1433, -inf
        %1637 = vmax.xlane.f32.xlu0 %v1636
        %v1638 = vpop.xlane.xlu0 %1637
        %v1639 = vsel %vm958, %v1434, -inf
        %1640 = vmax.xlane.f32.xlu0 %v1639
        %v1641 = vpop.xlane.xlu0 %1640
        %v1642 = vsel %vm958, %v1435, -inf
        %1643 = vmax.xlane.f32.xlu0 %v1642
        %v1644 = vpop.xlane.xlu0 %1643
        %v1645 = vsel %vm958, %v1436, -inf
        %1646 = vmax.xlane.f32.xlu0 %v1645
        %v1647 = vpop.xlane.xlu0 %1646
        %v1648 = vsel %vm958, %v1437, -inf
        %1649 = vmax.xlane.f32.xlu0 %v1648
        %v1650 = vpop.xlane.xlu0 %1649
        %v1651 = vsel %vm958, %v1438, -inf
        %1652 = vmax.xlane.f32.xlu0 %v1651
        %v1653 = vpop.xlane.xlu0 %1652
        %v1654 = vsel %vm958, %v1439, -inf
        %1655 = vmax.xlane.f32.xlu0 %v1654
        %v1656 = vpop.xlane.xlu0 %1655
        %v1657 = vsel %vm958, %v1440, -inf
        %1658 = vmax.xlane.f32.xlu0 %v1657
        %v1659 = vpop.xlane.xlu0 %1658
        %v1660 = vsel %vm958, %v1441, -inf
        %1661 = vmax.xlane.f32.xlu0 %v1660
        %v1662 = vpop.xlane.xlu0 %1661
        %v1663 = vsel %vm958, %v1442, -inf
        %1664 = vmax.xlane.f32.xlu0 %v1663
        %v1665 = vpop.xlane.xlu0 %1664
        %v1666 = vsel %vm958, %v1443, -inf
        %1667 = vmax.xlane.f32.xlu0 %v1666
        %v1668 = vpop.xlane.xlu0 %1667
        %v1669 = vld [vmem:[%s8] sm:$0x1]
        %v1671 = vlaneseq
        %v1672 = vshrl.u32 %v1671, 7
        %v1673 = vsub.s32 0, %v1672
        %v1674 = vrot.slane %v1669, %v1673
        %v1676 = vmul.f32 %v1541, %v1674
        %v1677 = vmul.f32 %v1542, %v1674
        %v1678 = vmul.f32 %v1543, %v1674
        %v1679 = vmul.f32 %v1544, %v1674
        %v1680 = vmul.f32 %v1545, %v1674
        %v1681 = vmul.f32 %v1546, %v1674
        %v1682 = vmul.f32 %v1547, %v1674
        %v1683 = vmul.f32 %v1548, %v1674
        %v1684 = vmul.f32 %v1549, %v1674
        %v1685 = vmul.f32 %v1550, %v1674
        %v1686 = vmul.f32 %v1551, %v1674
        %v1687 = vmul.f32 %v1552, %v1674
        %v1688 = vmul.f32 %v1553, %v1674
        %v1689 = vmul.f32 %v1554, %v1674
        %v1690 = vmul.f32 %v1555, %v1674
        %v1691 = vmul.f32 %v1556, %v1674
        %v1692 = vmul.f32 %v1557, %v1674
        %v1693 = vmul.f32 %v1558, %v1674
        %v1694 = vmul.f32 %v1559, %v1674
        %v1695 = vmul.f32 %v1560, %v1674
        %v1696 = vmul.f32 %v1561, %v1674
        %v1697 = vmul.f32 %v1562, %v1674
        %v1698 = vmul.f32 %v1563, %v1674
        %v1699 = vmul.f32 %v1564, %v1674
        %v1700 = vmul.f32 %v1565, %v1674
        %v1701 = vmul.f32 %v1566, %v1674
        %v1702 = vmul.f32 %v1567, %v1674
        %v1703 = vmul.f32 %v1568, %v1674
        %v1704 = vmul.f32 %v1569, %v1674
        %v1705 = vmul.f32 %v1570, %v1674
        %v1706 = vmul.f32 %v1571, %v1674
        %v1707 = vmul.f32 %v1572, %v1674
        %v1708 = vmul.f32 %v1575, %v1674
        %v1709 = vmul.f32 %v1578, %v1674
        %v1710 = vmul.f32 %v1581, %v1674
        %v1711 = vmul.f32 %v1584, %v1674
        %v1712 = vmul.f32 %v1587, %v1674
        %v1713 = vmul.f32 %v1590, %v1674
        %v1714 = vmul.f32 %v1593, %v1674
        %v1715 = vmul.f32 %v1596, %v1674
        %v1716 = vmul.f32 %v1599, %v1674
        %v1717 = vmul.f32 %v1602, %v1674
        %v1718 = vmul.f32 %v1605, %v1674
        %v1719 = vmul.f32 %v1608, %v1674
        %v1720 = vmul.f32 %v1611, %v1674
        %v1721 = vmul.f32 %v1614, %v1674
        %v1722 = vmul.f32 %v1617, %v1674
        %v1723 = vmul.f32 %v1620, %v1674
        %v1724 = vmul.f32 %v1623, %v1674
        %v1725 = vmul.f32 %v1626, %v1674
        %v1726 = vmul.f32 %v1629, %v1674
        %v1727 = vmul.f32 %v1632, %v1674
        %v1728 = vmul.f32 %v1635, %v1674
        %v1729 = vmul.f32 %v1638, %v1674
        %v1730 = vmul.f32 %v1641, %v1674
        %v1731 = vmul.f32 %v1644, %v1674
        %v1732 = vmul.f32 %v1647, %v1674
        %v1733 = vmul.f32 %v1650, %v1674
        %v1734 = vmul.f32 %v1653, %v1674
        %v1735 = vmul.f32 %v1656, %v1674
        %v1736 = vmul.f32 %v1659, %v1674
        %v1737 = vmul.f32 %v1662, %v1674
        %v1738 = vmul.f32 %v1665, %v1674
        %v1739 = vmul.f32 %v1668, %v1674
        %1772 = vrot.lane.b32.xlu0 %v1708, 127
        %v1773 = vpop.permute.xlu0 %1772
        %1774 = vrot.lane.b32.xlu0 %v1709, 127
        %v1775 = vpop.permute.xlu0 %1774
        %1776 = vrot.lane.b32.xlu0 %v1710, 127
        %v1777 = vpop.permute.xlu0 %1776
        %1778 = vrot.lane.b32.xlu0 %v1711, 127
        %v1779 = vpop.permute.xlu0 %1778
        %1780 = vrot.lane.b32.xlu0 %v1712, 127
        %v1781 = vpop.permute.xlu0 %1780
        %1782 = vrot.lane.b32.xlu0 %v1713, 127
        %v1783 = vpop.permute.xlu0 %1782
        %1784 = vrot.lane.b32.xlu0 %v1714, 127
        %v1785 = vpop.permute.xlu0 %1784
        %1786 = vrot.lane.b32.xlu0 %v1715, 127
        %v1787 = vpop.permute.xlu0 %1786
        %1788 = vrot.lane.b32.xlu0 %v1716, 127
        %v1789 = vpop.permute.xlu0 %1788
        %1790 = vrot.lane.b32.xlu0 %v1717, 127
        %v1791 = vpop.permute.xlu0 %1790
        %1792 = vrot.lane.b32.xlu0 %v1718, 127
        %v1793 = vpop.permute.xlu0 %1792
        %1794 = vrot.lane.b32.xlu0 %v1719, 127
        %v1795 = vpop.permute.xlu0 %1794
        %1796 = vrot.lane.b32.xlu0 %v1720, 127
        %v1797 = vpop.permute.xlu0 %1796
        %1798 = vrot.lane.b32.xlu0 %v1721, 127
        %v1799 = vpop.permute.xlu0 %1798
        %1800 = vrot.lane.b32.xlu0 %v1722, 127
        %v1801 = vpop.permute.xlu0 %1800
        %1802 = vrot.lane.b32.xlu0 %v1723, 127
        %v1803 = vpop.permute.xlu0 %1802
        %1804 = vrot.lane.b32.xlu0 %v1724, 127
        %v1805 = vpop.permute.xlu0 %1804
        %1806 = vrot.lane.b32.xlu0 %v1725, 127
        %v1807 = vpop.permute.xlu0 %1806
        %1808 = vrot.lane.b32.xlu0 %v1726, 127
        %v1809 = vpop.permute.xlu0 %1808
        %1810 = vrot.lane.b32.xlu0 %v1727, 127
        %v1811 = vpop.permute.xlu0 %1810
        %1812 = vrot.lane.b32.xlu0 %v1728, 127
        %v1813 = vpop.permute.xlu0 %1812
        %1814 = vrot.lane.b32.xlu0 %v1729, 127
        %v1815 = vpop.permute.xlu0 %1814
        %1816 = vrot.lane.b32.xlu0 %v1730, 127
        %v1817 = vpop.permute.xlu0 %1816
        %1818 = vrot.lane.b32.xlu0 %v1731, 127
        %v1819 = vpop.permute.xlu0 %1818
        %1820 = vrot.lane.b32.xlu0 %v1732, 127
        %v1821 = vpop.permute.xlu0 %1820
        %1822 = vrot.lane.b32.xlu0 %v1733, 127
        %v1823 = vpop.permute.xlu0 %1822
        %1824 = vrot.lane.b32.xlu0 %v1734, 127
        %v1825 = vpop.permute.xlu0 %1824
        %1826 = vrot.lane.b32.xlu0 %v1735, 127
        %v1827 = vpop.permute.xlu0 %1826
        %1828 = vrot.lane.b32.xlu0 %v1736, 127
        %v1829 = vpop.permute.xlu0 %1828
        %1830 = vrot.lane.b32.xlu0 %v1737, 127
        %v1831 = vpop.permute.xlu0 %1830
        %1832 = vrot.lane.b32.xlu0 %v1738, 127
        %v1833 = vpop.permute.xlu0 %1832
        %1834 = vrot.lane.b32.xlu0 %v1739, 127
        %v1835 = vpop.permute.xlu0 %1834
        %v1868 = vadd.f32 %v1676, %v1773
        %v1869 = vadd.f32 %v1677, %v1775
        %v1870 = vadd.f32 %v1678, %v1777
        %v1871 = vadd.f32 %v1679, %v1779
        %v1872 = vadd.f32 %v1680, %v1781
        %v1873 = vadd.f32 %v1681, %v1783
        %v1874 = vadd.f32 %v1682, %v1785
        %v1875 = vadd.f32 %v1683, %v1787
        %v1876 = vadd.f32 %v1684, %v1789
        %v1877 = vadd.f32 %v1685, %v1791
        %v1878 = vadd.f32 %v1686, %v1793
        %v1879 = vadd.f32 %v1687, %v1795
        %v1880 = vadd.f32 %v1688, %v1797
        %v1881 = vadd.f32 %v1689, %v1799
        %v1882 = vadd.f32 %v1690, %v1801
        %v1883 = vadd.f32 %v1691, %v1803
        %v1884 = vadd.f32 %v1692, %v1805
        %v1885 = vadd.f32 %v1693, %v1807
        %v1886 = vadd.f32 %v1694, %v1809
        %v1887 = vadd.f32 %v1695, %v1811
        %v1888 = vadd.f32 %v1696, %v1813
        %v1889 = vadd.f32 %v1697, %v1815
        %v1890 = vadd.f32 %v1698, %v1817
        %v1891 = vadd.f32 %v1699, %v1819
        %v1892 = vadd.f32 %v1700, %v1821
        %v1893 = vadd.f32 %v1701, %v1823
        %v1894 = vadd.f32 %v1702, %v1825
        %v1895 = vadd.f32 %v1703, %v1827
        %v1896 = vadd.f32 %v1704, %v1829
        %v1897 = vadd.f32 %v1705, %v1831
        %v1898 = vadd.f32 %v1706, %v1833
        %v1899 = vadd.f32 %v1707, %v1835
        %v1900 = vld [vmem:[#allocation2] sm:$0x1]
        %v1902 = vlaneseq
        %v1903 = vshrl.u32 %v1902, 7
        %v1904 = vsub.s32 0, %v1903
        %v1905 = vrot.slane %v1900, %v1904
        %v1907 = vadd.f32 %v1868, %v1905
        %v1908 = vadd.f32 %v1869, %v1905
        %v1909 = vadd.f32 %v1870, %v1905
        %v1910 = vadd.f32 %v1871, %v1905
        %v1911 = vadd.f32 %v1872, %v1905
        %v1912 = vadd.f32 %v1873, %v1905
        %v1913 = vadd.f32 %v1874, %v1905
        %v1914 = vadd.f32 %v1875, %v1905
        %v1915 = vadd.f32 %v1876, %v1905
        %v1916 = vadd.f32 %v1877, %v1905
        %v1917 = vadd.f32 %v1878, %v1905
        %v1918 = vadd.f32 %v1879, %v1905
        %v1919 = vadd.f32 %v1880, %v1905
        %v1920 = vadd.f32 %v1881, %v1905
        %v1921 = vadd.f32 %v1882, %v1905
        %v1922 = vadd.f32 %v1883, %v1905
        %v1923 = vadd.f32 %v1884, %v1905
        %v1924 = vadd.f32 %v1885, %v1905
        %v1925 = vadd.f32 %v1886, %v1905
        %v1926 = vadd.f32 %v1887, %v1905
        %v1927 = vadd.f32 %v1888, %v1905
        %v1928 = vadd.f32 %v1889, %v1905
        %v1929 = vadd.f32 %v1890, %v1905
        %v1930 = vadd.f32 %v1891, %v1905
        %v1931 = vadd.f32 %v1892, %v1905
        %v1932 = vadd.f32 %v1893, %v1905
        %v1933 = vadd.f32 %v1894, %v1905
        %v1934 = vadd.f32 %v1895, %v1905
        %v1935 = vadd.f32 %v1896, %v1905
        %v1936 = vadd.f32 %v1897, %v1905
        %v1937 = vadd.f32 %v1898, %v1905
        %v1938 = vadd.f32 %v1899, %v1905
        %v1939 = vxor.u32 %v1907, 2147483648
        %v1940 = vxor.u32 %v1908, 2147483648
        %v1941 = vxor.u32 %v1909, 2147483648
        %v1942 = vxor.u32 %v1910, 2147483648
        %v1943 = vxor.u32 %v1911, 2147483648
        %v1944 = vxor.u32 %v1912, 2147483648
        %v1945 = vxor.u32 %v1913, 2147483648
        %v1946 = vxor.u32 %v1914, 2147483648
        %v1947 = vxor.u32 %v1915, 2147483648
        %v1948 = vxor.u32 %v1916, 2147483648
        %v1949 = vxor.u32 %v1917, 2147483648
        %v1950 = vxor.u32 %v1918, 2147483648
        %v1951 = vxor.u32 %v1919, 2147483648
        %v1952 = vxor.u32 %v1920, 2147483648
        %v1953 = vxor.u32 %v1921, 2147483648
        %v1954 = vxor.u32 %v1922, 2147483648
        %v1955 = vxor.u32 %v1923, 2147483648
        %v1956 = vxor.u32 %v1924, 2147483648
        %v1957 = vxor.u32 %v1925, 2147483648
        %v1958 = vxor.u32 %v1926, 2147483648
        %v1959 = vxor.u32 %v1927, 2147483648
        %v1960 = vxor.u32 %v1928, 2147483648
        %v1961 = vxor.u32 %v1929, 2147483648
        %v1962 = vxor.u32 %v1930, 2147483648
        %v1963 = vxor.u32 %v1931, 2147483648
        %v1964 = vxor.u32 %v1932, 2147483648
        %v1965 = vxor.u32 %v1933, 2147483648
        %v1966 = vxor.u32 %v1934, 2147483648
        %v1967 = vxor.u32 %v1935, 2147483648
        %v1968 = vxor.u32 %v1936, 2147483648
        %v1969 = vxor.u32 %v1937, 2147483648
        %v1970 = vxor.u32 %v1938, 2147483648
        %v1971 = vmul.f32 %v1939, 1.442695
        %v1972 = vpow.pop %v1971
        %v1973 = vmul.f32 %v1940, 1.442695
        %v1974 = vpow.pop %v1973
        %v1975 = vmul.f32 %v1941, 1.442695
        %v1976 = vpow.pop %v1975
        %v1977 = vmul.f32 %v1942, 1.442695
        %v1978 = vpow.pop %v1977
        %v1979 = vmul.f32 %v1943, 1.442695
        %v1980 = vpow.pop %v1979
        %v1981 = vmul.f32 %v1944, 1.442695
        %v1982 = vpow.pop %v1981
        %v1983 = vmul.f32 %v1945, 1.442695
        %v1984 = vpow.pop %v1983
        %v1985 = vmul.f32 %v1946, 1.442695
        %v1986 = vpow.pop %v1985
        %v1987 = vmul.f32 %v1947, 1.442695
        %v1988 = vpow.pop %v1987
        %v1989 = vmul.f32 %v1948, 1.442695
        %v1990 = vpow.pop %v1989
        %v1991 = vmul.f32 %v1949, 1.442695
        %v1992 = vpow.pop %v1991
        %v1993 = vmul.f32 %v1950, 1.442695
        %v1994 = vpow.pop %v1993
        %v1995 = vmul.f32 %v1951, 1.442695
        %v1996 = vpow.pop %v1995
        %v1997 = vmul.f32 %v1952, 1.442695
        %v1998 = vpow.pop %v1997
        %v1999 = vmul.f32 %v1953, 1.442695
        %v2000 = vpow.pop %v1999
        %v2001 = vmul.f32 %v1954, 1.442695
        %v2002 = vpow.pop %v2001
        %v2003 = vmul.f32 %v1955, 1.442695
        %v2004 = vpow.pop %v2003
        %v2005 = vmul.f32 %v1956, 1.442695
        %v2006 = vpow.pop %v2005
        %v2007 = vmul.f32 %v1957, 1.442695
        %v2008 = vpow.pop %v2007
        %v2009 = vmul.f32 %v1958, 1.442695
        %v2010 = vpow.pop %v2009
        %v2011 = vmul.f32 %v1959, 1.442695
        %v2012 = vpow.pop %v2011
        %v2013 = vmul.f32 %v1960, 1.442695
        %v2014 = vpow.pop %v2013
        %v2015 = vmul.f32 %v1961, 1.442695
        %v2016 = vpow.pop %v2015
        %v2017 = vmul.f32 %v1962, 1.442695
        %v2018 = vpow.pop %v2017
        %v2019 = vmul.f32 %v1963, 1.442695
        %v2020 = vpow.pop %v2019
        %v2021 = vmul.f32 %v1964, 1.442695
        %v2022 = vpow.pop %v2021
        %v2023 = vmul.f32 %v1965, 1.442695
        %v2024 = vpow.pop %v2023
        %v2025 = vmul.f32 %v1966, 1.442695
        %v2026 = vpow.pop %v2025
        %v2027 = vmul.f32 %v1967, 1.442695
        %v2028 = vpow.pop %v2027
        %v2029 = vmul.f32 %v1968, 1.442695
        %v2030 = vpow.pop %v2029
        %v2031 = vmul.f32 %v1969, 1.442695
        %v2032 = vpow.pop %v2031
        %v2033 = vmul.f32 %v1970, 1.442695
        %v2034 = vpow.pop %v2033
        %v2035 = vadd.f32 %v1972, 1.0
        %v2036 = vadd.f32 %v1974, 1.0
        %v2037 = vadd.f32 %v1976, 1.0
        %v2038 = vadd.f32 %v1978, 1.0
        %v2039 = vadd.f32 %v1980, 1.0
        %v2040 = vadd.f32 %v1982, 1.0
        %v2041 = vadd.f32 %v1984, 1.0
        %v2042 = vadd.f32 %v1986, 1.0
        %v2043 = vadd.f32 %v1988, 1.0
        %v2044 = vadd.f32 %v1990, 1.0
        %v2045 = vadd.f32 %v1992, 1.0
        %v2046 = vadd.f32 %v1994, 1.0
        %v2047 = vadd.f32 %v1996, 1.0
        %v2048 = vadd.f32 %v1998, 1.0
        %v2049 = vadd.f32 %v2000, 1.0
        %v2050 = vadd.f32 %v2002, 1.0
        %v2051 = vadd.f32 %v2004, 1.0
        %v2052 = vadd.f32 %v2006, 1.0
        %v2053 = vadd.f32 %v2008, 1.0
        %v2054 = vadd.f32 %v2010, 1.0
        %v2055 = vadd.f32 %v2012, 1.0
        %v2056 = vadd.f32 %v2014, 1.0
        %v2057 = vadd.f32 %v2016, 1.0
        %v2058 = vadd.f32 %v2018, 1.0
        %v2059 = vadd.f32 %v2020, 1.0
        %v2060 = vadd.f32 %v2022, 1.0
        %v2061 = vadd.f32 %v2024, 1.0
        %v2062 = vadd.f32 %v2026, 1.0
        %v2063 = vadd.f32 %v2028, 1.0
        %v2064 = vadd.f32 %v2030, 1.0
        %v2065 = vadd.f32 %v2032, 1.0
        %v2066 = vadd.f32 %v2034, 1.0
        %v2067 = vrcp.pop %v2035
        %v2068 = vmul.f32 1.0, %v2067
        %v2069 = vrcp.pop %v2036
        %v2070 = vmul.f32 1.0, %v2069
        %v2071 = vrcp.pop %v2037
        %v2072 = vmul.f32 1.0, %v2071
        %v2073 = vrcp.pop %v2038
        %v2074 = vmul.f32 1.0, %v2073
        %v2075 = vrcp.pop %v2039
        %v2076 = vmul.f32 1.0, %v2075
        %v2077 = vrcp.pop %v2040
        %v2078 = vmul.f32 1.0, %v2077
        %v2079 = vrcp.pop %v2041
        %v2080 = vmul.f32 1.0, %v2079
        %v2081 = vrcp.pop %v2042
        %v2082 = vmul.f32 1.0, %v2081
        %v2083 = vrcp.pop %v2043
        %v2084 = vmul.f32 1.0, %v2083
        %v2085 = vrcp.pop %v2044
        %v2086 = vmul.f32 1.0, %v2085
        %v2087 = vrcp.pop %v2045
        %v2088 = vmul.f32 1.0, %v2087
        %v2089 = vrcp.pop %v2046
        %v2090 = vmul.f32 1.0, %v2089
        %v2091 = vrcp.pop %v2047
        %v2092 = vmul.f32 1.0, %v2091
        %v2093 = vrcp.pop %v2048
        %v2094 = vmul.f32 1.0, %v2093
        %v2095 = vrcp.pop %v2049
        %v2096 = vmul.f32 1.0, %v2095
        %v2097 = vrcp.pop %v2050
        %v2098 = vmul.f32 1.0, %v2097
        %v2099 = vrcp.pop %v2051
        %v2100 = vmul.f32 1.0, %v2099
        %v2101 = vrcp.pop %v2052
        %v2102 = vmul.f32 1.0, %v2101
        %v2103 = vrcp.pop %v2053
        %v2104 = vmul.f32 1.0, %v2103
        %v2105 = vrcp.pop %v2054
        %v2106 = vmul.f32 1.0, %v2105
        %v2107 = vrcp.pop %v2055
        %v2108 = vmul.f32 1.0, %v2107
        %v2109 = vrcp.pop %v2056
        %v2110 = vmul.f32 1.0, %v2109
        %v2111 = vrcp.pop %v2057
        %v2112 = vmul.f32 1.0, %v2111
        %v2113 = vrcp.pop %v2058
        %v2114 = vmul.f32 1.0, %v2113
        %v2115 = vrcp.pop %v2059
        %v2116 = vmul.f32 1.0, %v2115
        %v2117 = vrcp.pop %v2060
        %v2118 = vmul.f32 1.0, %v2117
        %v2119 = vrcp.pop %v2061
        %v2120 = vmul.f32 1.0, %v2119
        %v2121 = vrcp.pop %v2062
        %v2122 = vmul.f32 1.0, %v2121
        %v2123 = vrcp.pop %v2063
        %v2124 = vmul.f32 1.0, %v2123
        %v2125 = vrcp.pop %v2064
        %v2126 = vmul.f32 1.0, %v2125
        %v2127 = vrcp.pop %v2065
        %v2128 = vmul.f32 1.0, %v2127
        %v2129 = vrcp.pop %v2066
        %v2130 = vmul.f32 1.0, %v2129
        %2132 = vset.pattern.permute.xlu0 0
        %2133 = vperm.xlu0 %2132, %v2068
        %v2134 = vpop.permute.xlu0 %2133
        %2137 = vset.pattern.permute.xlu0 0
        %2138 = vperm.xlu0 %2137, %v2070
        %v2139 = vpop.permute.xlu0 %2138
        %2142 = vset.pattern.permute.xlu0 0
        %2143 = vperm.xlu0 %2142, %v2072
        %v2144 = vpop.permute.xlu0 %2143
        %2147 = vset.pattern.permute.xlu0 0
        %2148 = vperm.xlu0 %2147, %v2074
        %v2149 = vpop.permute.xlu0 %2148
        %2152 = vset.pattern.permute.xlu0 0
        %2153 = vperm.xlu0 %2152, %v2076
        %v2154 = vpop.permute.xlu0 %2153
        %2157 = vset.pattern.permute.xlu0 0
        %2158 = vperm.xlu0 %2157, %v2078
        %v2159 = vpop.permute.xlu0 %2158
        %2162 = vset.pattern.permute.xlu0 0
        %2163 = vperm.xlu0 %2162, %v2080
        %v2164 = vpop.permute.xlu0 %2163
        %2167 = vset.pattern.permute.xlu0 0
        %2168 = vperm.xlu0 %2167, %v2082
        %v2169 = vpop.permute.xlu0 %2168
        %2172 = vset.pattern.permute.xlu0 0
        %2173 = vperm.xlu0 %2172, %v2084
        %v2174 = vpop.permute.xlu0 %2173
        %2177 = vset.pattern.permute.xlu0 0
        %2178 = vperm.xlu0 %2177, %v2086
        %v2179 = vpop.permute.xlu0 %2178
        %2182 = vset.pattern.permute.xlu0 0
        %2183 = vperm.xlu0 %2182, %v2088
        %v2184 = vpop.permute.xlu0 %2183
        %2187 = vset.pattern.permute.xlu0 0
        %2188 = vperm.xlu0 %2187, %v2090
        %v2189 = vpop.permute.xlu0 %2188
        %2192 = vset.pattern.permute.xlu0 0
        %2193 = vperm.xlu0 %2192, %v2092
        %v2194 = vpop.permute.xlu0 %2193
        %2197 = vset.pattern.permute.xlu0 0
        %2198 = vperm.xlu0 %2197, %v2094
        %v2199 = vpop.permute.xlu0 %2198
        %2202 = vset.pattern.permute.xlu0 0
        %2203 = vperm.xlu0 %2202, %v2096
        %v2204 = vpop.permute.xlu0 %2203
        %2207 = vset.pattern.permute.xlu0 0
        %2208 = vperm.xlu0 %2207, %v2098
        %v2209 = vpop.permute.xlu0 %2208
        %2212 = vset.pattern.permute.xlu0 0
        %2213 = vperm.xlu0 %2212, %v2100
        %v2214 = vpop.permute.xlu0 %2213
        %2217 = vset.pattern.permute.xlu0 0
        %2218 = vperm.xlu0 %2217, %v2102
        %v2219 = vpop.permute.xlu0 %2218
        %2222 = vset.pattern.permute.xlu0 0
        %2223 = vperm.xlu0 %2222, %v2104
        %v2224 = vpop.permute.xlu0 %2223
        %2227 = vset.pattern.permute.xlu0 0
        %2228 = vperm.xlu0 %2227, %v2106
        %v2229 = vpop.permute.xlu0 %2228
        %2232 = vset.pattern.permute.xlu0 0
        %2233 = vperm.xlu0 %2232, %v2108
        %v2234 = vpop.permute.xlu0 %2233
        %2237 = vset.pattern.permute.xlu0 0
        %2238 = vperm.xlu0 %2237, %v2110
        %v2239 = vpop.permute.xlu0 %2238
        %2242 = vset.pattern.permute.xlu0 0
        %2243 = vperm.xlu0 %2242, %v2112
        %v2244 = vpop.permute.xlu0 %2243
        %2247 = vset.pattern.permute.xlu0 0
        %2248 = vperm.xlu0 %2247, %v2114
        %v2249 = vpop.permute.xlu0 %2248
        %2252 = vset.pattern.permute.xlu0 0
        %2253 = vperm.xlu0 %2252, %v2116
        %v2254 = vpop.permute.xlu0 %2253
        %2257 = vset.pattern.permute.xlu0 0
        %2258 = vperm.xlu0 %2257, %v2118
        %v2259 = vpop.permute.xlu0 %2258
        %2262 = vset.pattern.permute.xlu0 0
        %2263 = vperm.xlu0 %2262, %v2120
        %v2264 = vpop.permute.xlu0 %2263
        %2267 = vset.pattern.permute.xlu0 0
        %2268 = vperm.xlu0 %2267, %v2122
        %v2269 = vpop.permute.xlu0 %2268
        %2272 = vset.pattern.permute.xlu0 0
        %2273 = vperm.xlu0 %2272, %v2124
        %v2274 = vpop.permute.xlu0 %2273
        %2277 = vset.pattern.permute.xlu0 0
        %2278 = vperm.xlu0 %2277, %v2126
        %v2279 = vpop.permute.xlu0 %2278
        %2282 = vset.pattern.permute.xlu0 0
        %2283 = vperm.xlu0 %2282, %v2128
        %v2284 = vpop.permute.xlu0 %2283
        %2287 = vset.pattern.permute.xlu0 0
        %2288 = vperm.xlu0 %2287, %v2130
        %v2289 = vpop.permute.xlu0 %2288
        %v2291 = vmul.f32 %v1412, %v2134
        %v2292 = vmul.f32 %v1413, %v2139
        %v2293 = vmul.f32 %v1414, %v2144
        %v2294 = vmul.f32 %v1415, %v2149
        %v2295 = vmul.f32 %v1416, %v2154
        %v2296 = vmul.f32 %v1417, %v2159
        %v2297 = vmul.f32 %v1418, %v2164
        %v2298 = vmul.f32 %v1419, %v2169
        %v2299 = vmul.f32 %v1420, %v2174
        %v2300 = vmul.f32 %v1421, %v2179
        %v2301 = vmul.f32 %v1422, %v2184
        %v2302 = vmul.f32 %v1423, %v2189
        %v2303 = vmul.f32 %v1424, %v2194
        %v2304 = vmul.f32 %v1425, %v2199
        %v2305 = vmul.f32 %v1426, %v2204
        %v2306 = vmul.f32 %v1427, %v2209
        %v2307 = vmul.f32 %v1428, %v2214
        %v2308 = vmul.f32 %v1429, %v2219
        %v2309 = vmul.f32 %v1430, %v2224
        %v2310 = vmul.f32 %v1431, %v2229
        %v2311 = vmul.f32 %v1432, %v2234
        %v2312 = vmul.f32 %v1433, %v2239
        %v2313 = vmul.f32 %v1434, %v2244
        %v2314 = vmul.f32 %v1435, %v2249
        %v2315 = vmul.f32 %v1436, %v2254
        %v2316 = vmul.f32 %v1437, %v2259
        %v2317 = vmul.f32 %v1438, %v2264
        %v2318 = vmul.f32 %v1439, %v2269
        %v2319 = vmul.f32 %v1440, %v2274
        %v2320 = vmul.f32 %v1441, %v2279
        %v2321 = vmul.f32 %v1442, %v2284
        %v2322 = vmul.f32 %v1443, %v2289
        %v2323 = vld [vmem:[%s10] sm:$0xff]
        %v2324 = vld [vmem:[%s10 + $0x8] sm:$0xff]
        %v2325 = vld [vmem:[%s10 + $0x10] sm:$0xff]
        %v2326 = vld [vmem:[%s10 + $0x18] sm:$0xff]
        %v2327 = vld [vmem:[%s11] sm:$0x1]
        %v2329 = vlaneseq
        %v2330 = vshrl.u32 %v2329, 7
        %v2331 = vsub.s32 0, %v2330
        %v2332 = vrot.slane %v2327, %v2331
        %v2335 = vsel %vm958, %v2291, 0
        %v2338 = vsel %vm958, %v2292, 0
        %v2341 = vsel %vm958, %v2293, 0
        %v2344 = vsel %vm958, %v2294, 0
        %v2347 = vsel %vm958, %v2295, 0
        %v2350 = vsel %vm958, %v2296, 0
        %v2353 = vsel %vm958, %v2297, 0
        %v2356 = vsel %vm958, %v2298, 0
        %v2359 = vsel %vm958, %v2299, 0
        %v2362 = vsel %vm958, %v2300, 0
        %v2365 = vsel %vm958, %v2301, 0
        %v2368 = vsel %vm958, %v2302, 0
        %v2371 = vsel %vm958, %v2303, 0
        %v2374 = vsel %vm958, %v2304, 0
        %v2377 = vsel %vm958, %v2305, 0
        %v2380 = vsel %vm958, %v2306, 0
        %v2383 = vsel %vm958, %v2307, 0
        %v2386 = vsel %vm958, %v2308, 0
        %v2389 = vsel %vm958, %v2309, 0
        %v2392 = vsel %vm958, %v2310, 0
        %v2395 = vsel %vm958, %v2311, 0
        %v2398 = vsel %vm958, %v2312, 0
        %v2401 = vsel %vm958, %v2313, 0
        %v2404 = vsel %vm958, %v2314, 0
        %v2407 = vsel %vm958, %v2315, 0
        %v2410 = vsel %vm958, %v2316, 0
        %v2413 = vsel %vm958, %v2317, 0
        %v2416 = vsel %vm958, %v2318, 0
        %v2419 = vsel %vm958, %v2319, 0
        %v2422 = vsel %vm958, %v2320, 0
        %v2425 = vsel %vm958, %v2321, 0
        %v2428 = vsel %vm958, %v2322, 0
        %2430 = vmatprep.subr.mxu0 0.0
        %2431 = vmatpush1.msra.mxu0 0.0
        %2432 = vmatprep.subr.mxu0 0.0
        %2433 = vmatpush1.msra.mxu0 0.0
        %2434 = vmatprep.subr.mxu0 0.0
        %2435 = vmatpush1.msra.mxu0 0.0
        %2436 = vmatprep.subr.mxu0 0.0
        %2437 = vmatpush1.msra.mxu0 0.0
        %2438 = vmatprep.subr.mxu0 0.0
        %2439 = vmatpush1.msra.mxu0 0.0
        %2440 = vmatprep.subr.mxu0 0.0
        %2441 = vmatpush1.msra.mxu0 0.0
        %2442 = vmatprep.subr.mxu0 0.0
        %2443 = vmatpush1.msra.mxu0 0.0
        %2444 = vmatprep.subr.mxu0 0.0
        %2445 = vmatpush1.msra.mxu0 0.0
        %2446 = vmatprep.subr.mxu0 0.0
        %2447 = vmatpush1.msra.mxu0 0.0
        %2448 = vmatprep.subr.mxu0 0.0
        %2449 = vmatpush1.msra.mxu0 0.0
        %2450 = vmatprep.subr.mxu0 0.0
        %2451 = vmatpush1.msra.mxu0 0.0
        %2452 = vmatprep.subr.mxu0 0.0
        %2453 = vmatpush1.msra.mxu0 0.0
        %2454 = vmatprep.subr.mxu0 0.0
        %2455 = vmatpush1.msra.mxu0 %v2326
        %2456 = vmatprep.subr.mxu0 0.0
        %2457 = vmatpush1.msra.mxu0 %v2325
        %2458 = vmatprep.subr.mxu0 0.0
        %2459 = vmatpush1.msra.mxu0 %v2324
        %2460 = vmatprep.subr.mxu0 0.0
        %2461 = vmatpush1.msra.mxu0 %v2323
        %2462 = vmatprep.subr.mxu0 0.0
        %2463 = vmatpush2.msra.mxu0 0.0
        %2464 = vmatprep.subr.mxu0 0.0
        %2465 = vmatpush2.msra.mxu0 0.0
        %2466 = vmatprep.subr.mxu0 0.0
        %2467 = vmatpush2.msra.mxu0 0.0
        %2468 = vmatprep.subr.mxu0 0.0
        %2469 = vmatpush2.msra.mxu0 0.0
        %2470 = vmatprep.subr.mxu0 0.0
        %2471 = vmatpush2.msra.mxu0 0.0
        %2472 = vmatprep.subr.mxu0 0.0
        %2473 = vmatpush2.msra.mxu0 0.0
        %2474 = vmatprep.subr.mxu0 0.0
        %2475 = vmatpush2.msra.mxu0 0.0
        %2476 = vmatprep.subr.mxu0 0.0
        %2477 = vmatpush2.msra.mxu0 0.0
        %2478 = vmatprep.subr.mxu0 0.0
        %2479 = vmatpush2.msra.mxu0 0.0
        %2480 = vmatprep.subr.mxu0 0.0
        %2481 = vmatpush2.msra.mxu0 0.0
        %2482 = vmatprep.subr.mxu0 0.0
        %2483 = vmatpush2.msra.mxu0 0.0
        %2484 = vmatprep.subr.mxu0 0.0
        %2485 = vmatpush2.msra.mxu0 0.0
        %2486 = vmatprep.subr.mxu0 0.0
        %2487 = vmatpush2.msra.mxu0 0.0
        %2488 = vmatprep.subr.mxu0 0.0
        %2489 = vmatpush2.msra.mxu0 0.0
        %2490 = vmatprep.subr.mxu0 0.0
        %2491 = vmatpush2.msra.mxu0 0.0
        %2492 = vmatprep.subr.mxu0 0.0
        %2493 = vmatpush2.msra.mxu0 0.0
        %2494 = vmatprep.mubr.f32.mxu0 0.0
        %2495 = vmatmul.mubr.f32.gmra.mxu0 %v2335
        %v2496 = vpop.f32.mrf.mxu0
        %v2497 = vadd.f32 %v2332, %v2496
        %v2498 = vpop.f32.mrf.mxu0
        %2499 = vmatprep.mubr.f32.mxu0 0.0
        %2500 = vmatmul.mubr.f32.gmra.mxu0 %v2338
        %v2501 = vpop.f32.mrf.mxu0
        %v2502 = vadd.f32 %v2332, %v2501
        %v2503 = vpop.f32.mrf.mxu0
        %2504 = vmatprep.mubr.f32.mxu0 0.0
        %2505 = vmatmul.mubr.f32.gmra.mxu0 %v2341
        %v2506 = vpop.f32.mrf.mxu0
        %v2507 = vadd.f32 %v2332, %v2506
        %v2508 = vpop.f32.mrf.mxu0
        %2509 = vmatprep.mubr.f32.mxu0 0.0
        %2510 = vmatmul.mubr.f32.gmra.mxu0 %v2344
        %v2511 = vpop.f32.mrf.mxu0
        %v2512 = vadd.f32 %v2332, %v2511
        %v2513 = vpop.f32.mrf.mxu0
        %2514 = vmatprep.mubr.f32.mxu0 0.0
        %2515 = vmatmul.mubr.f32.gmra.mxu0 %v2347
        %v2516 = vpop.f32.mrf.mxu0
        %v2517 = vadd.f32 %v2332, %v2516
        %v2518 = vpop.f32.mrf.mxu0
        %2519 = vmatprep.mubr.f32.mxu0 0.0
        %2520 = vmatmul.mubr.f32.gmra.mxu0 %v2350
        %v2521 = vpop.f32.mrf.mxu0
        %v2522 = vadd.f32 %v2332, %v2521
        %v2523 = vpop.f32.mrf.mxu0
        %2524 = vmatprep.mubr.f32.mxu0 0.0
        %2525 = vmatmul.mubr.f32.gmra.mxu0 %v2353
        %v2526 = vpop.f32.mrf.mxu0
        %v2527 = vadd.f32 %v2332, %v2526
        %v2528 = vpop.f32.mrf.mxu0
        %2529 = vmatprep.mubr.f32.mxu0 0.0
        %2530 = vmatmul.mubr.f32.gmra.mxu0 %v2356
        %v2531 = vpop.f32.mrf.mxu0
        %v2532 = vadd.f32 %v2332, %v2531
        %v2533 = vpop.f32.mrf.mxu0
        %2534 = vmatprep.mubr.f32.mxu0 0.0
        %2535 = vmatmul.mubr.f32.gmra.mxu0 %v2359
        %v2536 = vpop.f32.mrf.mxu0
        %v2537 = vadd.f32 %v2332, %v2536
        %v2538 = vpop.f32.mrf.mxu0
        %2539 = vmatprep.mubr.f32.mxu0 0.0
        %2540 = vmatmul.mubr.f32.gmra.mxu0 %v2362
        %v2541 = vpop.f32.mrf.mxu0
        %v2542 = vadd.f32 %v2332, %v2541
        %v2543 = vpop.f32.mrf.mxu0
        %2544 = vmatprep.mubr.f32.mxu0 0.0
        %2545 = vmatmul.mubr.f32.gmra.mxu0 %v2365
        %v2546 = vpop.f32.mrf.mxu0
        %v2547 = vadd.f32 %v2332, %v2546
        %v2548 = vpop.f32.mrf.mxu0
        %2549 = vmatprep.mubr.f32.mxu0 0.0
        %2550 = vmatmul.mubr.f32.gmra.mxu0 %v2368
        %v2551 = vpop.f32.mrf.mxu0
        %v2552 = vadd.f32 %v2332, %v2551
        %v2553 = vpop.f32.mrf.mxu0
        %2554 = vmatprep.mubr.f32.mxu0 0.0
        %2555 = vmatmul.mubr.f32.gmra.mxu0 %v2371
        %v2556 = vpop.f32.mrf.mxu0
        %v2557 = vadd.f32 %v2332, %v2556
        %v2558 = vpop.f32.mrf.mxu0
        %2559 = vmatprep.mubr.f32.mxu0 0.0
        %2560 = vmatmul.mubr.f32.gmra.mxu0 %v2374
        %v2561 = vpop.f32.mrf.mxu0
        %v2562 = vadd.f32 %v2332, %v2561
        %v2563 = vpop.f32.mrf.mxu0
        %2564 = vmatprep.mubr.f32.mxu0 0.0
        %2565 = vmatmul.mubr.f32.gmra.mxu0 %v2377
        %v2566 = vpop.f32.mrf.mxu0
        %v2567 = vadd.f32 %v2332, %v2566
        %v2568 = vpop.f32.mrf.mxu0
        %2569 = vmatprep.mubr.f32.mxu0 0.0
        %2570 = vmatmul.mubr.f32.gmra.mxu0 %v2380
        %v2571 = vpop.f32.mrf.mxu0
        %v2572 = vadd.f32 %v2332, %v2571
        %v2573 = vpop.f32.mrf.mxu0
        %2574 = vmatprep.mubr.f32.mxu0 0.0
        %2575 = vmatmul.mubr.f32.gmra.mxu0 %v2383
        %v2576 = vpop.f32.mrf.mxu0
        %v2577 = vadd.f32 %v2332, %v2576
        %v2578 = vpop.f32.mrf.mxu0
        %2579 = vmatprep.mubr.f32.mxu0 0.0
        %2580 = vmatmul.mubr.f32.gmra.mxu0 %v2386
        %v2581 = vpop.f32.mrf.mxu0
        %v2582 = vadd.f32 %v2332, %v2581
        %v2583 = vpop.f32.mrf.mxu0
        %2584 = vmatprep.mubr.f32.mxu0 0.0
        %2585 = vmatmul.mubr.f32.gmra.mxu0 %v2389
        %v2586 = vpop.f32.mrf.mxu0
        %v2587 = vadd.f32 %v2332, %v2586
        %v2588 = vpop.f32.mrf.mxu0
        %2589 = vmatprep.mubr.f32.mxu0 0.0
        %2590 = vmatmul.mubr.f32.gmra.mxu0 %v2392
        %v2591 = vpop.f32.mrf.mxu0
        %v2592 = vadd.f32 %v2332, %v2591
        %v2593 = vpop.f32.mrf.mxu0
        %2594 = vmatprep.mubr.f32.mxu0 0.0
        %2595 = vmatmul.mubr.f32.gmra.mxu0 %v2395
        %v2596 = vpop.f32.mrf.mxu0
        %v2597 = vadd.f32 %v2332, %v2596
        %v2598 = vpop.f32.mrf.mxu0
        %2599 = vmatprep.mubr.f32.mxu0 0.0
        %2600 = vmatmul.mubr.f32.gmra.mxu0 %v2398
        %v2601 = vpop.f32.mrf.mxu0
        %v2602 = vadd.f32 %v2332, %v2601
        %v2603 = vpop.f32.mrf.mxu0
        %2604 = vmatprep.mubr.f32.mxu0 0.0
        %2605 = vmatmul.mubr.f32.gmra.mxu0 %v2401
        %v2606 = vpop.f32.mrf.mxu0
        %v2607 = vadd.f32 %v2332, %v2606
        %v2608 = vpop.f32.mrf.mxu0
        %2609 = vmatprep.mubr.f32.mxu0 0.0
        %2610 = vmatmul.mubr.f32.gmra.mxu0 %v2404
        %v2611 = vpop.f32.mrf.mxu0
        %v2612 = vadd.f32 %v2332, %v2611
        %v2613 = vpop.f32.mrf.mxu0
        %2614 = vmatprep.mubr.f32.mxu0 0.0
        %2615 = vmatmul.mubr.f32.gmra.mxu0 %v2407
        %v2616 = vpop.f32.mrf.mxu0
        %v2617 = vadd.f32 %v2332, %v2616
        %v2618 = vpop.f32.mrf.mxu0
        %2619 = vmatprep.mubr.f32.mxu0 0.0
        %2620 = vmatmul.mubr.f32.gmra.mxu0 %v2410
        %v2621 = vpop.f32.mrf.mxu0
        %v2622 = vadd.f32 %v2332, %v2621
        %v2623 = vpop.f32.mrf.mxu0
        %2624 = vmatprep.mubr.f32.mxu0 0.0
        %2625 = vmatmul.mubr.f32.gmra.mxu0 %v2413
        %v2626 = vpop.f32.mrf.mxu0
        %v2627 = vadd.f32 %v2332, %v2626
        %v2628 = vpop.f32.mrf.mxu0
        %2629 = vmatprep.mubr.f32.mxu0 0.0
        %2630 = vmatmul.mubr.f32.gmra.mxu0 %v2416
        %v2631 = vpop.f32.mrf.mxu0
        %v2632 = vadd.f32 %v2332, %v2631
        %v2633 = vpop.f32.mrf.mxu0
        %2634 = vmatprep.mubr.f32.mxu0 0.0
        %2635 = vmatmul.mubr.f32.gmra.mxu0 %v2419
        %v2636 = vpop.f32.mrf.mxu0
        %v2637 = vadd.f32 %v2332, %v2636
        %v2638 = vpop.f32.mrf.mxu0
        %2639 = vmatprep.mubr.f32.mxu0 0.0
        %2640 = vmatmul.mubr.f32.gmra.mxu0 %v2422
        %v2641 = vpop.f32.mrf.mxu0
        %v2642 = vadd.f32 %v2332, %v2641
        %v2643 = vpop.f32.mrf.mxu0
        %2644 = vmatprep.mubr.f32.mxu0 0.0
        %2645 = vmatmul.mubr.f32.gmra.mxu0 %v2425
        %v2646 = vpop.f32.mrf.mxu0
        %v2647 = vadd.f32 %v2332, %v2646
        %v2648 = vpop.f32.mrf.mxu0
        %2649 = vmatprep.mubr.f32.mxu0 0.0
        %2650 = vmatmul.mubr.f32.gmra.mxu0 %v2428
        %v2651 = vpop.f32.mrf.mxu0
        %v2652 = vadd.f32 %v2332, %v2651
        %v2653 = vpop.f32.mrf.mxu0
        %2654 = vdwg.mxu0
        %v2655 = vmax.f32 %v2497, 0.0
        %v2656 = vmax.f32 %v2502, 0.0
        %v2657 = vmax.f32 %v2507, 0.0
        %v2658 = vmax.f32 %v2512, 0.0
        %v2659 = vmax.f32 %v2517, 0.0
        %v2660 = vmax.f32 %v2522, 0.0
        %v2661 = vmax.f32 %v2527, 0.0
        %v2662 = vmax.f32 %v2532, 0.0
        %v2663 = vmax.f32 %v2537, 0.0
        %v2664 = vmax.f32 %v2542, 0.0
        %v2665 = vmax.f32 %v2547, 0.0
        %v2666 = vmax.f32 %v2552, 0.0
        %v2667 = vmax.f32 %v2557, 0.0
        %v2668 = vmax.f32 %v2562, 0.0
        %v2669 = vmax.f32 %v2567, 0.0
        %v2670 = vmax.f32 %v2572, 0.0
        %v2671 = vmax.f32 %v2577, 0.0
        %v2672 = vmax.f32 %v2582, 0.0
        %v2673 = vmax.f32 %v2587, 0.0
        %v2674 = vmax.f32 %v2592, 0.0
        %v2675 = vmax.f32 %v2597, 0.0
        %v2676 = vmax.f32 %v2602, 0.0
        %v2677 = vmax.f32 %v2607, 0.0
        %v2678 = vmax.f32 %v2612, 0.0
        %v2679 = vmax.f32 %v2617, 0.0
        %v2680 = vmax.f32 %v2622, 0.0
        %v2681 = vmax.f32 %v2627, 0.0
        %v2682 = vmax.f32 %v2632, 0.0
        %v2683 = vmax.f32 %v2637, 0.0
        %v2684 = vmax.f32 %v2642, 0.0
        %v2685 = vmax.f32 %v2647, 0.0
        %v2686 = vmax.f32 %v2652, 0.0
        %v2687 = vld [vmem:[%s12] sm:$0xff]
        %v2688 = vld [vmem:[%s12 + $0x8] sm:$0xff]
        %v2689 = vld [vmem:[%s12 + $0x10] sm:$0xff]
        %v2690 = vld [vmem:[%s12 + $0x18] sm:$0xff]
        %v2691 = vld [vmem:[%s13] sm:$0x1]
        %v2693 = vlaneseq
        %v2694 = vshrl.u32 %v2693, 7
        %v2695 = vsub.s32 0, %v2694
        %v2696 = vrot.slane %v2691, %v2695
        %v2699 = vsel %vm958, %v2655, 0
        %v2702 = vsel %vm958, %v2656, 0
        %v2705 = vsel %vm958, %v2657, 0
        %v2708 = vsel %vm958, %v2658, 0
        %v2711 = vsel %vm958, %v2659, 0
        %v2714 = vsel %vm958, %v2660, 0
        %v2717 = vsel %vm958, %v2661, 0
        %v2720 = vsel %vm958, %v2662, 0
        %v2723 = vsel %vm958, %v2663, 0
        %v2726 = vsel %vm958, %v2664, 0
        %v2729 = vsel %vm958, %v2665, 0
        %v2732 = vsel %vm958, %v2666, 0
        %v2735 = vsel %vm958, %v2667, 0
        %v2738 = vsel %vm958, %v2668, 0
        %v2741 = vsel %vm958, %v2669, 0
        %v2744 = vsel %vm958, %v2670, 0
        %v2747 = vsel %vm958, %v2671, 0
        %v2750 = vsel %vm958, %v2672, 0
        %v2753 = vsel %vm958, %v2673, 0
        %v2756 = vsel %vm958, %v2674, 0
        %v2759 = vsel %vm958, %v2675, 0
        %v2762 = vsel %vm958, %v2676, 0
        %v2765 = vsel %vm958, %v2677, 0
        %v2768 = vsel %vm958, %v2678, 0
        %v2771 = vsel %vm958, %v2679, 0
        %v2774 = vsel %vm958, %v2680, 0
        %v2777 = vsel %vm958, %v2681, 0
        %v2780 = vsel %vm958, %v2682, 0
        %v2783 = vsel %vm958, %v2683, 0
        %v2786 = vsel %vm958, %v2684, 0
        %v2789 = vsel %vm958, %v2685, 0
        %v2792 = vsel %vm958, %v2686, 0
        %2794 = vmatprep.subr.mxu0 0.0
        %2795 = vmatpush1.msra.mxu0 0.0
        %2796 = vmatprep.subr.mxu0 0.0
        %2797 = vmatpush1.msra.mxu0 0.0
        %2798 = vmatprep.subr.mxu0 0.0
        %2799 = vmatpush1.msra.mxu0 0.0
        %2800 = vmatprep.subr.mxu0 0.0
        %2801 = vmatpush1.msra.mxu0 0.0
        %2802 = vmatprep.subr.mxu0 0.0
        %2803 = vmatpush1.msra.mxu0 0.0
        %2804 = vmatprep.subr.mxu0 0.0
        %2805 = vmatpush1.msra.mxu0 0.0
        %2806 = vmatprep.subr.mxu0 0.0
        %2807 = vmatpush1.msra.mxu0 0.0
        %2808 = vmatprep.subr.mxu0 0.0
        %2809 = vmatpush1.msra.mxu0 0.0
        %2810 = vmatprep.subr.mxu0 0.0
        %2811 = vmatpush1.msra.mxu0 0.0
        %2812 = vmatprep.subr.mxu0 0.0
        %2813 = vmatpush1.msra.mxu0 0.0
        %2814 = vmatprep.subr.mxu0 0.0
        %2815 = vmatpush1.msra.mxu0 0.0
        %2816 = vmatprep.subr.mxu0 0.0
        %2817 = vmatpush1.msra.mxu0 0.0
        %2818 = vmatprep.subr.mxu0 0.0
        %2819 = vmatpush1.msra.mxu0 %v2690
        %2820 = vmatprep.subr.mxu0 0.0
        %2821 = vmatpush1.msra.mxu0 %v2689
        %2822 = vmatprep.subr.mxu0 0.0
        %2823 = vmatpush1.msra.mxu0 %v2688
        %2824 = vmatprep.subr.mxu0 0.0
        %2825 = vmatpush1.msra.mxu0 %v2687
        %2826 = vmatprep.subr.mxu0 0.0
        %2827 = vmatpush2.msra.mxu0 0.0
        %2828 = vmatprep.subr.mxu0 0.0
        %2829 = vmatpush2.msra.mxu0 0.0
        %2830 = vmatprep.subr.mxu0 0.0
        %2831 = vmatpush2.msra.mxu0 0.0
        %2832 = vmatprep.subr.mxu0 0.0
        %2833 = vmatpush2.msra.mxu0 0.0
        %2834 = vmatprep.subr.mxu0 0.0
        %2835 = vmatpush2.msra.mxu0 0.0
        %2836 = vmatprep.subr.mxu0 0.0
        %2837 = vmatpush2.msra.mxu0 0.0
        %2838 = vmatprep.subr.mxu0 0.0
        %2839 = vmatpush2.msra.mxu0 0.0
        %2840 = vmatprep.subr.mxu0 0.0
        %2841 = vmatpush2.msra.mxu0 0.0
        %2842 = vmatprep.subr.mxu0 0.0
        %2843 = vmatpush2.msra.mxu0 0.0
        %2844 = vmatprep.subr.mxu0 0.0
        %2845 = vmatpush2.msra.mxu0 0.0
        %2846 = vmatprep.subr.mxu0 0.0
        %2847 = vmatpush2.msra.mxu0 0.0
        %2848 = vmatprep.subr.mxu0 0.0
        %2849 = vmatpush2.msra.mxu0 0.0
        %2850 = vmatprep.subr.mxu0 0.0
        %2851 = vmatpush2.msra.mxu0 0.0
        %2852 = vmatprep.subr.mxu0 0.0
        %2853 = vmatpush2.msra.mxu0 0.0
        %2854 = vmatprep.subr.mxu0 0.0
        %2855 = vmatpush2.msra.mxu0 0.0
        %2856 = vmatprep.subr.mxu0 0.0
        %2857 = vmatpush2.msra.mxu0 0.0
        %2858 = vmatprep.mubr.f32.mxu0 0.0
        %2859 = vmatmul.mubr.f32.gmra.mxu0 %v2699
        %v2860 = vpop.f32.mrf.mxu0
        %v2861 = vadd.f32 %v2696, %v2860
        %v2862 = vpop.f32.mrf.mxu0
        %2863 = vmatprep.mubr.f32.mxu0 0.0
        %2864 = vmatmul.mubr.f32.gmra.mxu0 %v2702
        %v2865 = vpop.f32.mrf.mxu0
        %v2866 = vadd.f32 %v2696, %v2865
        %v2867 = vpop.f32.mrf.mxu0
        %2868 = vmatprep.mubr.f32.mxu0 0.0
        %2869 = vmatmul.mubr.f32.gmra.mxu0 %v2705
        %v2870 = vpop.f32.mrf.mxu0
        %v2871 = vadd.f32 %v2696, %v2870
        %v2872 = vpop.f32.mrf.mxu0
        %2873 = vmatprep.mubr.f32.mxu0 0.0
        %2874 = vmatmul.mubr.f32.gmra.mxu0 %v2708
        %v2875 = vpop.f32.mrf.mxu0
        %v2876 = vadd.f32 %v2696, %v2875
        %v2877 = vpop.f32.mrf.mxu0
        %2878 = vmatprep.mubr.f32.mxu0 0.0
        %2879 = vmatmul.mubr.f32.gmra.mxu0 %v2711
        %v2880 = vpop.f32.mrf.mxu0
        %v2881 = vadd.f32 %v2696, %v2880
        %v2882 = vpop.f32.mrf.mxu0
        %2883 = vmatprep.mubr.f32.mxu0 0.0
        %2884 = vmatmul.mubr.f32.gmra.mxu0 %v2714
        %v2885 = vpop.f32.mrf.mxu0
        %v2886 = vadd.f32 %v2696, %v2885
        %v2887 = vpop.f32.mrf.mxu0
        %2888 = vmatprep.mubr.f32.mxu0 0.0
        %2889 = vmatmul.mubr.f32.gmra.mxu0 %v2717
        %v2890 = vpop.f32.mrf.mxu0
        %v2891 = vadd.f32 %v2696, %v2890
        %v2892 = vpop.f32.mrf.mxu0
        %2893 = vmatprep.mubr.f32.mxu0 0.0
        %2894 = vmatmul.mubr.f32.gmra.mxu0 %v2720
        %v2895 = vpop.f32.mrf.mxu0
        %v2896 = vadd.f32 %v2696, %v2895
        %v2897 = vpop.f32.mrf.mxu0
        %2898 = vmatprep.mubr.f32.mxu0 0.0
        %2899 = vmatmul.mubr.f32.gmra.mxu0 %v2723
        %v2900 = vpop.f32.mrf.mxu0
        %v2901 = vadd.f32 %v2696, %v2900
        %v2902 = vpop.f32.mrf.mxu0
        %2903 = vmatprep.mubr.f32.mxu0 0.0
        %2904 = vmatmul.mubr.f32.gmra.mxu0 %v2726
        %v2905 = vpop.f32.mrf.mxu0
        %v2906 = vadd.f32 %v2696, %v2905
        %v2907 = vpop.f32.mrf.mxu0
        %2908 = vmatprep.mubr.f32.mxu0 0.0
        %2909 = vmatmul.mubr.f32.gmra.mxu0 %v2729
        %v2910 = vpop.f32.mrf.mxu0
        %v2911 = vadd.f32 %v2696, %v2910
        %v2912 = vpop.f32.mrf.mxu0
        %2913 = vmatprep.mubr.f32.mxu0 0.0
        %2914 = vmatmul.mubr.f32.gmra.mxu0 %v2732
        %v2915 = vpop.f32.mrf.mxu0
        %v2916 = vadd.f32 %v2696, %v2915
        %v2917 = vpop.f32.mrf.mxu0
        %2918 = vmatprep.mubr.f32.mxu0 0.0
        %2919 = vmatmul.mubr.f32.gmra.mxu0 %v2735
        %v2920 = vpop.f32.mrf.mxu0
        %v2921 = vadd.f32 %v2696, %v2920
        %v2922 = vpop.f32.mrf.mxu0
        %2923 = vmatprep.mubr.f32.mxu0 0.0
        %2924 = vmatmul.mubr.f32.gmra.mxu0 %v2738
        %v2925 = vpop.f32.mrf.mxu0
        %v2926 = vadd.f32 %v2696, %v2925
        %v2927 = vpop.f32.mrf.mxu0
        %2928 = vmatprep.mubr.f32.mxu0 0.0
        %2929 = vmatmul.mubr.f32.gmra.mxu0 %v2741
        %v2930 = vpop.f32.mrf.mxu0
        %v2931 = vadd.f32 %v2696, %v2930
        %v2932 = vpop.f32.mrf.mxu0
        %2933 = vmatprep.mubr.f32.mxu0 0.0
        %2934 = vmatmul.mubr.f32.gmra.mxu0 %v2744
        %v2935 = vpop.f32.mrf.mxu0
        %v2936 = vadd.f32 %v2696, %v2935
        %v2937 = vpop.f32.mrf.mxu0
        %2938 = vmatprep.mubr.f32.mxu0 0.0
        %2939 = vmatmul.mubr.f32.gmra.mxu0 %v2747
        %v2940 = vpop.f32.mrf.mxu0
        %v2941 = vadd.f32 %v2696, %v2940
        %v2942 = vpop.f32.mrf.mxu0
        %2943 = vmatprep.mubr.f32.mxu0 0.0
        %2944 = vmatmul.mubr.f32.gmra.mxu0 %v2750
        %v2945 = vpop.f32.mrf.mxu0
        %v2946 = vadd.f32 %v2696, %v2945
        %v2947 = vpop.f32.mrf.mxu0
        %2948 = vmatprep.mubr.f32.mxu0 0.0
        %2949 = vmatmul.mubr.f32.gmra.mxu0 %v2753
        %v2950 = vpop.f32.mrf.mxu0
        %v2951 = vadd.f32 %v2696, %v2950
        %v2952 = vpop.f32.mrf.mxu0
        %2953 = vmatprep.mubr.f32.mxu0 0.0
        %2954 = vmatmul.mubr.f32.gmra.mxu0 %v2756
        %v2955 = vpop.f32.mrf.mxu0
        %v2956 = vadd.f32 %v2696, %v2955
        %v2957 = vpop.f32.mrf.mxu0
        %2958 = vmatprep.mubr.f32.mxu0 0.0
        %2959 = vmatmul.mubr.f32.gmra.mxu0 %v2759
        %v2960 = vpop.f32.mrf.mxu0
        %v2961 = vadd.f32 %v2696, %v2960
        %v2962 = vpop.f32.mrf.mxu0
        %2963 = vmatprep.mubr.f32.mxu0 0.0
        %2964 = vmatmul.mubr.f32.gmra.mxu0 %v2762
        %v2965 = vpop.f32.mrf.mxu0
        %v2966 = vadd.f32 %v2696, %v2965
        %v2967 = vpop.f32.mrf.mxu0
        %2968 = vmatprep.mubr.f32.mxu0 0.0
        %2969 = vmatmul.mubr.f32.gmra.mxu0 %v2765
        %v2970 = vpop.f32.mrf.mxu0
        %v2971 = vadd.f32 %v2696, %v2970
        %v2972 = vpop.f32.mrf.mxu0
        %2973 = vmatprep.mubr.f32.mxu0 0.0
        %2974 = vmatmul.mubr.f32.gmra.mxu0 %v2768
        %v2975 = vpop.f32.mrf.mxu0
        %v2976 = vadd.f32 %v2696, %v2975
        %v2977 = vpop.f32.mrf.mxu0
        %2978 = vmatprep.mubr.f32.mxu0 0.0
        %2979 = vmatmul.mubr.f32.gmra.mxu0 %v2771
        %v2980 = vpop.f32.mrf.mxu0
        %v2981 = vadd.f32 %v2696, %v2980
        %v2982 = vpop.f32.mrf.mxu0
        %2983 = vmatprep.mubr.f32.mxu0 0.0
        %2984 = vmatmul.mubr.f32.gmra.mxu0 %v2774
        %v2985 = vpop.f32.mrf.mxu0
        %v2986 = vadd.f32 %v2696, %v2985
        %v2987 = vpop.f32.mrf.mxu0
        %2988 = vmatprep.mubr.f32.mxu0 0.0
        %2989 = vmatmul.mubr.f32.gmra.mxu0 %v2777
        %v2990 = vpop.f32.mrf.mxu0
        %v2991 = vadd.f32 %v2696, %v2990
        %v2992 = vpop.f32.mrf.mxu0
        %2993 = vmatprep.mubr.f32.mxu0 0.0
        %2994 = vmatmul.mubr.f32.gmra.mxu0 %v2780
        %v2995 = vpop.f32.mrf.mxu0
        %v2996 = vadd.f32 %v2696, %v2995
        %v2997 = vpop.f32.mrf.mxu0
        %2998 = vmatprep.mubr.f32.mxu0 0.0
        %2999 = vmatmul.mubr.f32.gmra.mxu0 %v2783
        %v3000 = vpop.f32.mrf.mxu0
        %v3001 = vadd.f32 %v2696, %v3000
        %v3002 = vpop.f32.mrf.mxu0
        %3003 = vmatprep.mubr.f32.mxu0 0.0
        %3004 = vmatmul.mubr.f32.gmra.mxu0 %v2786
        %v3005 = vpop.f32.mrf.mxu0
        %v3006 = vadd.f32 %v2696, %v3005
        %v3007 = vpop.f32.mrf.mxu0
        %3008 = vmatprep.mubr.f32.mxu0 0.0
        %3009 = vmatmul.mubr.f32.gmra.mxu0 %v2789
        %v3010 = vpop.f32.mrf.mxu0
        %v3011 = vadd.f32 %v2696, %v3010
        %v3012 = vpop.f32.mrf.mxu0
        %3013 = vmatprep.mubr.f32.mxu0 0.0
        %3014 = vmatmul.mubr.f32.gmra.mxu0 %v2792
        %v3015 = vpop.f32.mrf.mxu0
        %v3016 = vadd.f32 %v2696, %v3015
        %v3017 = vpop.f32.mrf.mxu0
        %3018 = vdwg.mxu0
        %v3019 = vmax.f32 %v2861, 0.0
        %v3020 = vmax.f32 %v2866, 0.0
        %v3021 = vmax.f32 %v2871, 0.0
        %v3022 = vmax.f32 %v2876, 0.0
        %v3023 = vmax.f32 %v2881, 0.0
        %v3024 = vmax.f32 %v2886, 0.0
        %v3025 = vmax.f32 %v2891, 0.0
        %v3026 = vmax.f32 %v2896, 0.0
        %v3027 = vmax.f32 %v2901, 0.0
        %v3028 = vmax.f32 %v2906, 0.0
        %v3029 = vmax.f32 %v2911, 0.0
        %v3030 = vmax.f32 %v2916, 0.0
        %v3031 = vmax.f32 %v2921, 0.0
        %v3032 = vmax.f32 %v2926, 0.0
        %v3033 = vmax.f32 %v2931, 0.0
        %v3034 = vmax.f32 %v2936, 0.0
        %v3035 = vmax.f32 %v2941, 0.0
        %v3036 = vmax.f32 %v2946, 0.0
        %v3037 = vmax.f32 %v2951, 0.0
        %v3038 = vmax.f32 %v2956, 0.0
        %v3039 = vmax.f32 %v2961, 0.0
        %v3040 = vmax.f32 %v2966, 0.0
        %v3041 = vmax.f32 %v2971, 0.0
        %v3042 = vmax.f32 %v2976, 0.0
        %v3043 = vmax.f32 %v2981, 0.0
        %v3044 = vmax.f32 %v2986, 0.0
        %v3045 = vmax.f32 %v2991, 0.0
        %v3046 = vmax.f32 %v2996, 0.0
        %v3047 = vmax.f32 %v3001, 0.0
        %v3048 = vmax.f32 %v3006, 0.0
        %v3049 = vmax.f32 %v3011, 0.0
        %v3050 = vmax.f32 %v3016, 0.0
        %v3051 = vld [vmem:[%s1] sm:$0xf]
        %v3052 = vld [vmem:[%s14] sm:$0xff]
        %v3053 = vld [vmem:[%s14 + $0x8] sm:$0xff]
        %v3054 = vld [vmem:[%s15] sm:$0x1]
        %v3056 = vlaneseq
        %v3057 = vshrl.u32 %v3056, 7
        %v3058 = vsub.s32 0, %v3057
        %v3059 = vrot.slane %v3054, %v3058
        %vm3061 = vcmask 130048
        %v3063 = vsel %vm3061, %v3051, 0
        %3065 = vmatprep.subr.mxu0 0.0
        %3066 = vmatpush1.msra.mxu0 0.0
        %3067 = vmatprep.subr.mxu0 0.0
        %3068 = vmatpush1.msra.mxu0 0.0
        %3069 = vmatprep.subr.mxu0 0.0
        %3070 = vmatpush1.msra.mxu0 0.0
        %3071 = vmatprep.subr.mxu0 0.0
        %3072 = vmatpush1.msra.mxu0 0.0
        %3073 = vmatprep.subr.mxu0 0.0
        %3074 = vmatpush1.msra.mxu0 0.0
        %3075 = vmatprep.subr.mxu0 0.0
        %3076 = vmatpush1.msra.mxu0 0.0
        %3077 = vmatprep.subr.mxu0 0.0
        %3078 = vmatpush1.msra.mxu0 0.0
        %3079 = vmatprep.subr.mxu0 0.0
        %3080 = vmatpush1.msra.mxu0 0.0
        %3081 = vmatprep.subr.mxu0 0.0
        %3082 = vmatpush1.msra.mxu0 0.0
        %3083 = vmatprep.subr.mxu0 0.0
        %3084 = vmatpush1.msra.mxu0 0.0
        %3085 = vmatprep.subr.mxu0 0.0
        %3086 = vmatpush1.msra.mxu0 0.0
        %3087 = vmatprep.subr.mxu0 0.0
        %3088 = vmatpush1.msra.mxu0 0.0
        %3089 = vmatprep.subr.mxu0 0.0
        %3090 = vmatpush1.msra.mxu0 0.0
        %3091 = vmatprep.subr.mxu0 0.0
        %3092 = vmatpush1.msra.mxu0 0.0
        %3093 = vmatprep.subr.mxu0 0.0
        %3094 = vmatpush1.msra.mxu0 %v3053
        %3095 = vmatprep.subr.mxu0 0.0
        %3096 = vmatpush1.msra.mxu0 %v3052
        %3097 = vmatprep.subr.mxu0 0.0
        %3098 = vmatpush2.msra.mxu0 0.0
        %3099 = vmatprep.subr.mxu0 0.0
        %3100 = vmatpush2.msra.mxu0 0.0
        %3101 = vmatprep.subr.mxu0 0.0
        %3102 = vmatpush2.msra.mxu0 0.0
        %3103 = vmatprep.subr.mxu0 0.0
        %3104 = vmatpush2.msra.mxu0 0.0
        %3105 = vmatprep.subr.mxu0 0.0
        %3106 = vmatpush2.msra.mxu0 0.0
        %3107 = vmatprep.subr.mxu0 0.0
        %3108 = vmatpush2.msra.mxu0 0.0
        %3109 = vmatprep.subr.mxu0 0.0
        %3110 = vmatpush2.msra.mxu0 0.0
        %3111 = vmatprep.subr.mxu0 0.0
        %3112 = vmatpush2.msra.mxu0 0.0
        %3113 = vmatprep.subr.mxu0 0.0
        %3114 = vmatpush2.msra.mxu0 0.0
        %3115 = vmatprep.subr.mxu0 0.0
        %3116 = vmatpush2.msra.mxu0 0.0
        %3117 = vmatprep.subr.mxu0 0.0
        %3118 = vmatpush2.msra.mxu0 0.0
        %3119 = vmatprep.subr.mxu0 0.0
        %3120 = vmatpush2.msra.mxu0 0.0
        %3121 = vmatprep.subr.mxu0 0.0
        %3122 = vmatpush2.msra.mxu0 0.0
        %3123 = vmatprep.subr.mxu0 0.0
        %3124 = vmatpush2.msra.mxu0 0.0
        %3125 = vmatprep.subr.mxu0 0.0
        %3126 = vmatpush2.msra.mxu0 0.0
        %3127 = vmatprep.subr.mxu0 0.0
        %3128 = vmatpush2.msra.mxu0 0.0
        %3129 = vmatprep.mubr.f32.mxu0 0.0
        %3130 = vmatmul.mubr.f32.gmra.mxu0 %v3063
        %v3131 = vpop.f32.mrf.mxu0
        %v3132 = vadd.f32 %v3059, %v3131
        %v3133 = vpop.f32.mrf.mxu0
        %3134 = vdwg.mxu0
        %v3136 = vsel %vm958, %v3132, 0
        %v3139 = vsel %vm958, %v3019, 0
        %v3142 = vsel %vm958, %v3020, 0
        %v3145 = vsel %vm958, %v3021, 0
        %v3148 = vsel %vm958, %v3022, 0
        %v3151 = vsel %vm958, %v3023, 0
        %v3154 = vsel %vm958, %v3024, 0
        %v3157 = vsel %vm958, %v3025, 0
        %v3160 = vsel %vm958, %v3026, 0
        %v3163 = vsel %vm958, %v3027, 0
        %v3166 = vsel %vm958, %v3028, 0
        %v3169 = vsel %vm958, %v3029, 0
        %v3172 = vsel %vm958, %v3030, 0
        %v3175 = vsel %vm958, %v3031, 0
        %v3178 = vsel %vm958, %v3032, 0
        %v3181 = vsel %vm958, %v3033, 0
        %v3184 = vsel %vm958, %v3034, 0
        %v3187 = vsel %vm958, %v3035, 0
        %v3190 = vsel %vm958, %v3036, 0
        %v3193 = vsel %vm958, %v3037, 0
        %v3196 = vsel %vm958, %v3038, 0
        %v3199 = vsel %vm958, %v3039, 0
        %v3202 = vsel %vm958, %v3040, 0
        %v3205 = vsel %vm958, %v3041, 0
        %v3208 = vsel %vm958, %v3042, 0
        %v3211 = vsel %vm958, %v3043, 0
        %v3214 = vsel %vm958, %v3044, 0
        %v3217 = vsel %vm958, %v3045, 0
        %v3220 = vsel %vm958, %v3046, 0
        %v3223 = vsel %vm958, %v3047, 0
        %v3226 = vsel %vm958, %v3048, 0
        %v3229 = vsel %vm958, %v3049, 0
        %v3232 = vsel %vm958, %v3050, 0
        %3234 = vmatprep.subr.mxu0 0.0
        %3235 = vmatpush1.xpose.msra.mxu0 %v3184
        %3236 = vmatprep.subr.mxu0 0.0
        %3237 = vmatpush1.xpose.msra.mxu0 %v3181
        %3238 = vmatprep.subr.mxu0 0.0
        %3239 = vmatpush1.xpose.msra.mxu0 %v3178
        %3240 = vmatprep.subr.mxu0 0.0
        %3241 = vmatpush1.xpose.msra.mxu0 %v3175
        %3242 = vmatprep.subr.mxu0 0.0
        %3243 = vmatpush1.xpose.msra.mxu0 %v3172
        %3244 = vmatprep.subr.mxu0 0.0
        %3245 = vmatpush1.xpose.msra.mxu0 %v3169
        %3246 = vmatprep.subr.mxu0 0.0
        %3247 = vmatpush1.xpose.msra.mxu0 %v3166
        %3248 = vmatprep.subr.mxu0 0.0
        %3249 = vmatpush1.xpose.msra.mxu0 %v3163
        %3250 = vmatprep.subr.mxu0 0.0
        %3251 = vmatpush1.xpose.msra.mxu0 %v3160
        %3252 = vmatprep.subr.mxu0 0.0
        %3253 = vmatpush1.xpose.msra.mxu0 %v3157
        %3254 = vmatprep.subr.mxu0 0.0
        %3255 = vmatpush1.xpose.msra.mxu0 %v3154
        %3256 = vmatprep.subr.mxu0 0.0
        %3257 = vmatpush1.xpose.msra.mxu0 %v3151
        %3258 = vmatprep.subr.mxu0 0.0
        %3259 = vmatpush1.xpose.msra.mxu0 %v3148
        %3260 = vmatprep.subr.mxu0 0.0
        %3261 = vmatpush1.xpose.msra.mxu0 %v3145
        %3262 = vmatprep.subr.mxu0 0.0
        %3263 = vmatpush1.xpose.msra.mxu0 %v3142
        %3264 = vmatprep.subr.mxu0 0.0
        %3265 = vmatpush1.xpose.msra.mxu0 %v3139
        %3266 = vmatprep.subr.mxu0 0.0
        %3267 = vmatpush2.xpose.msra.mxu0 %v3232
        %3268 = vmatprep.subr.mxu0 0.0
        %3269 = vmatpush2.xpose.msra.mxu0 %v3229
        %3270 = vmatprep.subr.mxu0 0.0
        %3271 = vmatpush2.xpose.msra.mxu0 %v3226
        %3272 = vmatprep.subr.mxu0 0.0
        %3273 = vmatpush2.xpose.msra.mxu0 %v3223
        %3274 = vmatprep.subr.mxu0 0.0
        %3275 = vmatpush2.xpose.msra.mxu0 %v3220
        %3276 = vmatprep.subr.mxu0 0.0
        %3277 = vmatpush2.xpose.msra.mxu0 %v3217
        %3278 = vmatprep.subr.mxu0 0.0
        %3279 = vmatpush2.xpose.msra.mxu0 %v3214
        %3280 = vmatprep.subr.mxu0 0.0
        %3281 = vmatpush2.xpose.msra.mxu0 %v3211
        %3282 = vmatprep.subr.mxu0 0.0
        %3283 = vmatpush2.xpose.msra.mxu0 %v3208
        %3284 = vmatprep.subr.mxu0 0.0
        %3285 = vmatpush2.xpose.msra.mxu0 %v3205
        %3286 = vmatprep.subr.mxu0 0.0
        %3287 = vmatpush2.xpose.msra.mxu0 %v3202
        %3288 = vmatprep.subr.mxu0 0.0
        %3289 = vmatpush2.xpose.msra.mxu0 %v3199
        %3290 = vmatprep.subr.mxu0 0.0
        %3291 = vmatpush2.xpose.msra.mxu0 %v3196
        %3292 = vmatprep.subr.mxu0 0.0
        %3293 = vmatpush2.xpose.msra.mxu0 %v3193
        %3294 = vmatprep.subr.mxu0 0.0
        %3295 = vmatpush2.xpose.msra.mxu0 %v3190
        %3296 = vmatprep.subr.mxu0 0.0
        %3297 = vmatpush2.xpose.msra.mxu0 %v3187
        %3298 = vmatprep.mubr.f32.mxu0 0.0
        %3299 = vmatmul.mubr.f32.gmra.mxu0 %v3136
        %v3300 = vpop.f32.mrf.mxu0
        %v3301 = vadd.f32 0.0, %v3300
        %v3302 = vpop.f32.mrf.mxu0
        %v3303 = vadd.f32 0.0, %v3302
        %3304 = vdwg.mxu0
        %v3305 = vmul.f32 %v3301, 0.17677669
        %v3306 = vmul.f32 %v3303, 0.17677669
        %v3307 = vsel %vm697, %v3305, -inf
        %v3308 = vsel %vm697, %v3306, -inf
        %v3309 = vmax.f32 %v3307, %v3308
        %3310 = vmax.xlane.f32.xlu0 %v3309
        %v3311 = vpop.xlane.xlu0 %3310
        %v3312 = vsub.f32 %v3305, %v3311
        %v3313 = vsub.f32 %v3306, %v3311
        %v3314 = vmul.f32 %v3312, 1.442695
        %v3315 = vpow.pop %v3314
        %v3316 = vmul.f32 %v3313, 1.442695
        %v3317 = vpow.pop %v3316
        %v3318 = vsel %vm697, %v3315, 0.0
        %v3319 = vsel %vm697, %v3317, 0.0
        %v3320 = vadd.f32 %v3318, %v3319
        %3321 = vadd.xlane.f32.xlu0 %v3320
        %v3322 = vpop.xlane.xlu0 %3321
        %v3323 = vrcp.pop %v3322
        %v3324 = vmul.f32 %v3315, %v3323
        %v3325 = vmul.f32 %v3317, %v3323
        %3326 = vmatprep.subr.mxu0 0.0
        %3327 = vmatpush1.msra.mxu0 %v3034
        %3328 = vmatprep.subr.mxu0 0.0
        %3329 = vmatpush1.msra.mxu0 %v3033
        %3330 = vmatprep.subr.mxu0 0.0
        %3331 = vmatpush1.msra.mxu0 %v3032
        %3332 = vmatprep.subr.mxu0 0.0
        %3333 = vmatpush1.msra.mxu0 %v3031
        %3334 = vmatprep.subr.mxu0 0.0
        %3335 = vmatpush1.msra.mxu0 %v3030
        %3336 = vmatprep.subr.mxu0 0.0
        %3337 = vmatpush1.msra.mxu0 %v3029
        %3338 = vmatprep.subr.mxu0 0.0
        %3339 = vmatpush1.msra.mxu0 %v3028
        %3340 = vmatprep.subr.mxu0 0.0
        %3341 = vmatpush1.msra.mxu0 %v3027
        %3342 = vmatprep.subr.mxu0 0.0
        %3343 = vmatpush1.msra.mxu0 %v3026
        %3344 = vmatprep.subr.mxu0 0.0
        %3345 = vmatpush1.msra.mxu0 %v3025
        %3346 = vmatprep.subr.mxu0 0.0
        %3347 = vmatpush1.msra.mxu0 %v3024
        %3348 = vmatprep.subr.mxu0 0.0
        %3349 = vmatpush1.msra.mxu0 %v3023
        %3350 = vmatprep.subr.mxu0 0.0
        %3351 = vmatpush1.msra.mxu0 %v3022
        %3352 = vmatprep.subr.mxu0 0.0
        %3353 = vmatpush1.msra.mxu0 %v3021
        %3354 = vmatprep.subr.mxu0 0.0
        %3355 = vmatpush1.msra.mxu0 %v3020
        %3356 = vmatprep.subr.mxu0 0.0
        %3357 = vmatpush1.msra.mxu0 %v3019
        %3358 = vmatprep.subr.mxu0 0.0
        %3359 = vmatpush2.msra.mxu0 %v3050
        %3360 = vmatprep.subr.mxu0 0.0
        %3361 = vmatpush2.msra.mxu0 %v3049
        %3362 = vmatprep.subr.mxu0 0.0
        %3363 = vmatpush2.msra.mxu0 %v3048
        %3364 = vmatprep.subr.mxu0 0.0
        %3365 = vmatpush2.msra.mxu0 %v3047
        %3366 = vmatprep.subr.mxu0 0.0
        %3367 = vmatpush2.msra.mxu0 %v3046
        %3368 = vmatprep.subr.mxu0 0.0
        %3369 = vmatpush2.msra.mxu0 %v3045
        %3370 = vmatprep.subr.mxu0 0.0
        %3371 = vmatpush2.msra.mxu0 %v3044
        %3372 = vmatprep.subr.mxu0 0.0
        %3373 = vmatpush2.msra.mxu0 %v3043
        %3374 = vmatprep.subr.mxu0 0.0
        %3375 = vmatpush2.msra.mxu0 %v3042
        %3376 = vmatprep.subr.mxu0 0.0
        %3377 = vmatpush2.msra.mxu0 %v3041
        %3378 = vmatprep.subr.mxu0 0.0
        %3379 = vmatpush2.msra.mxu0 %v3040
        %3380 = vmatprep.subr.mxu0 0.0
        %3381 = vmatpush2.msra.mxu0 %v3039
        %3382 = vmatprep.subr.mxu0 0.0
        %3383 = vmatpush2.msra.mxu0 %v3038
        %3384 = vmatprep.subr.mxu0 0.0
        %3385 = vmatpush2.msra.mxu0 %v3037
        %3386 = vmatprep.subr.mxu0 0.0
        %3387 = vmatpush2.msra.mxu0 %v3036
        %3388 = vmatprep.subr.mxu0 0.0
        %3389 = vmatpush2.msra.mxu0 %v3035
        %3390 = vmatprep.mubr.f32.mxu0 %v3325
        %3391 = vmatmul.mubr.f32.gmra.mxu0 %v3324
        %v3392 = vpop.f32.mrf.mxu0
        %v3393 = vadd.f32 0.0, %v3392
        %v3394 = vpop.f32.mrf.mxu0
        %3395 = vdwg.mxu0
        %vm3396 = vcmask 257024
        %3397 = vst.msk [vmem:[%s559] sm:$0xf] %vm3396, %v3393
        %v3400 = vcombine.low %v3324, %v3325
        %3402 = vst [vmem:[%s550] sm:$0xff] %v3400
        %p3403 = scmp.lt.s32.totalorder %s34, 1
        %s3404 = scalar_select %p3403, %s34, 1
        %s3405 = smul.addr %s3404, 4
        %s3406 = scalar_lea.vmem %s16, %s3405
        %s3407 = sand.u32 %s409, 1
        %s3408 = scalar_lea.sflag [#allocation4], %s3407
        %s3409 = sand.u32 %s409, 1
        %s3410 = smul.addr %s3409, 8
        %s3411 = scalar_lea.vmem [#allocation3], %s3410
        // Predicated region
        $region85: #{fwd.3} parent=83 // pred_check
          %p3412 = pneg %p393
        $region86: #{fwd.3} parent=83 // pred_check_branch
          %3414 = sbr.rel (%p3412) target = $region88
        $region87: #{fwd.3} parent=83 // pred_region
          _
        $region88: #{fwd.3} parent=83 // pred_fallthru
          _
        // Predicated region
        $region89: #{fwd.3} parent=83 // pred_check
          %p3415 = pneg %p419
        $region90: #{fwd.3} parent=83 // pred_check_branch
          %3417 = sbr.rel (%p3415) target = $region92
        $region91: #{fwd.3} parent=83 // pred_region
          %s3419 = ssub.s32 128, 128
          %3420 = vsyncadd %s3408, %s3419
          %s3421 = smul.addr %s34, 2
          %s3422 = smul.addr %s3421, 64
          %s3423 = scalar_lea.hbm %s17, %s3422
          %s3425 = sshll.u32 %s3411, 4
          %s3426 = int_to_ptr.vmem [resolvable:$true] %s3425
          %3428 = dma.vmem_to_hbm [thread:$0]  %s3426, 128, %s3423, %s3408
        $region92: #{fwd.3} parent=83 // pred_fallthru
          _
      $region84: #{fwd.3} parent=5 // pred_fallthru
        _
      %p3429 = scmp.le.s32.totalorder 2, %s29
      // Predicated region
      $region93: #{fwd.3} parent=5 // pred_check
        %p3430 = pneg %p3429
      $region94: #{fwd.3} parent=5 // pred_check_branch
        %3432 = sbr.rel (%p3430) target = $region96
      $region95: #{fwd.3} parent=5 // pred_region
        %s3433 = ssub.s32 %s29, 2
        // Predicated region
        $region97: #{fwd.3} parent=95 // pred_check
          %p3434 = pneg %p399
        $region98: #{fwd.3} parent=95 // pred_check_branch
          %3436 = sbr.rel (%p3434) target = $region100
        $region99: #{fwd.3} parent=95 // pred_region
          %p3437 = scmp.lt.s32.totalorder %s35, 1
          %s3438 = scalar_select %p3437, %s35, 1
          %s3439 = smul.addr %s3438, 4
          %s3440 = scalar_lea.vmem %s16, %s3439
        $region100: #{fwd.3} parent=95 // pred_fallthru
          _
        // Predicated region
        $region101: #{fwd.3} parent=95 // pred_check
          %p3441 = pneg %p425
        $region102: #{fwd.3} parent=95 // pred_check_branch
          %3443 = sbr.rel (%p3441) target = $region104
        $region103: #{fwd.3} parent=95 // pred_region
          %s3444 = sand.u32 %s410, 1
          %s3445 = scalar_lea.sflag [#allocation4], %s3444
          %s3446 = sand.u32 %s410, 1
          %s3447 = smul.addr %s3446, 8
          %s3448 = scalar_lea.vmem [#allocation3], %s3447
          %3449 = dma.done %s3445, 128
        $region104: #{fwd.3} parent=95 // pred_fallthru
          _
      $region96: #{fwd.3} parent=5 // pred_fallthru
        _
    $region6: #{fwd.3} parent=1 // loop_footer
      %s33 = sadd.s32 1, %s29
    $region7: #{fwd.3} parent=1 // loop_footer_branch
      %28 = sbr.rel target = $region3
    $region8: #{fwd.3} parent=1 // loop_exit
      _
    %3450 = vsyncpa [#allocation4], 1
    %s3451 = scalar_lea.sflag [#allocation4], 1
    %3452 = vsyncpa %s3451, 1

</llo_original>
